<compile_context>
chip_gen: v7x
topology: tpu7x:2x2x1
jax: 0.10.0
libtpu: 0.0.40
codegen_flags: <defaults>
</compile_context>

<pallas_src>
import jax
import jax.numpy as jnp
from jax.experimental import pallas as pl
from jax.experimental.pallas import tpu as pltpu

VMEM_SPEC = pl.BlockSpec(memory_space=pltpu.MemorySpace.VMEM)


# ----------------------------------------------------------------------------
# Wrapper: one pallas_call for the full forward (mirrors MagNet_model.forward,
# eval mode, activation=False).  The kernel is defined inside so it can close
# over the (static) packing layout derived from the parameter shapes.
# ----------------------------------------------------------------------------
@jax.jit
def magnet_model_forward(params, x, real, imag, l_real, l_imag, fadj, sadj):
    n, f_in = x.shape
    chebs, s, cg = params["chebs"], params["sgcn"], params["cgcn"]
    at, mlp = params["att"], params["mlp"]

    mag_hid = chebs[-1]["W"][0].shape[1]
    hid1 = s["W1"].shape[1]
    gcn_mid = s["W2"].shape[1]
    gcn_out = s["W3"].shape[1]
    hid2 = at["W1"].shape[0]
    att_hid = at["W1"].shape[1]

    # Fold the activation-free MLP head (Linear->Linear->Linear) into a single
    # affine map (mathematically identical).
    wm = mlp["W1"] @ mlp["W2"] @ mlp["W3"]
    bm = (mlp["b1"] @ mlp["W2"] + mlp["b2"]) @ mlp["W3"] + mlp["b3"]
    n_cls = wm.shape[1]

    # ---- packed operator / adjacency / feature slabs (built once in XLA) ----
    # Block complex operator: [T_r; T_i] = M @ [v_r; v_i] for L_hat = L_re+i L_im
    mop = jnp.concatenate(
        [jnp.concatenate([l_real, -l_imag], axis=1),
         jnp.concatenate([l_imag, l_real], axis=1)], axis=0)          # (2n, 2n)
    adj = jnp.concatenate([fadj, sadj], axis=0)                       # (2n, n)
    feat = jnp.concatenate([real, imag, x], axis=0)                   # (3n, f)

    # ---- one weight slab + one bias slab -------------------------------------
    cheb_ws = [jnp.concatenate(c["W"], axis=0) for c in chebs]        # [W0;W1;W2]
    w_list = cheb_ws + [
        jnp.concatenate([cg["W1"], s["W1"]], axis=1),                 # [Wc1 | Ws1]
        s["W2"], cg["W2"], s["W3"], cg["W3"], at["W1"], wm]
    b_list = [chebs[0]["b"], chebs[1]["b"], chebs[2]["b"],
              cg["b1"], s["b1"], cg["b2"], s["b2"], cg["b3"], s["b3"],
              at["b1"], at["W2"].reshape(-1), bm]

    wcol = max(max(w.shape[1] for w in w_list), max(b.shape[0] for b in b_list))
    padded_ws, w_offs, rows = [], [], 0
    for w in w_list:
        w_offs.append(rows)
        rpad = (-w.shape[0]) % 8                     # keep carve offsets 8-aligned
        padded_ws.append(jnp.pad(w, ((0, rpad), (0, wcol - w.shape[1]))))
        rows += w.shape[0] + rpad
    w_slab = jnp.concatenate(padded_ws, axis=0)                       # (rows, wcol)
    b_slab = jnp.stack(
        [jnp.pad(b, (0, wcol - b.shape[0])) for b in b_list], axis=0)  # (12, wcol)

    (o_c1, o_c2, o_c3, o_w1, o_ws2, o_wc2, o_ws3, o_wc3, o_wa1, o_wm) = w_offs
    (r_c1b, r_c2b, r_c3b, r_bc1, r_bs1, r_bc2, r_bs2, r_bc3, r_bs3,
     r_ba1, r_wa2, r_bm) = range(12)

    cheb_cfg = [
        (o_c1, chebs[0]["W"][0].shape[0], chebs[0]["W"][0].shape[1], r_c1b),
        (o_c2, chebs[1]["W"][0].shape[0], chebs[1]["W"][0].shape[1], r_c2b),
        (o_c3, chebs[2]["W"][0].shape[0], chebs[2]["W"][0].shape[1], r_c3b)]

    # lane layout of the single output slab
    tot_w = 2 * mag_hid + 3 * gcn_out + hid2 + n_cls + 3
    out_w = ((tot_w + 127) // 128) * 128

    # ------------------------------------------------------------------------
    # Fused forward kernel (everything stays in VMEM / vregs).
    # ------------------------------------------------------------------------
    def kernel(op_ref, adj_ref, feat_ref, w_ref, b_ref, out_ref):
        f32 = jnp.float32
        dot = lambda a, b: jnp.dot(a, b, preferred_element_type=f32)
        relu = lambda v: jnp.maximum(v, 0.0)

        M = op_ref[...]                      # (2n, 2n) block complex L_hat
        A = adj_ref[...]                     # (2n, n)  [fadj; sadj]
        feat_all = feat_ref[...]
        z = feat_all[:2 * n]                 # [real; imag]  (2n, f_in)
        xf = feat_all[2 * n:]                # node features (n, f_in)

        # ---- MagNetConv stack (K=3, complex Chebyshev, activation=False) ----
        for off, c_in, c_out, brow in cheb_cfg:
            w = w_ref[off:off + 3 * c_in, :c_out]        # stacked [W0;W1;W2]
            b = b_ref[brow:brow + 1, :c_out]             # same bias on re & im
            z1 = dot(M, z)                               # T1 = L_hat T0
            z2 = 2.0 * dot(M, z1) - z                    # T2 = 2 L_hat T1 - T0
            z = (dot(z, w[:c_in]) + dot(z1, w[c_in:2 * c_in])
                 + dot(z2, w[2 * c_in:]) + b)
        x1 = jnp.concatenate([z[:n], z[n:]], axis=-1)    # cat(real, imag)
        # dropout(x1): eval mode -> identity

        # ---- SGCN(fadj) + CGCN(sadj) + CGCN(fadj): layer 1 ------------------
        w_cs1 = w_ref[o_w1:o_w1 + f_in, :2 * hid1]       # [Wc1 | Ws1]
        bc1 = b_ref[r_bc1:r_bc1 + 1, :hid1]
        bs1 = b_ref[r_bs1:r_bs1 + 1, :hid1]
        g1 = dot(A, dot(xf, w_cs1))                      # (2n, 2*hid1)
        hcB = relu(g1[:n, :hid1] + bc1)                  # CGCN on fadj -> com2
        hs = relu(g1[:n, hid1:2 * hid1] + bs1)           # SGCN on fadj -> x2
        hcA = relu(g1[n:, :hid1] + bc1)                  # CGCN on sadj -> com1
        # inter-layer F.dropout: eval mode -> identity

        # ---- layer 2 ---------------------------------------------------------
        ws2 = w_ref[o_ws2:o_ws2 + hid1, :gcn_mid]
        wc2 = w_ref[o_wc2:o_wc2 + hid1, :gcn_mid]
        bs2 = b_ref[r_bs2:r_bs2 + 1, :gcn_mid]
        bc2 = b_ref[r_bc2:r_bc2 + 1, :gcn_mid]
        sup_c = dot(jnp.concatenate([hcA, hcB], axis=0), wc2)   # shared Wc2
        sup_s = dot(hs, ws2)
        g2 = dot(A, jnp.concatenate([sup_c[:n], sup_c[n:], sup_s], axis=-1))
        hcA = relu(g2[n:, :gcn_mid] + bc2)                       # sadj branch
        hcB = relu(g2[:n, gcn_mid:2 * gcn_mid] + bc2)            # fadj branch
        hs = relu(g2[:n, 2 * gcn_mid:3 * gcn_mid] + bs2)         # fadj SGCN

        # ---- layer 3 (no relu) ------------------------------------------------
        ws3 = w_ref[o_ws3:o_ws3 + gcn_mid, :gcn_out]
        wc3 = w_ref[o_wc3:o_wc3 + gcn_mid, :gcn_out]
        bs3 = b_ref[r_bs3:r_bs3 + 1, :gcn_out]
        bc3 = b_ref[r_bc3:r_bc3 + 1, :gcn_out]
        sup_c = dot(jnp.concatenate([hcA, hcB], axis=0), wc3)
        sup_s = dot(hs, ws3)
        g3 = dot(A, jnp.concatenate([sup_c[:n], sup_c[n:], sup_s], axis=-1))
        com1 = g3[n:, :gcn_out] + bc3                            # CGCN(x, sadj)
        com2 = g3[:n, gcn_out:2 * gcn_out] + bc3                 # CGCN(x, fadj)
        x2 = g3[:n, 2 * gcn_out:3 * gcn_out] + bs3               # SGCN(x, fadj)
        xcom = 0.5 * (com1 + com2)

        # ---- attention over the 3 views (stacked on sublanes) -----------------
        wa1 = w_ref[o_wa1:o_wa1 + hid2, :att_hid]
        ba1 = b_ref[r_ba1:r_ba1 + 1, :att_hid]
        wa2 = b_ref[r_wa2:r_wa2 + 1, :att_hid]
        xs = jnp.concatenate([x1, x2, xcom], axis=0)             # (3n, hid2)
        h = jnp.tanh(dot(xs, wa1) + ba1)                         # (3n, att_hid)
        sc = jnp.sum(h * wa2, axis=-1, keepdims=True)            # VPU/XLU reduce
        s1, s2, s3 = sc[:n], sc[n:2 * n], sc[2 * n:]
        mx = jnp.maximum(jnp.maximum(s1, s2), s3)
        e1, e2, e3 = jnp.exp(s1 - mx), jnp.exp(s2 - mx), jnp.exp(s3 - mx)
        inv = pl.reciprocal(e1 + e2 + e3)                        # exact recip
        b1, b2, b3 = e1 * inv, e2 * inv, e3 * inv
        emb = b1 * x1 + b2 * x2 + b3 * xcom

        # ---- folded MLP head + LogSoftmax -------------------------------------
        wmk = w_ref[o_wm:o_wm + hid2, :n_cls]
        bmk = b_ref[r_bm:r_bm + 1, :n_cls]
        logits = dot(emb, wmk) + bmk
        zl = logits - jnp.max(logits, axis=-1, keepdims=True)
        logp = zl - jnp.log(jnp.sum(jnp.exp(zl), axis=-1, keepdims=True))

        # ---- single lane-dense output store -----------------------------------
        beta = jnp.concatenate([b1, b2, b3], axis=-1)            # (n, 3)
        pad = jnp.zeros((n, out_w - tot_w), f32)
        out_ref[...] = jnp.concatenate(
            [x1, x2, com1, com2, emb, logp, beta, pad], axis=-1)

    slab = pl.pallas_call(
        kernel,
        out_shape=jax.ShapeDtypeStruct((n, out_w), jnp.float32),
        in_specs=[VMEM_SPEC] * 5,
        out_specs=VMEM_SPEC,
    )(mop, adj, feat, w_slab, b_slab)

    # slice the lane-dense slab back apart (cheap XLA slices)
    o = 0
    x1 = slab[:, o:o + 2 * mag_hid]; o += 2 * mag_hid
    x2 = slab[:, o:o + gcn_out]; o += gcn_out
    com1 = slab[:, o:o + gcn_out]; o += gcn_out
    com2 = slab[:, o:o + gcn_out]; o += gcn_out
    emb = slab[:, o:o + hid2]; o += hid2
    logp = slab[:, o:o + n_cls]; o += n_cls
    beta = slab[:, o:o + 3]
    return logp, beta.reshape(n, 3, 1), x1, com1, com2, x2, emb


# ----------------------------------------------------------------------------
# Plain-JAX glue: dense magnetic Laplacian / normalized adjacency construction
# ----------------------------------------------------------------------------
def magnetic_laplacian(edge_index, edge_weight, n, q):
    # L_hat = (2/lambda_max) L_sym - I  with lambda_max = 2  (sym normalization)
    #       = -D^{-1/2} A_sym D^{-1/2} .* exp(i * 2*pi*q*(A - A^T))
    a = jnp.zeros((n, n), jnp.float32).at[edge_index[0], edge_index[1]].add(edge_weight)
    a_sym = 0.5 * (a + a.T)
    theta = 2.0 * jnp.pi * q * (a - a.T)
    deg = a_sym.sum(axis=1)
    dinv = jnp.where(deg > 0, 1.0 / jnp.sqrt(deg), 0.0)
    a_norm = dinv[:, None] * a_sym * dinv[None, :]
    return -a_norm * jnp.cos(theta), -a_norm * jnp.sin(theta)


def normalize_adj(a):
    n = a.shape[0]
    a = a + a.T + jnp.eye(n, dtype=jnp.float32)
    a = (a > 0).astype(jnp.float32)
    deg = a.sum(axis=1)
    dinv = 1.0 / jnp.sqrt(deg)
    return dinv[:, None] * a * dinv[None, :]


# ----------------------------------------------------------------------------
# Deterministic parameter / input construction
# ----------------------------------------------------------------------------
def glorot(key, shape):
    lim = jnp.sqrt(6.0 / (shape[0] + shape[1]))
    return jax.random.uniform(key, shape, jnp.float32, -lim, lim)


def make_params(key, f_in, hid1, hid2, mag_hid, n_cls, k_cheb=3):
    keys = iter(jax.random.split(key, 64))
    params = {}

    def cheb_layer(c_in, c_out):
        return {"W": [glorot(next(keys), (c_in, c_out)) for _ in range(k_cheb)],
                "b": jnp.zeros((c_out,), jnp.float32)}

    params["chebs"] = [cheb_layer(f_in, 32), cheb_layer(32, 16),
                       cheb_layer(16, mag_hid)]

    def gcn_params():
        return {"W1": glorot(next(keys), (f_in, hid1)),
                "b1": jnp.zeros((hid1,), jnp.float32),
                "W2": glorot(next(keys), (hid1, 32)),
                "b2": jnp.zeros((32,), jnp.float32),
                "W3": glorot(next(keys), (32, 16)),
                "b3": jnp.zeros((16,), jnp.float32)}

    params["sgcn"] = gcn_params()
    params["cgcn"] = gcn_params()
    params["att"] = {"W1": glorot(next(keys), (hid2, 8)),
                     "b1": jnp.zeros((8,), jnp.float32),
                     "W2": glorot(next(keys), (8, 1))}
    params["mlp"] = {"W1": glorot(next(keys), (hid2, 16)),
                     "b1": jnp.zeros((16,), jnp.float32),
                     "W2": glorot(next(keys), (16, 8)),
                     "b2": jnp.zeros((8,), jnp.float32),
                     "W3": glorot(next(keys), (8, n_cls)),
                     "b3": jnp.zeros((n_cls,), jnp.float32)}
    return params


if __name__ == "__main__":
    # Small synthetic sizes:
    #   N = 32 nodes, num_features = 16, args.hidden1 = 16, args.hidden2 = 16
    #   MagNet hidden = 8 (so cat(real, imag) -> 16 = hidden2), num_classes = 4
    N, F_IN, HID1, HID2, MAG_HID, N_CLS, Q = 32, 16, 16, 16, 8, 4, 0.25

    key = jax.random.PRNGKey(0)
    k_x, k_r, k_i, k_e1, k_e2, k_f, k_s, k_p = jax.random.split(key, 8)

    x = jax.random.normal(k_x, (N, F_IN), jnp.float32)
    real = jax.random.normal(k_r, (N, F_IN), jnp.float32)
    imag = jax.random.normal(k_i, (N, F_IN), jnp.float32)

    # Deterministic directed graph: a ring plus random extra edges.
    ring_src = jnp.arange(N, dtype=jnp.int32)
    ring_dst = (ring_src + 1) % N
    extra_src = jax.random.randint(k_e1, (N,), 0, N, jnp.int32)
    extra_dst = jax.random.randint(k_e2, (N,), 0, N, jnp.int32)
    edge_index = jnp.stack([jnp.concatenate([ring_src, extra_src]),
                            jnp.concatenate([ring_dst, extra_dst])])
    edge_weight = jnp.ones((edge_index.shape[1],), jnp.float32)

    l_real, l_imag = magnetic_laplacian(edge_index, edge_weight, N, Q)

    # TODO(synk): load_graph(data) is an external file-based loader; replaced by
    # deterministic in-script normalized feature / structure adjacencies.
    fadj = normalize_adj(
        (jax.random.uniform(k_f, (N, N)) > 0.85).astype(jnp.float32))
    sadj = normalize_adj(
        (jax.random.uniform(k_s, (N, N)) > 0.85).astype(jnp.float32))

    params = make_params(k_p, F_IN, HID1, HID2, MAG_HID, N_CLS)

    outs = magnet_model_forward(params, x, real, imag, l_real, l_imag, fadj, sadj)
    outs = jax.block_until_ready(outs)

    logits, att, x1, com1, com2, x2, emb = outs
    assert logits.shape == (N, N_CLS)
    assert att.shape == (N, 3, 1)
    assert x1.shape == (N, 2 * MAG_HID)
    assert com1.shape == (N, 16) and com2.shape == (N, 16) and x2.shape == (N, 16)
    assert emb.shape == (N, HID2)
    assert bool(jnp.all(jnp.isfinite(logits)))
    assert bool(jnp.all(jnp.abs(jnp.sum(att[:, :, 0], axis=1) - 1.0) < 1e-4))
    print("KERNEL_OK")
</pallas_src>

<mosaic_0001>
module attributes {stable_mosaic.version = 11 : i64} {
  func.func @kernel(%arg0: memref<64x64xf32, #tpu.memory_space<vmem>>, %arg1: memref<64x32xf32, #tpu.memory_space<vmem>>, %arg2: memref<96x16xf32, #tpu.memory_space<vmem>>, %arg3: memref<336x32xf32, #tpu.memory_space<vmem>>, %arg4: memref<12x32xf32, #tpu.memory_space<vmem>>, %arg5: memref<32x128xf32, #tpu.memory_space<vmem>>) attributes {dimension_semantics = [], scalar_prefetch = 0 : i64, scratch_operands = 0 : i64, tpu.core_type = #tpu.core_type<tc>} {
    %c0 = arith.constant 0 : index
    %c0_0 = arith.constant 0 : index
    %0 = vector.load %arg0[%c0, %c0_0] : memref<64x64xf32, #tpu.memory_space<vmem>>, vector<64x64xf32>
    %c0_1 = arith.constant 0 : index
    %c0_2 = arith.constant 0 : index
    %1 = vector.load %arg1[%c0_1, %c0_2] : memref<64x32xf32, #tpu.memory_space<vmem>>, vector<64x32xf32>
    %c0_3 = arith.constant 0 : index
    %c0_4 = arith.constant 0 : index
    %2 = vector.load %arg2[%c0_3, %c0_4] : memref<96x16xf32, #tpu.memory_space<vmem>>, vector<96x16xf32>
    %3 = vector.extract_strided_slice %2 {offsets = [0, 0], sizes = [64, 16], strides = [1, 1]} : vector<96x16xf32> to vector<64x16xf32>
    %4 = vector.extract_strided_slice %2 {offsets = [64, 0], sizes = [32, 16], strides = [1, 1]} : vector<96x16xf32> to vector<32x16xf32>
    %c0_5 = arith.constant 0 : index
    %c0_6 = arith.constant 0 : index
    %5 = vector.load %arg3[%c0_5, %c0_6] : memref<336x32xf32, #tpu.memory_space<vmem>>, vector<48x32xf32>
    %c0_7 = arith.constant 0 : index
    %c0_8 = arith.constant 0 : index
    %6 = vector.load %arg4[%c0_7, %c0_8] : memref<12x32xf32, #tpu.memory_space<vmem>>, vector<1x32xf32>
    %cst = arith.constant dense<0.000000e+00> : vector<64x16xf32>
    %7 = tpu.matmul %0, %3, %cst {dimension_numbers = #tpu.dot_dimension_numbers<[1], [0], [0], [1], [0, 0, 1, 1], [], []>} : vector<64x64xf32>, vector<64x16xf32>, vector<64x16xf32> -> vector<64x16xf32>
    %cst_9 = arith.constant dense<0.000000e+00> : vector<64x16xf32>
    %8 = tpu.matmul %0, %7, %cst_9 {dimension_numbers = #tpu.dot_dimension_numbers<[1], [0], [0], [1], [0, 0, 1, 1], [], []>} : vector<64x64xf32>, vector<64x16xf32>, vector<64x16xf32> -> vector<64x16xf32>
    %cst_10 = arith.constant 2.000000e+00 : f32
    %9 = vector.broadcast %cst_10 : f32 to vector<64x16xf32>
    %10 = arith.mulf %9, %8 : vector<64x16xf32>
    %11 = arith.subf %10, %3 : vector<64x16xf32>
    %12 = vector.extract_strided_slice %5 {offsets = [0, 0], sizes = [16, 32], strides = [1, 1]} : vector<48x32xf32> to vector<16x32xf32>
    %cst_11 = arith.constant dense<0.000000e+00> : vector<64x32xf32>
    %13 = tpu.matmul %3, %12, %cst_11 {dimension_numbers = #tpu.dot_dimension_numbers<[1], [0], [0], [1], [0, 0, 1, 1], [], []>} : vector<64x16xf32>, vector<16x32xf32>, vector<64x32xf32> -> vector<64x32xf32>
    %14 = vector.extract_strided_slice %5 {offsets = [16, 0], sizes = [16, 32], strides = [1, 1]} : vector<48x32xf32> to vector<16x32xf32>
    %cst_12 = arith.constant dense<0.000000e+00> : vector<64x32xf32>
    %15 = tpu.matmul %7, %14, %cst_12 {dimension_numbers = #tpu.dot_dimension_numbers<[1], [0], [0], [1], [0, 0, 1, 1], [], []>} : vector<64x16xf32>, vector<16x32xf32>, vector<64x32xf32> -> vector<64x32xf32>
    %16 = arith.addf %13, %15 : vector<64x32xf32>
    %17 = vector.extract_strided_slice %5 {offsets = [32, 0], sizes = [16, 32], strides = [1, 1]} : vector<48x32xf32> to vector<16x32xf32>
    %cst_13 = arith.constant dense<0.000000e+00> : vector<64x32xf32>
    %18 = tpu.matmul %11, %17, %cst_13 {dimension_numbers = #tpu.dot_dimension_numbers<[1], [0], [0], [1], [0, 0, 1, 1], [], []>} : vector<64x16xf32>, vector<16x32xf32>, vector<64x32xf32> -> vector<64x32xf32>
    %19 = arith.addf %16, %18 : vector<64x32xf32>
    %20 = vector.broadcast %6 : vector<1x32xf32> to vector<64x32xf32>
    %21 = arith.addf %19, %20 : vector<64x32xf32>
    %c48 = arith.constant 48 : index
    %c0_14 = arith.constant 0 : index
    %22 = vector.load %arg3[%c48, %c0_14] : memref<336x32xf32, #tpu.memory_space<vmem>>, vector<96x16xf32>
    %c1 = arith.constant 1 : index
    %c0_15 = arith.constant 0 : index
    %23 = vector.load %arg4[%c1, %c0_15] : memref<12x32xf32, #tpu.memory_space<vmem>>, vector<1x16xf32>
    %cst_16 = arith.constant dense<0.000000e+00> : vector<64x32xf32>
    %24 = tpu.matmul %0, %21, %cst_16 {dimension_numbers = #tpu.dot_dimension_numbers<[1], [0], [0], [1], [0, 0, 1, 1], [], []>} : vector<64x64xf32>, vector<64x32xf32>, vector<64x32xf32> -> vector<64x32xf32>
    %cst_17 = arith.constant dense<0.000000e+00> : vector<64x32xf32>
    %25 = tpu.matmul %0, %24, %cst_17 {dimension_numbers = #tpu.dot_dimension_numbers<[1], [0], [0], [1], [0, 0, 1, 1], [], []>} : vector<64x64xf32>, vector<64x32xf32>, vector<64x32xf32> -> vector<64x32xf32>
    %cst_18 = arith.constant 2.000000e+00 : f32
    %26 = vector.broadcast %cst_18 : f32 to vector<64x32xf32>
    %27 = arith.mulf %26, %25 : vector<64x32xf32>
    %28 = arith.subf %27, %21 : vector<64x32xf32>
    %29 = vector.extract_strided_slice %22 {offsets = [0, 0], sizes = [32, 16], strides = [1, 1]} : vector<96x16xf32> to vector<32x16xf32>
    %cst_19 = arith.constant dense<0.000000e+00> : vector<64x16xf32>
    %30 = tpu.matmul %21, %29, %cst_19 {dimension_numbers = #tpu.dot_dimension_numbers<[1], [0], [0], [1], [0, 0, 1, 1], [], []>} : vector<64x32xf32>, vector<32x16xf32>, vector<64x16xf32> -> vector<64x16xf32>
    %31 = vector.extract_strided_slice %22 {offsets = [32, 0], sizes = [32, 16], strides = [1, 1]} : vector<96x16xf32> to vector<32x16xf32>
    %cst_20 = arith.constant dense<0.000000e+00> : vector<64x16xf32>
    %32 = tpu.matmul %24, %31, %cst_20 {dimension_numbers = #tpu.dot_dimension_numbers<[1], [0], [0], [1], [0, 0, 1, 1], [], []>} : vector<64x32xf32>, vector<32x16xf32>, vector<64x16xf32> -> vector<64x16xf32>
    %33 = arith.addf %30, %32 : vector<64x16xf32>
    %34 = vector.extract_strided_slice %22 {offsets = [64, 0], sizes = [32, 16], strides = [1, 1]} : vector<96x16xf32> to vector<32x16xf32>
    %cst_21 = arith.constant dense<0.000000e+00> : vector<64x16xf32>
    %35 = tpu.matmul %28, %34, %cst_21 {dimension_numbers = #tpu.dot_dimension_numbers<[1], [0], [0], [1], [0, 0, 1, 1], [], []>} : vector<64x32xf32>, vector<32x16xf32>, vector<64x16xf32> -> vector<64x16xf32>
    %36 = arith.addf %33, %35 : vector<64x16xf32>
    %37 = vector.broadcast %23 : vector<1x16xf32> to vector<64x16xf32>
    %38 = arith.addf %36, %37 : vector<64x16xf32>
    %c144 = arith.constant 144 : index
    %c0_22 = arith.constant 0 : index
    %39 = vector.load %arg3[%c144, %c0_22] : memref<336x32xf32, #tpu.memory_space<vmem>>, vector<48x8xf32>
    %c2 = arith.constant 2 : index
    %c0_23 = arith.constant 0 : index
    %40 = vector.load %arg4[%c2, %c0_23] : memref<12x32xf32, #tpu.memory_space<vmem>>, vector<1x8xf32>
    %cst_24 = arith.constant dense<0.000000e+00> : vector<64x16xf32>
    %41 = tpu.matmul %0, %38, %cst_24 {dimension_numbers = #tpu.dot_dimension_numbers<[1], [0], [0], [1], [0, 0, 1, 1], [], []>} : vector<64x64xf32>, vector<64x16xf32>, vector<64x16xf32> -> vector<64x16xf32>
    %cst_25 = arith.constant dense<0.000000e+00> : vector<64x16xf32>
    %42 = tpu.matmul %0, %41, %cst_25 {dimension_numbers = #tpu.dot_dimension_numbers<[1], [0], [0], [1], [0, 0, 1, 1], [], []>} : vector<64x64xf32>, vector<64x16xf32>, vector<64x16xf32> -> vector<64x16xf32>
    %cst_26 = arith.constant 2.000000e+00 : f32
    %43 = vector.broadcast %cst_26 : f32 to vector<64x16xf32>
    %44 = arith.mulf %43, %42 : vector<64x16xf32>
    %45 = arith.subf %44, %38 : vector<64x16xf32>
    %46 = vector.extract_strided_slice %39 {offsets = [0, 0], sizes = [16, 8], strides = [1, 1]} : vector<48x8xf32> to vector<16x8xf32>
    %cst_27 = arith.constant dense<0.000000e+00> : vector<64x8xf32>
    %47 = tpu.matmul %38, %46, %cst_27 {dimension_numbers = #tpu.dot_dimension_numbers<[1], [0], [0], [1], [0, 0, 1, 1], [], []>} : vector<64x16xf32>, vector<16x8xf32>, vector<64x8xf32> -> vector<64x8xf32>
    %48 = vector.extract_strided_slice %39 {offsets = [16, 0], sizes = [16, 8], strides = [1, 1]} : vector<48x8xf32> to vector<16x8xf32>
    %cst_28 = arith.constant dense<0.000000e+00> : vector<64x8xf32>
    %49 = tpu.matmul %41, %48, %cst_28 {dimension_numbers = #tpu.dot_dimension_numbers<[1], [0], [0], [1], [0, 0, 1, 1], [], []>} : vector<64x16xf32>, vector<16x8xf32>, vector<64x8xf32> -> vector<64x8xf32>
    %50 = arith.addf %47, %49 : vector<64x8xf32>
    %51 = vector.extract_strided_slice %39 {offsets = [32, 0], sizes = [16, 8], strides = [1, 1]} : vector<48x8xf32> to vector<16x8xf32>
    %cst_29 = arith.constant dense<0.000000e+00> : vector<64x8xf32>
    %52 = tpu.matmul %45, %51, %cst_29 {dimension_numbers = #tpu.dot_dimension_numbers<[1], [0], [0], [1], [0, 0, 1, 1], [], []>} : vector<64x16xf32>, vector<16x8xf32>, vector<64x8xf32> -> vector<64x8xf32>
    %53 = arith.addf %50, %52 : vector<64x8xf32>
    %54 = vector.broadcast %40 : vector<1x8xf32> to vector<64x8xf32>
    %55 = arith.addf %53, %54 : vector<64x8xf32>
    %56 = vector.extract_strided_slice %55 {offsets = [0, 0], sizes = [32, 8], strides = [1, 1]} : vector<64x8xf32> to vector<32x8xf32>
    %57 = vector.extract_strided_slice %55 {offsets = [32, 0], sizes = [32, 8], strides = [1, 1]} : vector<64x8xf32> to vector<32x8xf32>
    %58 = tpu.concatenate %56, %57 in 1 : vector<32x8xf32>, vector<32x8xf32> -> vector<32x16xf32>
    %c192 = arith.constant 192 : index
    %c0_30 = arith.constant 0 : index
    %59 = vector.load %arg3[%c192, %c0_30] : memref<336x32xf32, #tpu.memory_space<vmem>>, vector<16x32xf32>
    %c3 = arith.constant 3 : index
    %c0_31 = arith.constant 0 : index
    %60 = vector.load %arg4[%c3, %c0_31] : memref<12x32xf32, #tpu.memory_space<vmem>>, vector<1x16xf32>
    %c4 = arith.constant 4 : index
    %c0_32 = arith.constant 0 : index
    %61 = vector.load %arg4[%c4, %c0_32] : memref<12x32xf32, #tpu.memory_space<vmem>>, vector<1x16xf32>
    %cst_33 = arith.constant dense<0.000000e+00> : vector<32x32xf32>
    %62 = tpu.matmul %4, %59, %cst_33 {dimension_numbers = #tpu.dot_dimension_numbers<[1], [0], [0], [1], [0, 0, 1, 1], [], []>} : vector<32x16xf32>, vector<16x32xf32>, vector<32x32xf32> -> vector<32x32xf32>
    %cst_34 = arith.constant dense<0.000000e+00> : vector<64x32xf32>
    %63 = tpu.matmul %1, %62, %cst_34 {dimension_numbers = #tpu.dot_dimension_numbers<[1], [0], [0], [1], [0, 0, 1, 1], [], []>} : vector<64x32xf32>, vector<32x32xf32>, vector<64x32xf32> -> vector<64x32xf32>
    %64 = vector.extract_strided_slice %63 {offsets = [0, 0], sizes = [32, 16], strides = [1, 1]} : vector<64x32xf32> to vector<32x16xf32>
    %65 = vector.broadcast %60 : vector<1x16xf32> to vector<32x16xf32>
    %66 = arith.addf %64, %65 : vector<32x16xf32>
    %cst_35 = arith.constant 0.000000e+00 : f32
    %67 = vector.broadcast %cst_35 : f32 to vector<32x16xf32>
    %68 = arith.maximumf %66, %67 : vector<32x16xf32>
    %69 = vector.extract_strided_slice %63 {offsets = [0, 16], sizes = [32, 16], strides = [1, 1]} : vector<64x32xf32> to vector<32x16xf32>
    %70 = vector.broadcast %61 : vector<1x16xf32> to vector<32x16xf32>
    %71 = arith.addf %69, %70 : vector<32x16xf32>
    %cst_36 = arith.constant 0.000000e+00 : f32
    %72 = vector.broadcast %cst_36 : f32 to vector<32x16xf32>
    %73 = arith.maximumf %71, %72 : vector<32x16xf32>
    %74 = vector.extract_strided_slice %63 {offsets = [32, 0], sizes = [32, 16], strides = [1, 1]} : vector<64x32xf32> to vector<32x16xf32>
    %75 = vector.broadcast %60 : vector<1x16xf32> to vector<32x16xf32>
    %76 = arith.addf %74, %75 : vector<32x16xf32>
    %cst_37 = arith.constant 0.000000e+00 : f32
    %77 = vector.broadcast %cst_37 : f32 to vector<32x16xf32>
    %78 = arith.maximumf %76, %77 : vector<32x16xf32>
    %c208 = arith.constant 208 : index
    %c0_38 = arith.constant 0 : index
    %79 = vector.load %arg3[%c208, %c0_38] : memref<336x32xf32, #tpu.memory_space<vmem>>, vector<16x32xf32>
    %c224 = arith.constant 224 : index
    %c0_39 = arith.constant 0 : index
    %80 = vector.load %arg3[%c224, %c0_39] : memref<336x32xf32, #tpu.memory_space<vmem>>, vector<16x32xf32>
    %c6 = arith.constant 6 : index
    %c0_40 = arith.constant 0 : index
    %81 = vector.load %arg4[%c6, %c0_40] : memref<12x32xf32, #tpu.memory_space<vmem>>, vector<1x32xf32>
    %c5 = arith.constant 5 : index
    %c0_41 = arith.constant 0 : index
    %82 = vector.load %arg4[%c5, %c0_41] : memref<12x32xf32, #tpu.memory_space<vmem>>, vector<1x32xf32>
    %83 = tpu.concatenate %78, %68 in 0 : vector<32x16xf32>, vector<32x16xf32> -> vector<64x16xf32>
    %cst_42 = arith.constant dense<0.000000e+00> : vector<64x32xf32>
    %84 = tpu.matmul %83, %80, %cst_42 {dimension_numbers = #tpu.dot_dimension_numbers<[1], [0], [0], [1], [0, 0, 1, 1], [], []>} : vector<64x16xf32>, vector<16x32xf32>, vector<64x32xf32> -> vector<64x32xf32>
    %cst_43 = arith.constant dense<0.000000e+00> : vector<32x32xf32>
    %85 = tpu.matmul %73, %79, %cst_43 {dimension_numbers = #tpu.dot_dimension_numbers<[1], [0], [0], [1], [0, 0, 1, 1], [], []>} : vector<32x16xf32>, vector<16x32xf32>, vector<32x32xf32> -> vector<32x32xf32>
    %86 = vector.extract_strided_slice %84 {offsets = [0, 0], sizes = [32, 32], strides = [1, 1]} : vector<64x32xf32> to vector<32x32xf32>
    %87 = vector.extract_strided_slice %84 {offsets = [32, 0], sizes = [32, 32], strides = [1, 1]} : vector<64x32xf32> to vector<32x32xf32>
    %88 = tpu.concatenate %86, %87, %85 in 1 : vector<32x32xf32>, vector<32x32xf32>, vector<32x32xf32> -> vector<32x96xf32>
    %cst_44 = arith.constant dense<0.000000e+00> : vector<64x96xf32>
    %89 = tpu.matmul %1, %88, %cst_44 {dimension_numbers = #tpu.dot_dimension_numbers<[1], [0], [0], [1], [0, 0, 1, 1], [], []>} : vector<64x32xf32>, vector<32x96xf32>, vector<64x96xf32> -> vector<64x96xf32>
    %90 = vector.extract_strided_slice %89 {offsets = [32, 0], sizes = [32, 32], strides = [1, 1]} : vector<64x96xf32> to vector<32x32xf32>
    %91 = vector.broadcast %82 : vector<1x32xf32> to vector<32x32xf32>
    %92 = arith.addf %90, %91 : vector<32x32xf32>
    %cst_45 = arith.constant 0.000000e+00 : f32
    %93 = vector.broadcast %cst_45 : f32 to vector<32x32xf32>
    %94 = arith.maximumf %92, %93 : vector<32x32xf32>
    %95 = vector.extract_strided_slice %89 {offsets = [0, 32], sizes = [32, 32], strides = [1, 1]} : vector<64x96xf32> to vector<32x32xf32>
    %96 = vector.broadcast %82 : vector<1x32xf32> to vector<32x32xf32>
    %97 = arith.addf %95, %96 : vector<32x32xf32>
    %cst_46 = arith.constant 0.000000e+00 : f32
    %98 = vector.broadcast %cst_46 : f32 to vector<32x32xf32>
    %99 = arith.maximumf %97, %98 : vector<32x32xf32>
    %100 = vector.extract_strided_slice %89 {offsets = [0, 64], sizes = [32, 32], strides = [1, 1]} : vector<64x96xf32> to vector<32x32xf32>
    %101 = vector.broadcast %81 : vector<1x32xf32> to vector<32x32xf32>
    %102 = arith.addf %100, %101 : vector<32x32xf32>
    %cst_47 = arith.constant 0.000000e+00 : f32
    %103 = vector.broadcast %cst_47 : f32 to vector<32x32xf32>
    %104 = arith.maximumf %102, %103 : vector<32x32xf32>
    %c240 = arith.constant 240 : index
    %c0_48 = arith.constant 0 : index
    %105 = vector.load %arg3[%c240, %c0_48] : memref<336x32xf32, #tpu.memory_space<vmem>>, vector<32x16xf32>
    %c272 = arith.constant 272 : index
    %c0_49 = arith.constant 0 : index
    %106 = vector.load %arg3[%c272, %c0_49] : memref<336x32xf32, #tpu.memory_space<vmem>>, vector<32x16xf32>
    %c8 = arith.constant 8 : index
    %c0_50 = arith.constant 0 : index
    %107 = vector.load %arg4[%c8, %c0_50] : memref<12x32xf32, #tpu.memory_space<vmem>>, vector<1x16xf32>
    %c7 = arith.constant 7 : index
    %c0_51 = arith.constant 0 : index
    %108 = vector.load %arg4[%c7, %c0_51] : memref<12x32xf32, #tpu.memory_space<vmem>>, vector<1x16xf32>
    %109 = tpu.concatenate %94, %99 in 0 : vector<32x32xf32>, vector<32x32xf32> -> vector<64x32xf32>
    %cst_52 = arith.constant dense<0.000000e+00> : vector<64x16xf32>
    %110 = tpu.matmul %109, %106, %cst_52 {dimension_numbers = #tpu.dot_dimension_numbers<[1], [0], [0], [1], [0, 0, 1, 1], [], []>} : vector<64x32xf32>, vector<32x16xf32>, vector<64x16xf32> -> vector<64x16xf32>
    %cst_53 = arith.constant dense<0.000000e+00> : vector<32x16xf32>
    %111 = tpu.matmul %104, %105, %cst_53 {dimension_numbers = #tpu.dot_dimension_numbers<[1], [0], [0], [1], [0, 0, 1, 1], [], []>} : vector<32x32xf32>, vector<32x16xf32>, vector<32x16xf32> -> vector<32x16xf32>
    %112 = vector.extract_strided_slice %110 {offsets = [0, 0], sizes = [32, 16], strides = [1, 1]} : vector<64x16xf32> to vector<32x16xf32>
    %113 = vector.extract_strided_slice %110 {offsets = [32, 0], sizes = [32, 16], strides = [1, 1]} : vector<64x16xf32> to vector<32x16xf32>
    %114 = tpu.concatenate %112, %113, %111 in 1 : vector<32x16xf32>, vector<32x16xf32>, vector<32x16xf32> -> vector<32x48xf32>
    %cst_54 = arith.constant dense<0.000000e+00> : vector<64x48xf32>
    %115 = tpu.matmul %1, %114, %cst_54 {dimension_numbers = #tpu.dot_dimension_numbers<[1], [0], [0], [1], [0, 0, 1, 1], [], []>} : vector<64x32xf32>, vector<32x48xf32>, vector<64x48xf32> -> vector<64x48xf32>
    %116 = vector.extract_strided_slice %115 {offsets = [32, 0], sizes = [32, 16], strides = [1, 1]} : vector<64x48xf32> to vector<32x16xf32>
    %117 = vector.broadcast %108 : vector<1x16xf32> to vector<32x16xf32>
    %118 = arith.addf %116, %117 : vector<32x16xf32>
    %119 = vector.extract_strided_slice %115 {offsets = [0, 16], sizes = [32, 16], strides = [1, 1]} : vector<64x48xf32> to vector<32x16xf32>
    %120 = vector.broadcast %108 : vector<1x16xf32> to vector<32x16xf32>
    %121 = arith.addf %119, %120 : vector<32x16xf32>
    %122 = vector.extract_strided_slice %115 {offsets = [0, 32], sizes = [32, 16], strides = [1, 1]} : vector<64x48xf32> to vector<32x16xf32>
    %123 = vector.broadcast %107 : vector<1x16xf32> to vector<32x16xf32>
    %124 = arith.addf %122, %123 : vector<32x16xf32>
    %125 = arith.addf %118, %121 : vector<32x16xf32>
    %cst_55 = arith.constant 5.000000e-01 : f32
    %126 = vector.broadcast %cst_55 : f32 to vector<32x16xf32>
    %127 = arith.mulf %126, %125 : vector<32x16xf32>
    %c304 = arith.constant 304 : index
    %c0_56 = arith.constant 0 : index
    %128 = vector.load %arg3[%c304, %c0_56] : memref<336x32xf32, #tpu.memory_space<vmem>>, vector<16x8xf32>
    %c9 = arith.constant 9 : index
    %c0_57 = arith.constant 0 : index
    %129 = vector.load %arg4[%c9, %c0_57] : memref<12x32xf32, #tpu.memory_space<vmem>>, vector<1x8xf32>
    %c10 = arith.constant 10 : index
    %c0_58 = arith.constant 0 : index
    %130 = vector.load %arg4[%c10, %c0_58] : memref<12x32xf32, #tpu.memory_space<vmem>>, vector<1x8xf32>
    %131 = tpu.concatenate %58, %124, %127 in 0 : vector<32x16xf32>, vector<32x16xf32>, vector<32x16xf32> -> vector<96x16xf32>
    %cst_59 = arith.constant dense<0.000000e+00> : vector<96x8xf32>
    %132 = tpu.matmul %131, %128, %cst_59 {dimension_numbers = #tpu.dot_dimension_numbers<[1], [0], [0], [1], [0, 0, 1, 1], [], []>} : vector<96x16xf32>, vector<16x8xf32>, vector<96x8xf32> -> vector<96x8xf32>
    %133 = vector.broadcast %129 : vector<1x8xf32> to vector<96x8xf32>
    %134 = arith.addf %132, %133 : vector<96x8xf32>
    %135 = math.tanh %134 : vector<96x8xf32>
    %136 = vector.broadcast %130 : vector<1x8xf32> to vector<96x8xf32>
    %137 = arith.mulf %135, %136 : vector<96x8xf32>
    %cst_60 = arith.constant dense<0.000000e+00> : vector<96xf32>
    %138 = vector.multi_reduction <add>, %137, %cst_60 [1] : vector<96x8xf32> to vector<96xf32>
    %139 = vector.shape_cast %138 : vector<96xf32> to vector<96x1xf32>
    %140 = vector.extract_strided_slice %139 {offsets = [0, 0], sizes = [32, 1], strides = [1, 1]} : vector<96x1xf32> to vector<32x1xf32>
    %141 = vector.extract_strided_slice %139 {offsets = [32, 0], sizes = [32, 1], strides = [1, 1]} : vector<96x1xf32> to vector<32x1xf32>
    %142 = vector.extract_strided_slice %139 {offsets = [64, 0], sizes = [32, 1], strides = [1, 1]} : vector<96x1xf32> to vector<32x1xf32>
    %143 = arith.maximumf %140, %141 : vector<32x1xf32>
    %144 = arith.maximumf %143, %142 : vector<32x1xf32>
    %145 = arith.subf %140, %144 : vector<32x1xf32>
    %146 = math.exp %145 : vector<32x1xf32>
    %147 = arith.subf %141, %144 : vector<32x1xf32>
    %148 = math.exp %147 : vector<32x1xf32>
    %149 = arith.subf %142, %144 : vector<32x1xf32>
    %150 = math.exp %149 : vector<32x1xf32>
    %151 = arith.addf %146, %148 : vector<32x1xf32>
    %152 = arith.addf %151, %150 : vector<32x1xf32>
    %153 = tpu.reciprocal %152 : vector<32x1xf32> -> vector<32x1xf32>
    %154 = arith.mulf %146, %153 : vector<32x1xf32>
    %155 = arith.mulf %148, %153 : vector<32x1xf32>
    %156 = arith.mulf %150, %153 : vector<32x1xf32>
    %157 = vector.broadcast %154 : vector<32x1xf32> to vector<32x16xf32>
    %158 = arith.mulf %157, %58 : vector<32x16xf32>
    %159 = vector.broadcast %155 : vector<32x1xf32> to vector<32x16xf32>
    %160 = arith.mulf %159, %124 : vector<32x16xf32>
    %161 = arith.addf %158, %160 : vector<32x16xf32>
    %162 = vector.broadcast %156 : vector<32x1xf32> to vector<32x16xf32>
    %163 = arith.mulf %162, %127 : vector<32x16xf32>
    %164 = arith.addf %161, %163 : vector<32x16xf32>
    %c320 = arith.constant 320 : index
    %c0_61 = arith.constant 0 : index
    %165 = vector.load %arg3[%c320, %c0_61] : memref<336x32xf32, #tpu.memory_space<vmem>>, vector<16x4xf32>
    %c11 = arith.constant 11 : index
    %c0_62 = arith.constant 0 : index
    %166 = vector.load %arg4[%c11, %c0_62] : memref<12x32xf32, #tpu.memory_space<vmem>>, vector<1x4xf32>
    %cst_63 = arith.constant dense<0.000000e+00> : vector<32x4xf32>
    %167 = tpu.matmul %164, %165, %cst_63 {dimension_numbers = #tpu.dot_dimension_numbers<[1], [0], [0], [1], [0, 0, 1, 1], [], []>} : vector<32x16xf32>, vector<16x4xf32>, vector<32x4xf32> -> vector<32x4xf32>
    %168 = vector.broadcast %166 : vector<1x4xf32> to vector<32x4xf32>
    %169 = arith.addf %167, %168 : vector<32x4xf32>
    %cst_64 = arith.constant dense<0xFF800000> : vector<32xf32>
    %170 = vector.multi_reduction <maximumf>, %169, %cst_64 [1] : vector<32x4xf32> to vector<32xf32>
    %171 = vector.shape_cast %170 : vector<32xf32> to vector<32x1xf32>
    %172 = vector.broadcast %171 : vector<32x1xf32> to vector<32x4xf32>
    %173 = arith.subf %169, %172 : vector<32x4xf32>
    %174 = math.exp %173 : vector<32x4xf32>
    %cst_65 = arith.constant dense<0.000000e+00> : vector<32xf32>
    %175 = vector.multi_reduction <add>, %174, %cst_65 [1] : vector<32x4xf32> to vector<32xf32>
    %176 = vector.shape_cast %175 : vector<32xf32> to vector<32x1xf32>
    %177 = math.log %176 : vector<32x1xf32>
    %178 = vector.broadcast %177 : vector<32x1xf32> to vector<32x4xf32>
    %179 = arith.subf %173, %178 : vector<32x4xf32>
    %180 = tpu.concatenate %154, %155, %156 in 1 : vector<32x1xf32>, vector<32x1xf32>, vector<32x1xf32> -> vector<32x3xf32>
    %cst_66 = arith.constant 0.000000e+00 : f32
    %181 = vector.broadcast %cst_66 : f32 to vector<32x41xf32>
    %182 = tpu.concatenate %58, %124, %118, %121, %164, %179, %180, %181 in 1 : vector<32x16xf32>, vector<32x16xf32>, vector<32x16xf32>, vector<32x16xf32>, vector<32x16xf32>, vector<32x4xf32>, vector<32x3xf32>, vector<32x41xf32> -> vector<32x128xf32>
    %c0_67 = arith.constant 0 : index
    %c0_68 = arith.constant 0 : index
    %183 = vector.load %arg5[%c0_67, %c0_68] : memref<32x128xf32, #tpu.memory_space<vmem>>, vector<32x128xf32>
    tpu.vector_store %arg5[%c0_67, %c0_68], %182 {strides = array<i32>} : memref<32x128xf32, #tpu.memory_space<vmem>>, vector<32x128xf32>,
    return
  }
}

</mosaic_0001>

<llo_original>
// kernel: neg.1
$region0: #{neg.1}
  #allocation0 [shape = 's32[1]{0}', space=sflag, size = 0x4, scoped, tag = 'scoped memory for neg.1']
  %s0 = inlined_call_operand.vmem [shape: f32[32,32], index: 0, kind: input, shape index: {}]
  %s1 = inlined_call_operand.vmem [shape: f32[32,32], index: 1, kind: output, shape index: {}]
  %v2 = vld [vmem:[%s0] sm:$0xff]
  %3 = xla_tuple %v2
  %4 = xla_tuple %3
  %v5 = vxor.u32 %v2, 2147483648
  %6 = xla_tuple %v5
  %7 = vst [vmem:[%s1] sm:$0xff] %v5
  %s8 = scalar_lea.vmem %s0, 8
  %v9 = vld [vmem:[%s8] sm:$0xff]
  %10 = xla_tuple %v9
  %11 = xla_tuple %10
  %v12 = vxor.u32 %v9, 2147483648
  %13 = xla_tuple %v12
  %s14 = scalar_lea.vmem %s1, 8
  %15 = vst [vmem:[%s14] sm:$0xff] %v12
  %s16 = scalar_lea.vmem %s0, 16
  %v17 = vld [vmem:[%s16] sm:$0xff]
  %18 = xla_tuple %v17
  %19 = xla_tuple %18
  %v20 = vxor.u32 %v17, 2147483648
  %21 = xla_tuple %v20
  %s22 = scalar_lea.vmem %s1, 16
  %23 = vst [vmem:[%s22] sm:$0xff] %v20
  %s24 = scalar_lea.vmem %s0, 24
  %v25 = vld [vmem:[%s24] sm:$0xff]
  %26 = xla_tuple %v25
  %27 = xla_tuple %26
  %v28 = vxor.u32 %v25, 2147483648
  %29 = xla_tuple %v28
  %s30 = scalar_lea.vmem %s1, 24
  %31 = vst [vmem:[%s30] sm:$0xff] %v28

// kernel: magnet_model_forward.1
$region0: #{magnet_model_forward.1}
  #allocation0 [shape = 'u32[]', space=smem, size = 0x4, offset = 0x4, fixed_abs, tag = 'smem constant byte address 0x4 - core index']
  #allocation1 [shape = 'u32[144,128]{1,0:T(1,128)}', space=vmem, size = 0x12000, scoped, tag = 'internal scratch']
  %s0 = inlined_call_operand.vmem [shape: f32[64,64], index: 0, kind: input, shape index: {}]
  %s1 = inlined_call_operand.vmem [shape: f32[64,32], index: 1, kind: input, shape index: {}]
  %s2 = inlined_call_operand.vmem [shape: f32[96,16], index: 2, kind: input, shape index: {}]
  %s3 = inlined_call_operand.vmem [shape: f32[336,32], index: 3, kind: input, shape index: {}]
  %s4 = inlined_call_operand.vmem [shape: f32[12,32], index: 4, kind: input, shape index: {}]
  %s5 = inlined_call_operand.vmem [shape: f32[32,128], index: 5, kind: output, shape index: {}]
  %s6 = sld [smem:[#allocation0]]
  $region30: #{magnet_model_forward.1} parent=0
    _
  %s8 = ssub.s32 1, %s6
  %s9 = scalar_select 0, %s8, %s6
  // Predicated region
  $region2: #{magnet_model_forward.1} parent=0 // pred_check
    _
  $region3: #{magnet_model_forward.1} parent=0 // pred_check_branch
    %11 = sbr.rel (0) target = $region5
  $region4: #{magnet_model_forward.1} parent=0 // pred_region
    _
  $region5: #{magnet_model_forward.1} parent=0 // pred_fallthru
    _
  // Predicated region
  $region6: #{magnet_model_forward.1} parent=0 // pred_check
    _
  $region7: #{magnet_model_forward.1} parent=0 // pred_check_branch
    %13 = sbr.rel (0) target = $region9
  $region8: #{magnet_model_forward.1} parent=0 // pred_region
    _
  $region9: #{magnet_model_forward.1} parent=0 // pred_fallthru
    _
  // Predicated region
  $region10: #{magnet_model_forward.1} parent=0 // pred_check
    _
  $region11: #{magnet_model_forward.1} parent=0 // pred_check_branch
    %15 = sbr.rel (0) target = $region13
  $region12: #{magnet_model_forward.1} parent=0 // pred_region
    _
  $region13: #{magnet_model_forward.1} parent=0 // pred_fallthru
    _
  // Predicated region
  $region14: #{magnet_model_forward.1} parent=0 // pred_check
    _
  $region15: #{magnet_model_forward.1} parent=0 // pred_check_branch
    %17 = sbr.rel (0) target = $region17
  $region16: #{magnet_model_forward.1} parent=0 // pred_region
    _
  $region17: #{magnet_model_forward.1} parent=0 // pred_fallthru
    _
  // Predicated region
  $region18: #{magnet_model_forward.1} parent=0 // pred_check
    _
  $region19: #{magnet_model_forward.1} parent=0 // pred_check_branch
    %19 = sbr.rel (0) target = $region21
  $region20: #{magnet_model_forward.1} parent=0 // pred_region
    _
  $region21: #{magnet_model_forward.1} parent=0 // pred_fallthru
    _
  %v20 = vld [vmem:[%s0] sm:$0xff]
  %v21 = vld [vmem:[%s0 + $0x8] sm:$0xff]
  %v22 = vld [vmem:[%s0 + $0x10] sm:$0xff]
  %v23 = vld [vmem:[%s0 + $0x18] sm:$0xff]
  %v24 = vld [vmem:[%s0 + $0x20] sm:$0xff]
  %v25 = vld [vmem:[%s0 + $0x28] sm:$0xff]
  %v26 = vld [vmem:[%s0 + $0x30] sm:$0xff]
  %v27 = vld [vmem:[%s0 + $0x38] sm:$0xff]
  %v28 = vld [vmem:[%s1] sm:$0xff]
  %v29 = vld [vmem:[%s1 + $0x8] sm:$0xff]
  %v30 = vld [vmem:[%s1 + $0x10] sm:$0xff]
  %v31 = vld [vmem:[%s1 + $0x18] sm:$0xff]
  %v32 = vld [vmem:[%s1 + $0x20] sm:$0xff]
  %v33 = vld [vmem:[%s1 + $0x28] sm:$0xff]
  %v34 = vld [vmem:[%s1 + $0x30] sm:$0xff]
  %v35 = vld [vmem:[%s1 + $0x38] sm:$0xff]
  %v36 = vld [vmem:[%s2] sm:$0xff]
  %v37 = vld [vmem:[%s2 + $0x8] sm:$0xff]
  %v38 = vld [vmem:[%s2 + $0x10] sm:$0xff]
  %v39 = vld [vmem:[%s2 + $0x18] sm:$0xff]
  %v40 = vld [vmem:[%s2 + $0x20] sm:$0xff]
  %v41 = vld [vmem:[%s2 + $0x28] sm:$0xff]
  %v42 = vld [vmem:[%s2 + $0x30] sm:$0xff]
  %v43 = vld [vmem:[%s2 + $0x38] sm:$0xff]
  %v44 = vld [vmem:[%s2 + $0x40] sm:$0xff]
  %v45 = vld [vmem:[%s2 + $0x48] sm:$0xff]
  %v46 = vld [vmem:[%s2 + $0x50] sm:$0xff]
  %v47 = vld [vmem:[%s2 + $0x58] sm:$0xff]
  %v48 = vld [vmem:[%s3] sm:$0xff]
  %v49 = vld [vmem:[%s3 + $0x8] sm:$0xff]
  %v50 = vld [vmem:[%s3 + $0x10] sm:$0xff]
  %v51 = vld [vmem:[%s3 + $0x18] sm:$0xff]
  %v52 = vld [vmem:[%s3 + $0x20] sm:$0xff]
  %v53 = vld [vmem:[%s3 + $0x28] sm:$0xff]
  %v54 = vld [vmem:[%s4] sm:$0x1]
  %vm55 = vcmask 523264
  %v57 = vsel %vm55, %v20, 0
  %v60 = vsel %vm55, %v21, 0
  %v63 = vsel %vm55, %v22, 0
  %v66 = vsel %vm55, %v23, 0
  %v69 = vsel %vm55, %v24, 0
  %v72 = vsel %vm55, %v25, 0
  %v75 = vsel %vm55, %v26, 0
  %v78 = vsel %vm55, %v27, 0
  %80 = vmatprep.subr.mxu0 0.0
  %81 = vmatpush1.msra.mxu0 %v36
  %82 = vmatprep.subr.mxu0 0.0
  %83 = vmatpush1.msra.mxu0 %v37
  %84 = vmatprep.subr.mxu0 0.0
  %85 = vmatpush1.msra.mxu0 %v38
  %86 = vmatprep.subr.mxu0 0.0
  %87 = vmatpush1.msra.mxu0 %v39
  %88 = vmatprep.subr.mxu0 0.0
  %89 = vmatpush1.msra.mxu0 %v40
  %90 = vmatprep.subr.mxu0 0.0
  %91 = vmatpush1.msra.mxu0 %v41
  %92 = vmatprep.subr.mxu0 0.0
  %93 = vmatpush1.msra.mxu0 %v42
  %94 = vmatprep.subr.mxu0 0.0
  %95 = vmatpush1.msra.mxu0 %v43
  %96 = vmatprep.subr.mxu0 0.0
  %97 = vmatpush1.msra.mxu0 0.0
  %98 = vmatprep.subr.mxu0 0.0
  %99 = vmatpush1.msra.mxu0 0.0
  %100 = vmatprep.subr.mxu0 0.0
  %101 = vmatpush1.msra.mxu0 0.0
  %102 = vmatprep.subr.mxu0 0.0
  %103 = vmatpush1.msra.mxu0 0.0
  %104 = vmatprep.subr.mxu0 0.0
  %105 = vmatpush1.msra.mxu0 0.0
  %106 = vmatprep.subr.mxu0 0.0
  %107 = vmatpush1.msra.mxu0 0.0
  %108 = vmatprep.subr.mxu0 0.0
  %109 = vmatpush1.msra.mxu0 0.0
  %110 = vmatprep.subr.mxu0 0.0
  %111 = vmatpush1.msra.mxu0 0.0
  %112 = vmatprep.subr.mxu0 0.0
  %113 = vmatpush1.msra.mxu0 0.0
  %114 = vmatprep.subr.mxu0 0.0
  %115 = vmatpush1.msra.mxu0 0.0
  %116 = vmatprep.subr.mxu0 0.0
  %117 = vmatpush1.msra.mxu0 0.0
  %118 = vmatprep.subr.mxu0 0.0
  %119 = vmatpush1.msra.mxu0 0.0
  %120 = vmatprep.subr.mxu0 0.0
  %121 = vmatpush1.msra.mxu0 0.0
  %122 = vmatprep.subr.mxu0 0.0
  %123 = vmatpush1.msra.mxu0 0.0
  %124 = vmatprep.subr.mxu0 0.0
  %125 = vmatpush1.msra.mxu0 0.0
  %126 = vmatprep.subr.mxu0 0.0
  %127 = vmatpush1.msra.mxu0 0.0
  %128 = vmatprep.subr.mxu0 0.0
  %129 = vmatpush1.msra.mxu0 0.0
  %130 = vmatprep.subr.mxu0 0.0
  %131 = vmatpush1.msra.mxu0 0.0
  %132 = vmatprep.subr.mxu0 0.0
  %133 = vmatpush1.msra.mxu0 0.0
  %134 = vmatprep.subr.mxu0 0.0
  %135 = vmatpush1.msra.mxu0 0.0
  %136 = vmatprep.subr.mxu0 0.0
  %137 = vmatpush1.msra.mxu0 0.0
  %138 = vmatprep.subr.mxu0 0.0
  %139 = vmatpush1.msra.mxu0 0.0
  %140 = vmatprep.subr.mxu0 0.0
  %141 = vmatpush1.msra.mxu0 0.0
  %142 = vmatprep.subr.mxu0 0.0
  %143 = vmatpush1.msra.mxu0 0.0
  %144 = vmatprep.mubr.f32.mxu0 0.0
  %145 = vmatmul.mubr.f32.gmra.mrb[0].mxu0 %v57
  %v146 = vpop.f32.mrb[0].mxu0
  %v147 = vadd.f32 0.0, %v146
  %v148 = vpop.f32.mrb[0].mxu0
  %149 = vmatprep.mubr.f32.mxu0 0.0
  %150 = vmatmul.mubr.f32.gmra.mrb[0].mxu0 %v60
  %v151 = vpop.f32.mrb[0].mxu0
  %v152 = vadd.f32 0.0, %v151
  %v153 = vpop.f32.mrb[0].mxu0
  %154 = vmatprep.mubr.f32.mxu0 0.0
  %155 = vmatmul.mubr.f32.gmra.mrb[0].mxu0 %v63
  %v156 = vpop.f32.mrb[0].mxu0
  %v157 = vadd.f32 0.0, %v156
  %v158 = vpop.f32.mrb[0].mxu0
  %159 = vmatprep.mubr.f32.mxu0 0.0
  %160 = vmatmul.mubr.f32.gmra.mrb[0].mxu0 %v66
  %v161 = vpop.f32.mrb[0].mxu0
  %v162 = vadd.f32 0.0, %v161
  %v163 = vpop.f32.mrb[0].mxu0
  %164 = vmatprep.mubr.f32.mxu0 0.0
  %165 = vmatmul.mubr.f32.gmra.mrb[0].mxu0 %v69
  %v166 = vpop.f32.mrb[0].mxu0
  %v167 = vadd.f32 0.0, %v166
  %v168 = vpop.f32.mrb[0].mxu0
  %169 = vmatprep.mubr.f32.mxu0 0.0
  %170 = vmatmul.mubr.f32.gmra.mrb[0].mxu0 %v72
  %v171 = vpop.f32.mrb[0].mxu0
  %v172 = vadd.f32 0.0, %v171
  %v173 = vpop.f32.mrb[0].mxu0
  %174 = vmatprep.mubr.f32.mxu0 0.0
  %175 = vmatmul.mubr.f32.gmra.mrb[0].mxu0 %v75
  %v176 = vpop.f32.mrb[0].mxu0
  %v177 = vadd.f32 0.0, %v176
  %v178 = vpop.f32.mrb[0].mxu0
  %179 = vmatprep.mubr.f32.mxu0 0.0
  %180 = vmatmul.mubr.f32.gmra.mrb[0].mxu0 %v78
  %v181 = vpop.f32.mrb[0].mxu0
  %v182 = vadd.f32 0.0, %v181
  %v183 = vpop.f32.mrb[0].mxu0
  %184 = vdwg.mxu0
  %185 = vmatprep.subr.mxu0 0.0
  %186 = vmatpush1.msra.mxu0 %v147
  %187 = vmatprep.subr.mxu0 0.0
  %188 = vmatpush1.msra.mxu0 %v152
  %189 = vmatprep.subr.mxu0 0.0
  %190 = vmatpush1.msra.mxu0 %v157
  %191 = vmatprep.subr.mxu0 0.0
  %192 = vmatpush1.msra.mxu0 %v162
  %193 = vmatprep.subr.mxu0 0.0
  %194 = vmatpush1.msra.mxu0 %v167
  %195 = vmatprep.subr.mxu0 0.0
  %196 = vmatpush1.msra.mxu0 %v172
  %197 = vmatprep.subr.mxu0 0.0
  %198 = vmatpush1.msra.mxu0 %v177
  %199 = vmatprep.subr.mxu0 0.0
  %200 = vmatpush1.msra.mxu0 %v182
  %201 = vmatprep.subr.mxu0 0.0
  %202 = vmatpush1.msra.mxu0 0.0
  %203 = vmatprep.subr.mxu0 0.0
  %204 = vmatpush1.msra.mxu0 0.0
  %205 = vmatprep.subr.mxu0 0.0
  %206 = vmatpush1.msra.mxu0 0.0
  %207 = vmatprep.subr.mxu0 0.0
  %208 = vmatpush1.msra.mxu0 0.0
  %209 = vmatprep.subr.mxu0 0.0
  %210 = vmatpush1.msra.mxu0 0.0
  %211 = vmatprep.subr.mxu0 0.0
  %212 = vmatpush1.msra.mxu0 0.0
  %213 = vmatprep.subr.mxu0 0.0
  %214 = vmatpush1.msra.mxu0 0.0
  %215 = vmatprep.subr.mxu0 0.0
  %216 = vmatpush1.msra.mxu0 0.0
  %217 = vmatprep.subr.mxu0 0.0
  %218 = vmatpush1.msra.mxu0 0.0
  %219 = vmatprep.subr.mxu0 0.0
  %220 = vmatpush1.msra.mxu0 0.0
  %221 = vmatprep.subr.mxu0 0.0
  %222 = vmatpush1.msra.mxu0 0.0
  %223 = vmatprep.subr.mxu0 0.0
  %224 = vmatpush1.msra.mxu0 0.0
  %225 = vmatprep.subr.mxu0 0.0
  %226 = vmatpush1.msra.mxu0 0.0
  %227 = vmatprep.subr.mxu0 0.0
  %228 = vmatpush1.msra.mxu0 0.0
  %229 = vmatprep.subr.mxu0 0.0
  %230 = vmatpush1.msra.mxu0 0.0
  %231 = vmatprep.subr.mxu0 0.0
  %232 = vmatpush1.msra.mxu0 0.0
  %233 = vmatprep.subr.mxu0 0.0
  %234 = vmatpush1.msra.mxu0 0.0
  %235 = vmatprep.subr.mxu0 0.0
  %236 = vmatpush1.msra.mxu0 0.0
  %237 = vmatprep.subr.mxu0 0.0
  %238 = vmatpush1.msra.mxu0 0.0
  %239 = vmatprep.subr.mxu0 0.0
  %240 = vmatpush1.msra.mxu0 0.0
  %241 = vmatprep.subr.mxu0 0.0
  %242 = vmatpush1.msra.mxu0 0.0
  %243 = vmatprep.subr.mxu0 0.0
  %244 = vmatpush1.msra.mxu0 0.0
  %245 = vmatprep.subr.mxu0 0.0
  %246 = vmatpush1.msra.mxu0 0.0
  %247 = vmatprep.subr.mxu0 0.0
  %248 = vmatpush1.msra.mxu0 0.0
  %249 = vmatprep.mubr.f32.mxu0 0.0
  %250 = vmatmul.mubr.f32.gmra.mrb[0].mxu0 %v57
  %v251 = vpop.f32.mrb[0].mxu0
  %v252 = vadd.f32 0.0, %v251
  %v253 = vpop.f32.mrb[0].mxu0
  %254 = vmatprep.mubr.f32.mxu0 0.0
  %255 = vmatmul.mubr.f32.gmra.mrb[0].mxu0 %v60
  %v256 = vpop.f32.mrb[0].mxu0
  %v257 = vadd.f32 0.0, %v256
  %v258 = vpop.f32.mrb[0].mxu0
  %259 = vmatprep.mubr.f32.mxu0 0.0
  %260 = vmatmul.mubr.f32.gmra.mrb[0].mxu0 %v63
  %v261 = vpop.f32.mrb[0].mxu0
  %v262 = vadd.f32 0.0, %v261
  %v263 = vpop.f32.mrb[0].mxu0
  %264 = vmatprep.mubr.f32.mxu0 0.0
  %265 = vmatmul.mubr.f32.gmra.mrb[0].mxu0 %v66
  %v266 = vpop.f32.mrb[0].mxu0
  %v267 = vadd.f32 0.0, %v266
  %v268 = vpop.f32.mrb[0].mxu0
  %269 = vmatprep.mubr.f32.mxu0 0.0
  %270 = vmatmul.mubr.f32.gmra.mrb[0].mxu0 %v69
  %v271 = vpop.f32.mrb[0].mxu0
  %v272 = vadd.f32 0.0, %v271
  %v273 = vpop.f32.mrb[0].mxu0
  %274 = vmatprep.mubr.f32.mxu0 0.0
  %275 = vmatmul.mubr.f32.gmra.mrb[0].mxu0 %v72
  %v276 = vpop.f32.mrb[0].mxu0
  %v277 = vadd.f32 0.0, %v276
  %v278 = vpop.f32.mrb[0].mxu0
  %279 = vmatprep.mubr.f32.mxu0 0.0
  %280 = vmatmul.mubr.f32.gmra.mrb[0].mxu0 %v75
  %v281 = vpop.f32.mrb[0].mxu0
  %v282 = vadd.f32 0.0, %v281
  %v283 = vpop.f32.mrb[0].mxu0
  %284 = vmatprep.mubr.f32.mxu0 0.0
  %285 = vmatmul.mubr.f32.gmra.mrb[0].mxu0 %v78
  %v286 = vpop.f32.mrb[0].mxu0
  %v287 = vadd.f32 0.0, %v286
  %v288 = vpop.f32.mrb[0].mxu0
  %289 = vdwg.mxu0
  %v290 = vmul.f32 %v252, 2.0
  %v291 = vmul.f32 %v257, 2.0
  %v292 = vmul.f32 %v262, 2.0
  %v293 = vmul.f32 %v267, 2.0
  %v294 = vmul.f32 %v272, 2.0
  %v295 = vmul.f32 %v277, 2.0
  %v296 = vmul.f32 %v282, 2.0
  %v297 = vmul.f32 %v287, 2.0
  %v298 = vsub.f32 %v290, %v36
  %v299 = vsub.f32 %v291, %v37
  %v300 = vsub.f32 %v292, %v38
  %v301 = vsub.f32 %v293, %v39
  %v302 = vsub.f32 %v294, %v40
  %v303 = vsub.f32 %v295, %v41
  %v304 = vsub.f32 %v296, %v42
  %v305 = vsub.f32 %v297, %v43
  %vm306 = vcmask 130048
  %v308 = vsel %vm306, %v147, 0
  %v311 = vsel %vm306, %v152, 0
  %v314 = vsel %vm306, %v157, 0
  %v317 = vsel %vm306, %v162, 0
  %v320 = vsel %vm306, %v167, 0
  %v323 = vsel %vm306, %v172, 0
  %v326 = vsel %vm306, %v177, 0
  %v329 = vsel %vm306, %v182, 0
  %331 = vmatprep.subr.mxu0 0.0
  %332 = vmatpush1.msra.mxu0 %v50
  %333 = vmatprep.subr.mxu0 0.0
  %334 = vmatpush1.msra.mxu0 %v51
  %335 = vmatprep.subr.mxu0 0.0
  %336 = vmatpush1.msra.mxu0 0.0
  %337 = vmatprep.subr.mxu0 0.0
  %338 = vmatpush1.msra.mxu0 0.0
  %339 = vmatprep.subr.mxu0 0.0
  %340 = vmatpush1.msra.mxu0 0.0
  %341 = vmatprep.subr.mxu0 0.0
  %342 = vmatpush1.msra.mxu0 0.0
  %343 = vmatprep.subr.mxu0 0.0
  %344 = vmatpush1.msra.mxu0 0.0
  %345 = vmatprep.subr.mxu0 0.0
  %346 = vmatpush1.msra.mxu0 0.0
  %347 = vmatprep.subr.mxu0 0.0
  %348 = vmatpush1.msra.mxu0 0.0
  %349 = vmatprep.subr.mxu0 0.0
  %350 = vmatpush1.msra.mxu0 0.0
  %351 = vmatprep.subr.mxu0 0.0
  %352 = vmatpush1.msra.mxu0 0.0
  %353 = vmatprep.subr.mxu0 0.0
  %354 = vmatpush1.msra.mxu0 0.0
  %355 = vmatprep.subr.mxu0 0.0
  %356 = vmatpush1.msra.mxu0 0.0
  %357 = vmatprep.subr.mxu0 0.0
  %358 = vmatpush1.msra.mxu0 0.0
  %359 = vmatprep.subr.mxu0 0.0
  %360 = vmatpush1.msra.mxu0 0.0
  %361 = vmatprep.subr.mxu0 0.0
  %362 = vmatpush1.msra.mxu0 0.0
  %363 = vmatprep.subr.mxu0 0.0
  %364 = vmatpush1.msra.mxu0 0.0
  %365 = vmatprep.subr.mxu0 0.0
  %366 = vmatpush1.msra.mxu0 0.0
  %367 = vmatprep.subr.mxu0 0.0
  %368 = vmatpush1.msra.mxu0 0.0
  %369 = vmatprep.subr.mxu0 0.0
  %370 = vmatpush1.msra.mxu0 0.0
  %371 = vmatprep.subr.mxu0 0.0
  %372 = vmatpush1.msra.mxu0 0.0
  %373 = vmatprep.subr.mxu0 0.0
  %374 = vmatpush1.msra.mxu0 0.0
  %375 = vmatprep.subr.mxu0 0.0
  %376 = vmatpush1.msra.mxu0 0.0
  %377 = vmatprep.subr.mxu0 0.0
  %378 = vmatpush1.msra.mxu0 0.0
  %379 = vmatprep.subr.mxu0 0.0
  %380 = vmatpush1.msra.mxu0 0.0
  %381 = vmatprep.subr.mxu0 0.0
  %382 = vmatpush1.msra.mxu0 0.0
  %383 = vmatprep.subr.mxu0 0.0
  %384 = vmatpush1.msra.mxu0 0.0
  %385 = vmatprep.subr.mxu0 0.0
  %386 = vmatpush1.msra.mxu0 0.0
  %387 = vmatprep.subr.mxu0 0.0
  %388 = vmatpush1.msra.mxu0 0.0
  %389 = vmatprep.subr.mxu0 0.0
  %390 = vmatpush1.msra.mxu0 0.0
  %391 = vmatprep.subr.mxu0 0.0
  %392 = vmatpush1.msra.mxu0 0.0
  %393 = vmatprep.subr.mxu0 0.0
  %394 = vmatpush1.msra.mxu0 0.0
  %395 = vmatprep.mubr.f32.mxu0 0.0
  %396 = vmatmul.mubr.f32.gmra.mrb[0].mxu0 %v308
  %v397 = vpop.f32.mrb[0].mxu0
  %v398 = vadd.f32 0.0, %v397
  %v399 = vpop.f32.mrb[0].mxu0
  %400 = vmatprep.mubr.f32.mxu0 0.0
  %401 = vmatmul.mubr.f32.gmra.mrb[0].mxu0 %v311
  %v402 = vpop.f32.mrb[0].mxu0
  %v403 = vadd.f32 0.0, %v402
  %v404 = vpop.f32.mrb[0].mxu0
  %405 = vmatprep.mubr.f32.mxu0 0.0
  %406 = vmatmul.mubr.f32.gmra.mrb[0].mxu0 %v314
  %v407 = vpop.f32.mrb[0].mxu0
  %v408 = vadd.f32 0.0, %v407
  %v409 = vpop.f32.mrb[0].mxu0
  %410 = vmatprep.mubr.f32.mxu0 0.0
  %411 = vmatmul.mubr.f32.gmra.mrb[0].mxu0 %v317
  %v412 = vpop.f32.mrb[0].mxu0
  %v413 = vadd.f32 0.0, %v412
  %v414 = vpop.f32.mrb[0].mxu0
  %415 = vmatprep.mubr.f32.mxu0 0.0
  %416 = vmatmul.mubr.f32.gmra.mrb[0].mxu0 %v320
  %v417 = vpop.f32.mrb[0].mxu0
  %v418 = vadd.f32 0.0, %v417
  %v419 = vpop.f32.mrb[0].mxu0
  %420 = vmatprep.mubr.f32.mxu0 0.0
  %421 = vmatmul.mubr.f32.gmra.mrb[0].mxu0 %v323
  %v422 = vpop.f32.mrb[0].mxu0
  %v423 = vadd.f32 0.0, %v422
  %v424 = vpop.f32.mrb[0].mxu0
  %425 = vmatprep.mubr.f32.mxu0 0.0
  %426 = vmatmul.mubr.f32.gmra.mrb[0].mxu0 %v326
  %v427 = vpop.f32.mrb[0].mxu0
  %v428 = vadd.f32 0.0, %v427
  %v429 = vpop.f32.mrb[0].mxu0
  %430 = vmatprep.mubr.f32.mxu0 0.0
  %431 = vmatmul.mubr.f32.gmra.mrb[0].mxu0 %v329
  %v432 = vpop.f32.mrb[0].mxu0
  %v433 = vadd.f32 0.0, %v432
  %v434 = vpop.f32.mrb[0].mxu0
  %435 = vdwg.mxu0
  %v437 = vsel %vm306, %v36, 0
  %v440 = vsel %vm306, %v37, 0
  %v443 = vsel %vm306, %v38, 0
  %v446 = vsel %vm306, %v39, 0
  %v449 = vsel %vm306, %v40, 0
  %v452 = vsel %vm306, %v41, 0
  %v455 = vsel %vm306, %v42, 0
  %v458 = vsel %vm306, %v43, 0
  %460 = vmatprep.subr.mxu0 0.0
  %461 = vmatpush1.msra.mxu0 %v48
  %462 = vmatprep.subr.mxu0 0.0
  %463 = vmatpush1.msra.mxu0 %v49
  %464 = vmatprep.subr.mxu0 0.0
  %465 = vmatpush1.msra.mxu0 0.0
  %466 = vmatprep.subr.mxu0 0.0
  %467 = vmatpush1.msra.mxu0 0.0
  %468 = vmatprep.subr.mxu0 0.0
  %469 = vmatpush1.msra.mxu0 0.0
  %470 = vmatprep.subr.mxu0 0.0
  %471 = vmatpush1.msra.mxu0 0.0
  %472 = vmatprep.subr.mxu0 0.0
  %473 = vmatpush1.msra.mxu0 0.0
  %474 = vmatprep.subr.mxu0 0.0
  %475 = vmatpush1.msra.mxu0 0.0
  %476 = vmatprep.subr.mxu0 0.0
  %477 = vmatpush1.msra.mxu0 0.0
  %478 = vmatprep.subr.mxu0 0.0
  %479 = vmatpush1.msra.mxu0 0.0
  %480 = vmatprep.subr.mxu0 0.0
  %481 = vmatpush1.msra.mxu0 0.0
  %482 = vmatprep.subr.mxu0 0.0
  %483 = vmatpush1.msra.mxu0 0.0
  %484 = vmatprep.subr.mxu0 0.0
  %485 = vmatpush1.msra.mxu0 0.0
  %486 = vmatprep.subr.mxu0 0.0
  %487 = vmatpush1.msra.mxu0 0.0
  %488 = vmatprep.subr.mxu0 0.0
  %489 = vmatpush1.msra.mxu0 0.0
  %490 = vmatprep.subr.mxu0 0.0
  %491 = vmatpush1.msra.mxu0 0.0
  %492 = vmatprep.subr.mxu0 0.0
  %493 = vmatpush1.msra.mxu0 0.0
  %494 = vmatprep.subr.mxu0 0.0
  %495 = vmatpush1.msra.mxu0 0.0
  %496 = vmatprep.subr.mxu0 0.0
  %497 = vmatpush1.msra.mxu0 0.0
  %498 = vmatprep.subr.mxu0 0.0
  %499 = vmatpush1.msra.mxu0 0.0
  %500 = vmatprep.subr.mxu0 0.0
  %501 = vmatpush1.msra.mxu0 0.0
  %502 = vmatprep.subr.mxu0 0.0
  %503 = vmatpush1.msra.mxu0 0.0
  %504 = vmatprep.subr.mxu0 0.0
  %505 = vmatpush1.msra.mxu0 0.0
  %506 = vmatprep.subr.mxu0 0.0
  %507 = vmatpush1.msra.mxu0 0.0
  %508 = vmatprep.subr.mxu0 0.0
  %509 = vmatpush1.msra.mxu0 0.0
  %510 = vmatprep.subr.mxu0 0.0
  %511 = vmatpush1.msra.mxu0 0.0
  %512 = vmatprep.subr.mxu0 0.0
  %513 = vmatpush1.msra.mxu0 0.0
  %514 = vmatprep.subr.mxu0 0.0
  %515 = vmatpush1.msra.mxu0 0.0
  %516 = vmatprep.subr.mxu0 0.0
  %517 = vmatpush1.msra.mxu0 0.0
  %518 = vmatprep.subr.mxu0 0.0
  %519 = vmatpush1.msra.mxu0 0.0
  %520 = vmatprep.subr.mxu0 0.0
  %521 = vmatpush1.msra.mxu0 0.0
  %522 = vmatprep.subr.mxu0 0.0
  %523 = vmatpush1.msra.mxu0 0.0
  %524 = vmatprep.mubr.f32.mxu0 0.0
  %525 = vmatmul.mubr.f32.gmra.mrb[0].mxu0 %v437
  %v526 = vpop.f32.mrb[0].mxu0
  %v527 = vadd.f32 %v398, %v526
  %v528 = vpop.f32.mrb[0].mxu0
  %529 = vmatprep.mubr.f32.mxu0 0.0
  %530 = vmatmul.mubr.f32.gmra.mrb[0].mxu0 %v440
  %v531 = vpop.f32.mrb[0].mxu0
  %v532 = vadd.f32 %v403, %v531
  %v533 = vpop.f32.mrb[0].mxu0
  %534 = vmatprep.mubr.f32.mxu0 0.0
  %535 = vmatmul.mubr.f32.gmra.mrb[0].mxu0 %v443
  %v536 = vpop.f32.mrb[0].mxu0
  %v537 = vadd.f32 %v408, %v536
  %v538 = vpop.f32.mrb[0].mxu0
  %539 = vmatprep.mubr.f32.mxu0 0.0
  %540 = vmatmul.mubr.f32.gmra.mrb[0].mxu0 %v446
  %v541 = vpop.f32.mrb[0].mxu0
  %v542 = vadd.f32 %v413, %v541
  %v543 = vpop.f32.mrb[0].mxu0
  %544 = vmatprep.mubr.f32.mxu0 0.0
  %545 = vmatmul.mubr.f32.gmra.mrb[0].mxu0 %v449
  %v546 = vpop.f32.mrb[0].mxu0
  %v547 = vadd.f32 %v418, %v546
  %v548 = vpop.f32.mrb[0].mxu0
  %549 = vmatprep.mubr.f32.mxu0 0.0
  %550 = vmatmul.mubr.f32.gmra.mrb[0].mxu0 %v452
  %v551 = vpop.f32.mrb[0].mxu0
  %v552 = vadd.f32 %v423, %v551
  %v553 = vpop.f32.mrb[0].mxu0
  %554 = vmatprep.mubr.f32.mxu0 0.0
  %555 = vmatmul.mubr.f32.gmra.mrb[0].mxu0 %v455
  %v556 = vpop.f32.mrb[0].mxu0
  %v557 = vadd.f32 %v428, %v556
  %v558 = vpop.f32.mrb[0].mxu0
  %559 = vmatprep.mubr.f32.mxu0 0.0
  %560 = vmatmul.mubr.f32.gmra.mrb[0].mxu0 %v458
  %v561 = vpop.f32.mrb[0].mxu0
  %v562 = vadd.f32 %v433, %v561
  %v563 = vpop.f32.mrb[0].mxu0
  %564 = vdwg.mxu0
  %v566 = vsel %vm306, %v298, 0
  %v569 = vsel %vm306, %v299, 0
  %v572 = vsel %vm306, %v300, 0
  %v575 = vsel %vm306, %v301, 0
  %v578 = vsel %vm306, %v302, 0
  %v581 = vsel %vm306, %v303, 0
  %v584 = vsel %vm306, %v304, 0
  %v587 = vsel %vm306, %v305, 0
  %589 = vmatprep.subr.mxu0 0.0
  %590 = vmatpush1.msra.mxu0 %v52
  %591 = vmatprep.subr.mxu0 0.0
  %592 = vmatpush1.msra.mxu0 %v53
  %593 = vmatprep.subr.mxu0 0.0
  %594 = vmatpush1.msra.mxu0 0.0
  %595 = vmatprep.subr.mxu0 0.0
  %596 = vmatpush1.msra.mxu0 0.0
  %597 = vmatprep.subr.mxu0 0.0
  %598 = vmatpush1.msra.mxu0 0.0
  %599 = vmatprep.subr.mxu0 0.0
  %600 = vmatpush1.msra.mxu0 0.0
  %601 = vmatprep.subr.mxu0 0.0
  %602 = vmatpush1.msra.mxu0 0.0
  %603 = vmatprep.subr.mxu0 0.0
  %604 = vmatpush1.msra.mxu0 0.0
  %605 = vmatprep.subr.mxu0 0.0
  %606 = vmatpush1.msra.mxu0 0.0
  %607 = vmatprep.subr.mxu0 0.0
  %608 = vmatpush1.msra.mxu0 0.0
  %609 = vmatprep.subr.mxu0 0.0
  %610 = vmatpush1.msra.mxu0 0.0
  %611 = vmatprep.subr.mxu0 0.0
  %612 = vmatpush1.msra.mxu0 0.0
  %613 = vmatprep.subr.mxu0 0.0
  %614 = vmatpush1.msra.mxu0 0.0
  %615 = vmatprep.subr.mxu0 0.0
  %616 = vmatpush1.msra.mxu0 0.0
  %617 = vmatprep.subr.mxu0 0.0
  %618 = vmatpush1.msra.mxu0 0.0
  %619 = vmatprep.subr.mxu0 0.0
  %620 = vmatpush1.msra.mxu0 0.0
  %621 = vmatprep.subr.mxu0 0.0
  %622 = vmatpush1.msra.mxu0 0.0
  %623 = vmatprep.subr.mxu0 0.0
  %624 = vmatpush1.msra.mxu0 0.0
  %625 = vmatprep.subr.mxu0 0.0
  %626 = vmatpush1.msra.mxu0 0.0
  %627 = vmatprep.subr.mxu0 0.0
  %628 = vmatpush1.msra.mxu0 0.0
  %629 = vmatprep.subr.mxu0 0.0
  %630 = vmatpush1.msra.mxu0 0.0
  %631 = vmatprep.subr.mxu0 0.0
  %632 = vmatpush1.msra.mxu0 0.0
  %633 = vmatprep.subr.mxu0 0.0
  %634 = vmatpush1.msra.mxu0 0.0
  %635 = vmatprep.subr.mxu0 0.0
  %636 = vmatpush1.msra.mxu0 0.0
  %637 = vmatprep.subr.mxu0 0.0
  %638 = vmatpush1.msra.mxu0 0.0
  %639 = vmatprep.subr.mxu0 0.0
  %640 = vmatpush1.msra.mxu0 0.0
  %641 = vmatprep.subr.mxu0 0.0
  %642 = vmatpush1.msra.mxu0 0.0
  %643 = vmatprep.subr.mxu0 0.0
  %644 = vmatpush1.msra.mxu0 0.0
  %645 = vmatprep.subr.mxu0 0.0
  %646 = vmatpush1.msra.mxu0 0.0
  %647 = vmatprep.subr.mxu0 0.0
  %648 = vmatpush1.msra.mxu0 0.0
  %649 = vmatprep.subr.mxu0 0.0
  %650 = vmatpush1.msra.mxu0 0.0
  %651 = vmatprep.subr.mxu0 0.0
  %652 = vmatpush1.msra.mxu0 0.0
  %653 = vmatprep.mubr.f32.mxu0 0.0
  %654 = vmatmul.mubr.f32.gmra.mrb[0].mxu0 %v566
  %v655 = vpop.f32.mrb[0].mxu0
  %v656 = vadd.f32 0.0, %v655
  %v657 = vpop.f32.mrb[0].mxu0
  %658 = vmatprep.mubr.f32.mxu0 0.0
  %659 = vmatmul.mubr.f32.gmra.mrb[0].mxu0 %v569
  %v660 = vpop.f32.mrb[0].mxu0
  %v661 = vadd.f32 0.0, %v660
  %v662 = vpop.f32.mrb[0].mxu0
  %663 = vmatprep.mubr.f32.mxu0 0.0
  %664 = vmatmul.mubr.f32.gmra.mrb[0].mxu0 %v572
  %v665 = vpop.f32.mrb[0].mxu0
  %v666 = vadd.f32 0.0, %v665
  %v667 = vpop.f32.mrb[0].mxu0
  %668 = vmatprep.mubr.f32.mxu0 0.0
  %669 = vmatmul.mubr.f32.gmra.mrb[0].mxu0 %v575
  %v670 = vpop.f32.mrb[0].mxu0
  %v671 = vadd.f32 0.0, %v670
  %v672 = vpop.f32.mrb[0].mxu0
  %673 = vmatprep.mubr.f32.mxu0 0.0
  %674 = vmatmul.mubr.f32.gmra.mrb[0].mxu0 %v578
  %v675 = vpop.f32.mrb[0].mxu0
  %v676 = vadd.f32 0.0, %v675
  %v677 = vpop.f32.mrb[0].mxu0
  %678 = vmatprep.mubr.f32.mxu0 0.0
  %679 = vmatmul.mubr.f32.gmra.mrb[0].mxu0 %v581
  %v680 = vpop.f32.mrb[0].mxu0
  %v681 = vadd.f32 0.0, %v680
  %v682 = vpop.f32.mrb[0].mxu0
  %683 = vmatprep.mubr.f32.mxu0 0.0
  %684 = vmatmul.mubr.f32.gmra.mrb[0].mxu0 %v584
  %v685 = vpop.f32.mrb[0].mxu0
  %v686 = vadd.f32 0.0, %v685
  %v687 = vpop.f32.mrb[0].mxu0
  %688 = vmatprep.mubr.f32.mxu0 0.0
  %689 = vmatmul.mubr.f32.gmra.mrb[0].mxu0 %v587
  %v690 = vpop.f32.mrb[0].mxu0
  %v691 = vadd.f32 0.0, %v690
  %v692 = vpop.f32.mrb[0].mxu0
  %693 = vdwg.mxu0
  %v694 = vadd.f32 %v527, %v656
  %v695 = vadd.f32 %v532, %v661
  %v696 = vadd.f32 %v537, %v666
  %v697 = vadd.f32 %v542, %v671
  %v698 = vadd.f32 %v547, %v676
  %v699 = vadd.f32 %v552, %v681
  %v700 = vadd.f32 %v557, %v686
  %v701 = vadd.f32 %v562, %v691
  %v702 = vlaneseq
  %v703 = vshrl.u32 %v702, 7
  %v704 = vsub.s32 0, %v703
  %v705 = vrot.slane %v54, %v704
  %v706 = vadd.f32 %v694, %v705
  %v707 = vadd.f32 %v695, %v705
  %v708 = vadd.f32 %v696, %v705
  %v709 = vadd.f32 %v697, %v705
  %v710 = vadd.f32 %v698, %v705
  %v711 = vadd.f32 %v699, %v705
  %v712 = vadd.f32 %v700, %v705
  %v713 = vadd.f32 %v701, %v705
  %v714 = vld [vmem:[%s3 + $0x30] sm:$0xff]
  %v715 = vld [vmem:[%s3 + $0x38] sm:$0xff]
  %v716 = vld [vmem:[%s3 + $0x40] sm:$0xff]
  %v717 = vld [vmem:[%s3 + $0x48] sm:$0xff]
  %v718 = vld [vmem:[%s3 + $0x50] sm:$0xff]
  %v719 = vld [vmem:[%s3 + $0x58] sm:$0xff]
  %v720 = vld [vmem:[%s3 + $0x60] sm:$0xff]
  %v721 = vld [vmem:[%s3 + $0x68] sm:$0xff]
  %v722 = vld [vmem:[%s3 + $0x70] sm:$0xff]
  %v723 = vld [vmem:[%s3 + $0x78] sm:$0xff]
  %v724 = vld [vmem:[%s3 + $0x80] sm:$0xff]
  %v725 = vld [vmem:[%s3 + $0x88] sm:$0xff]
  %v726 = vld [vmem:[%s4 + $0x1] sm:$0x1]
  %727 = vmatprep.subr.mxu0 0.0
  %728 = vmatpush1.msra.mxu0 %v706
  %729 = vmatprep.subr.mxu0 0.0
  %730 = vmatpush1.msra.mxu0 %v707
  %731 = vmatprep.subr.mxu0 0.0
  %732 = vmatpush1.msra.mxu0 %v708
  %733 = vmatprep.subr.mxu0 0.0
  %734 = vmatpush1.msra.mxu0 %v709
  %735 = vmatprep.subr.mxu0 0.0
  %736 = vmatpush1.msra.mxu0 %v710
  %737 = vmatprep.subr.mxu0 0.0
  %738 = vmatpush1.msra.mxu0 %v711
  %739 = vmatprep.subr.mxu0 0.0
  %740 = vmatpush1.msra.mxu0 %v712
  %741 = vmatprep.subr.mxu0 0.0
  %742 = vmatpush1.msra.mxu0 %v713
  %743 = vmatprep.subr.mxu0 0.0
  %744 = vmatpush1.msra.mxu0 0.0
  %745 = vmatprep.subr.mxu0 0.0
  %746 = vmatpush1.msra.mxu0 0.0
  %747 = vmatprep.subr.mxu0 0.0
  %748 = vmatpush1.msra.mxu0 0.0
  %749 = vmatprep.subr.mxu0 0.0
  %750 = vmatpush1.msra.mxu0 0.0
  %751 = vmatprep.subr.mxu0 0.0
  %752 = vmatpush1.msra.mxu0 0.0
  %753 = vmatprep.subr.mxu0 0.0
  %754 = vmatpush1.msra.mxu0 0.0
  %755 = vmatprep.subr.mxu0 0.0
  %756 = vmatpush1.msra.mxu0 0.0
  %757 = vmatprep.subr.mxu0 0.0
  %758 = vmatpush1.msra.mxu0 0.0
  %759 = vmatprep.subr.mxu0 0.0
  %760 = vmatpush1.msra.mxu0 0.0
  %761 = vmatprep.subr.mxu0 0.0
  %762 = vmatpush1.msra.mxu0 0.0
  %763 = vmatprep.subr.mxu0 0.0
  %764 = vmatpush1.msra.mxu0 0.0
  %765 = vmatprep.subr.mxu0 0.0
  %766 = vmatpush1.msra.mxu0 0.0
  %767 = vmatprep.subr.mxu0 0.0
  %768 = vmatpush1.msra.mxu0 0.0
  %769 = vmatprep.subr.mxu0 0.0
  %770 = vmatpush1.msra.mxu0 0.0
  %771 = vmatprep.subr.mxu0 0.0
  %772 = vmatpush1.msra.mxu0 0.0
  %773 = vmatprep.subr.mxu0 0.0
  %774 = vmatpush1.msra.mxu0 0.0
  %775 = vmatprep.subr.mxu0 0.0
  %776 = vmatpush1.msra.mxu0 0.0
  %777 = vmatprep.subr.mxu0 0.0
  %778 = vmatpush1.msra.mxu0 0.0
  %779 = vmatprep.subr.mxu0 0.0
  %780 = vmatpush1.msra.mxu0 0.0
  %781 = vmatprep.subr.mxu0 0.0
  %782 = vmatpush1.msra.mxu0 0.0
  %783 = vmatprep.subr.mxu0 0.0
  %784 = vmatpush1.msra.mxu0 0.0
  %785 = vmatprep.subr.mxu0 0.0
  %786 = vmatpush1.msra.mxu0 0.0
  %787 = vmatprep.subr.mxu0 0.0
  %788 = vmatpush1.msra.mxu0 0.0
  %789 = vmatprep.subr.mxu0 0.0
  %790 = vmatpush1.msra.mxu0 0.0
  %791 = vmatprep.mubr.f32.mxu0 0.0
  %792 = vmatmul.mubr.f32.gmra.mrb[0].mxu0 %v57
  %v793 = vpop.f32.mrb[0].mxu0
  %v794 = vadd.f32 0.0, %v793
  %v795 = vpop.f32.mrb[0].mxu0
  %796 = vmatprep.mubr.f32.mxu0 0.0
  %797 = vmatmul.mubr.f32.gmra.mrb[0].mxu0 %v60
  %v798 = vpop.f32.mrb[0].mxu0
  %v799 = vadd.f32 0.0, %v798
  %v800 = vpop.f32.mrb[0].mxu0
  %801 = vmatprep.mubr.f32.mxu0 0.0
  %802 = vmatmul.mubr.f32.gmra.mrb[0].mxu0 %v63
  %v803 = vpop.f32.mrb[0].mxu0
  %v804 = vadd.f32 0.0, %v803
  %v805 = vpop.f32.mrb[0].mxu0
  %806 = vmatprep.mubr.f32.mxu0 0.0
  %807 = vmatmul.mubr.f32.gmra.mrb[0].mxu0 %v66
  %v808 = vpop.f32.mrb[0].mxu0
  %v809 = vadd.f32 0.0, %v808
  %v810 = vpop.f32.mrb[0].mxu0
  %811 = vmatprep.mubr.f32.mxu0 0.0
  %812 = vmatmul.mubr.f32.gmra.mrb[0].mxu0 %v69
  %v813 = vpop.f32.mrb[0].mxu0
  %v814 = vadd.f32 0.0, %v813
  %v815 = vpop.f32.mrb[0].mxu0
  %816 = vmatprep.mubr.f32.mxu0 0.0
  %817 = vmatmul.mubr.f32.gmra.mrb[0].mxu0 %v72
  %v818 = vpop.f32.mrb[0].mxu0
  %v819 = vadd.f32 0.0, %v818
  %v820 = vpop.f32.mrb[0].mxu0
  %821 = vmatprep.mubr.f32.mxu0 0.0
  %822 = vmatmul.mubr.f32.gmra.mrb[0].mxu0 %v75
  %v823 = vpop.f32.mrb[0].mxu0
  %v824 = vadd.f32 0.0, %v823
  %v825 = vpop.f32.mrb[0].mxu0
  %826 = vmatprep.mubr.f32.mxu0 0.0
  %827 = vmatmul.mubr.f32.gmra.mrb[0].mxu0 %v78
  %v828 = vpop.f32.mrb[0].mxu0
  %v829 = vadd.f32 0.0, %v828
  %v830 = vpop.f32.mrb[0].mxu0
  %831 = vdwg.mxu0
  %832 = vmatprep.subr.mxu0 0.0
  %833 = vmatpush1.msra.mxu0 %v794
  %834 = vmatprep.subr.mxu0 0.0
  %835 = vmatpush1.msra.mxu0 %v799
  %836 = vmatprep.subr.mxu0 0.0
  %837 = vmatpush1.msra.mxu0 %v804
  %838 = vmatprep.subr.mxu0 0.0
  %839 = vmatpush1.msra.mxu0 %v809
  %840 = vmatprep.subr.mxu0 0.0
  %841 = vmatpush1.msra.mxu0 %v814
  %842 = vmatprep.subr.mxu0 0.0
  %843 = vmatpush1.msra.mxu0 %v819
  %844 = vmatprep.subr.mxu0 0.0
  %845 = vmatpush1.msra.mxu0 %v824
  %846 = vmatprep.subr.mxu0 0.0
  %847 = vmatpush1.msra.mxu0 %v829
  %848 = vmatprep.subr.mxu0 0.0
  %849 = vmatpush1.msra.mxu0 0.0
  %850 = vmatprep.subr.mxu0 0.0
  %851 = vmatpush1.msra.mxu0 0.0
  %852 = vmatprep.subr.mxu0 0.0
  %853 = vmatpush1.msra.mxu0 0.0
  %854 = vmatprep.subr.mxu0 0.0
  %855 = vmatpush1.msra.mxu0 0.0
  %856 = vmatprep.subr.mxu0 0.0
  %857 = vmatpush1.msra.mxu0 0.0
  %858 = vmatprep.subr.mxu0 0.0
  %859 = vmatpush1.msra.mxu0 0.0
  %860 = vmatprep.subr.mxu0 0.0
  %861 = vmatpush1.msra.mxu0 0.0
  %862 = vmatprep.subr.mxu0 0.0
  %863 = vmatpush1.msra.mxu0 0.0
  %864 = vmatprep.subr.mxu0 0.0
  %865 = vmatpush1.msra.mxu0 0.0
  %866 = vmatprep.subr.mxu0 0.0
  %867 = vmatpush1.msra.mxu0 0.0
  %868 = vmatprep.subr.mxu0 0.0
  %869 = vmatpush1.msra.mxu0 0.0
  %870 = vmatprep.subr.mxu0 0.0
  %871 = vmatpush1.msra.mxu0 0.0
  %872 = vmatprep.subr.mxu0 0.0
  %873 = vmatpush1.msra.mxu0 0.0
  %874 = vmatprep.subr.mxu0 0.0
  %875 = vmatpush1.msra.mxu0 0.0
  %876 = vmatprep.subr.mxu0 0.0
  %877 = vmatpush1.msra.mxu0 0.0
  %878 = vmatprep.subr.mxu0 0.0
  %879 = vmatpush1.msra.mxu0 0.0
  %880 = vmatprep.subr.mxu0 0.0
  %881 = vmatpush1.msra.mxu0 0.0
  %882 = vmatprep.subr.mxu0 0.0
  %883 = vmatpush1.msra.mxu0 0.0
  %884 = vmatprep.subr.mxu0 0.0
  %885 = vmatpush1.msra.mxu0 0.0
  %886 = vmatprep.subr.mxu0 0.0
  %887 = vmatpush1.msra.mxu0 0.0
  %888 = vmatprep.subr.mxu0 0.0
  %889 = vmatpush1.msra.mxu0 0.0
  %890 = vmatprep.subr.mxu0 0.0
  %891 = vmatpush1.msra.mxu0 0.0
  %892 = vmatprep.subr.mxu0 0.0
  %893 = vmatpush1.msra.mxu0 0.0
  %894 = vmatprep.subr.mxu0 0.0
  %895 = vmatpush1.msra.mxu0 0.0
  %896 = vmatprep.mubr.f32.mxu0 0.0
  %897 = vmatmul.mubr.f32.gmra.mrb[0].mxu0 %v57
  %v898 = vpop.f32.mrb[0].mxu0
  %v899 = vadd.f32 0.0, %v898
  %v900 = vpop.f32.mrb[0].mxu0
  %901 = vmatprep.mubr.f32.mxu0 0.0
  %902 = vmatmul.mubr.f32.gmra.mrb[0].mxu0 %v60
  %v903 = vpop.f32.mrb[0].mxu0
  %v904 = vadd.f32 0.0, %v903
  %v905 = vpop.f32.mrb[0].mxu0
  %906 = vmatprep.mubr.f32.mxu0 0.0
  %907 = vmatmul.mubr.f32.gmra.mrb[0].mxu0 %v63
  %v908 = vpop.f32.mrb[0].mxu0
  %v909 = vadd.f32 0.0, %v908
  %v910 = vpop.f32.mrb[0].mxu0
  %911 = vmatprep.mubr.f32.mxu0 0.0
  %912 = vmatmul.mubr.f32.gmra.mrb[0].mxu0 %v66
  %v913 = vpop.f32.mrb[0].mxu0
  %v914 = vadd.f32 0.0, %v913
  %v915 = vpop.f32.mrb[0].mxu0
  %916 = vmatprep.mubr.f32.mxu0 0.0
  %917 = vmatmul.mubr.f32.gmra.mrb[0].mxu0 %v69
  %v918 = vpop.f32.mrb[0].mxu0
  %v919 = vadd.f32 0.0, %v918
  %v920 = vpop.f32.mrb[0].mxu0
  %921 = vmatprep.mubr.f32.mxu0 0.0
  %922 = vmatmul.mubr.f32.gmra.mrb[0].mxu0 %v72
  %v923 = vpop.f32.mrb[0].mxu0
  %v924 = vadd.f32 0.0, %v923
  %v925 = vpop.f32.mrb[0].mxu0
  %926 = vmatprep.mubr.f32.mxu0 0.0
  %927 = vmatmul.mubr.f32.gmra.mrb[0].mxu0 %v75
  %v928 = vpop.f32.mrb[0].mxu0
  %v929 = vadd.f32 0.0, %v928
  %v930 = vpop.f32.mrb[0].mxu0
  %931 = vmatprep.mubr.f32.mxu0 0.0
  %932 = vmatmul.mubr.f32.gmra.mrb[0].mxu0 %v78
  %v933 = vpop.f32.mrb[0].mxu0
  %v934 = vadd.f32 0.0, %v933
  %v935 = vpop.f32.mrb[0].mxu0
  %936 = vdwg.mxu0
  %v937 = vmul.f32 %v899, 2.0
  %v938 = vmul.f32 %v904, 2.0
  %v939 = vmul.f32 %v909, 2.0
  %v940 = vmul.f32 %v914, 2.0
  %v941 = vmul.f32 %v919, 2.0
  %v942 = vmul.f32 %v924, 2.0
  %v943 = vmul.f32 %v929, 2.0
  %v944 = vmul.f32 %v934, 2.0
  %v945 = vsub.f32 %v937, %v706
  %v946 = vsub.f32 %v938, %v707
  %v947 = vsub.f32 %v939, %v708
  %v948 = vsub.f32 %v940, %v709
  %v949 = vsub.f32 %v941, %v710
  %v950 = vsub.f32 %v942, %v711
  %v951 = vsub.f32 %v943, %v712
  %v952 = vsub.f32 %v944, %v713
  %vm953 = vcmask 261120
  %v955 = vsel %vm953, %v794, 0
  %v958 = vsel %vm953, %v799, 0
  %v961 = vsel %vm953, %v804, 0
  %v964 = vsel %vm953, %v809, 0
  %v967 = vsel %vm953, %v814, 0
  %v970 = vsel %vm953, %v819, 0
  %v973 = vsel %vm953, %v824, 0
  %v976 = vsel %vm953, %v829, 0
  %978 = vmatprep.subr.mxu0 0.0
  %979 = vmatpush1.msra.mxu0 %v718
  %980 = vmatprep.subr.mxu0 0.0
  %981 = vmatpush1.msra.mxu0 %v719
  %982 = vmatprep.subr.mxu0 0.0
  %983 = vmatpush1.msra.mxu0 %v720
  %984 = vmatprep.subr.mxu0 0.0
  %985 = vmatpush1.msra.mxu0 %v721
  %986 = vmatprep.subr.mxu0 0.0
  %987 = vmatpush1.msra.mxu0 0.0
  %988 = vmatprep.subr.mxu0 0.0
  %989 = vmatpush1.msra.mxu0 0.0
  %990 = vmatprep.subr.mxu0 0.0
  %991 = vmatpush1.msra.mxu0 0.0
  %992 = vmatprep.subr.mxu0 0.0
  %993 = vmatpush1.msra.mxu0 0.0
  %994 = vmatprep.subr.mxu0 0.0
  %995 = vmatpush1.msra.mxu0 0.0
  %996 = vmatprep.subr.mxu0 0.0
  %997 = vmatpush1.msra.mxu0 0.0
  %998 = vmatprep.subr.mxu0 0.0
  %999 = vmatpush1.msra.mxu0 0.0
  %1000 = vmatprep.subr.mxu0 0.0
  %1001 = vmatpush1.msra.mxu0 0.0
  %1002 = vmatprep.subr.mxu0 0.0
  %1003 = vmatpush1.msra.mxu0 0.0
  %1004 = vmatprep.subr.mxu0 0.0
  %1005 = vmatpush1.msra.mxu0 0.0
  %1006 = vmatprep.subr.mxu0 0.0
  %1007 = vmatpush1.msra.mxu0 0.0
  %1008 = vmatprep.subr.mxu0 0.0
  %1009 = vmatpush1.msra.mxu0 0.0
  %1010 = vmatprep.subr.mxu0 0.0
  %1011 = vmatpush1.msra.mxu0 0.0
  %1012 = vmatprep.subr.mxu0 0.0
  %1013 = vmatpush1.msra.mxu0 0.0
  %1014 = vmatprep.subr.mxu0 0.0
  %1015 = vmatpush1.msra.mxu0 0.0
  %1016 = vmatprep.subr.mxu0 0.0
  %1017 = vmatpush1.msra.mxu0 0.0
  %1018 = vmatprep.subr.mxu0 0.0
  %1019 = vmatpush1.msra.mxu0 0.0
  %1020 = vmatprep.subr.mxu0 0.0
  %1021 = vmatpush1.msra.mxu0 0.0
  %1022 = vmatprep.subr.mxu0 0.0
  %1023 = vmatpush1.msra.mxu0 0.0
  %1024 = vmatprep.subr.mxu0 0.0
  %1025 = vmatpush1.msra.mxu0 0.0
  %1026 = vmatprep.subr.mxu0 0.0
  %1027 = vmatpush1.msra.mxu0 0.0
  %1028 = vmatprep.subr.mxu0 0.0
  %1029 = vmatpush1.msra.mxu0 0.0
  %1030 = vmatprep.subr.mxu0 0.0
  %1031 = vmatpush1.msra.mxu0 0.0
  %1032 = vmatprep.subr.mxu0 0.0
  %1033 = vmatpush1.msra.mxu0 0.0
  %1034 = vmatprep.subr.mxu0 0.0
  %1035 = vmatpush1.msra.mxu0 0.0
  %1036 = vmatprep.subr.mxu0 0.0
  %1037 = vmatpush1.msra.mxu0 0.0
  %1038 = vmatprep.subr.mxu0 0.0
  %1039 = vmatpush1.msra.mxu0 0.0
  %1040 = vmatprep.subr.mxu0 0.0
  %1041 = vmatpush1.msra.mxu0 0.0
  %1042 = vmatprep.mubr.f32.mxu0 0.0
  %1043 = vmatmul.mubr.f32.gmra.mrb[0].mxu0 %v955
  %v1044 = vpop.f32.mrb[0].mxu0
  %v1045 = vadd.f32 0.0, %v1044
  %v1046 = vpop.f32.mrb[0].mxu0
  %1047 = vmatprep.mubr.f32.mxu0 0.0
  %1048 = vmatmul.mubr.f32.gmra.mrb[0].mxu0 %v958
  %v1049 = vpop.f32.mrb[0].mxu0
  %v1050 = vadd.f32 0.0, %v1049
  %v1051 = vpop.f32.mrb[0].mxu0
  %1052 = vmatprep.mubr.f32.mxu0 0.0
  %1053 = vmatmul.mubr.f32.gmra.mrb[0].mxu0 %v961
  %v1054 = vpop.f32.mrb[0].mxu0
  %v1055 = vadd.f32 0.0, %v1054
  %v1056 = vpop.f32.mrb[0].mxu0
  %1057 = vmatprep.mubr.f32.mxu0 0.0
  %1058 = vmatmul.mubr.f32.gmra.mrb[0].mxu0 %v964
  %v1059 = vpop.f32.mrb[0].mxu0
  %v1060 = vadd.f32 0.0, %v1059
  %v1061 = vpop.f32.mrb[0].mxu0
  %1062 = vmatprep.mubr.f32.mxu0 0.0
  %1063 = vmatmul.mubr.f32.gmra.mrb[0].mxu0 %v967
  %v1064 = vpop.f32.mrb[0].mxu0
  %v1065 = vadd.f32 0.0, %v1064
  %v1066 = vpop.f32.mrb[0].mxu0
  %1067 = vmatprep.mubr.f32.mxu0 0.0
  %1068 = vmatmul.mubr.f32.gmra.mrb[0].mxu0 %v970
  %v1069 = vpop.f32.mrb[0].mxu0
  %v1070 = vadd.f32 0.0, %v1069
  %v1071 = vpop.f32.mrb[0].mxu0
  %1072 = vmatprep.mubr.f32.mxu0 0.0
  %1073 = vmatmul.mubr.f32.gmra.mrb[0].mxu0 %v973
  %v1074 = vpop.f32.mrb[0].mxu0
  %v1075 = vadd.f32 0.0, %v1074
  %v1076 = vpop.f32.mrb[0].mxu0
  %1077 = vmatprep.mubr.f32.mxu0 0.0
  %1078 = vmatmul.mubr.f32.gmra.mrb[0].mxu0 %v976
  %v1079 = vpop.f32.mrb[0].mxu0
  %v1080 = vadd.f32 0.0, %v1079
  %v1081 = vpop.f32.mrb[0].mxu0
  %1082 = vdwg.mxu0
  %v1084 = vsel %vm953, %v706, 0
  %v1087 = vsel %vm953, %v707, 0
  %v1090 = vsel %vm953, %v708, 0
  %v1093 = vsel %vm953, %v709, 0
  %v1096 = vsel %vm953, %v710, 0
  %v1099 = vsel %vm953, %v711, 0
  %v1102 = vsel %vm953, %v712, 0
  %v1105 = vsel %vm953, %v713, 0
  %1107 = vmatprep.subr.mxu0 0.0
  %1108 = vmatpush1.msra.mxu0 %v714
  %1109 = vmatprep.subr.mxu0 0.0
  %1110 = vmatpush1.msra.mxu0 %v715
  %1111 = vmatprep.subr.mxu0 0.0
  %1112 = vmatpush1.msra.mxu0 %v716
  %1113 = vmatprep.subr.mxu0 0.0
  %1114 = vmatpush1.msra.mxu0 %v717
  %1115 = vmatprep.subr.mxu0 0.0
  %1116 = vmatpush1.msra.mxu0 0.0
  %1117 = vmatprep.subr.mxu0 0.0
  %1118 = vmatpush1.msra.mxu0 0.0
  %1119 = vmatprep.subr.mxu0 0.0
  %1120 = vmatpush1.msra.mxu0 0.0
  %1121 = vmatprep.subr.mxu0 0.0
  %1122 = vmatpush1.msra.mxu0 0.0
  %1123 = vmatprep.subr.mxu0 0.0
  %1124 = vmatpush1.msra.mxu0 0.0
  %1125 = vmatprep.subr.mxu0 0.0
  %1126 = vmatpush1.msra.mxu0 0.0
  %1127 = vmatprep.subr.mxu0 0.0
  %1128 = vmatpush1.msra.mxu0 0.0
  %1129 = vmatprep.subr.mxu0 0.0
  %1130 = vmatpush1.msra.mxu0 0.0
  %1131 = vmatprep.subr.mxu0 0.0
  %1132 = vmatpush1.msra.mxu0 0.0
  %1133 = vmatprep.subr.mxu0 0.0
  %1134 = vmatpush1.msra.mxu0 0.0
  %1135 = vmatprep.subr.mxu0 0.0
  %1136 = vmatpush1.msra.mxu0 0.0
  %1137 = vmatprep.subr.mxu0 0.0
  %1138 = vmatpush1.msra.mxu0 0.0
  %1139 = vmatprep.subr.mxu0 0.0
  %1140 = vmatpush1.msra.mxu0 0.0
  %1141 = vmatprep.subr.mxu0 0.0
  %1142 = vmatpush1.msra.mxu0 0.0
  %1143 = vmatprep.subr.mxu0 0.0
  %1144 = vmatpush1.msra.mxu0 0.0
  %1145 = vmatprep.subr.mxu0 0.0
  %1146 = vmatpush1.msra.mxu0 0.0
  %1147 = vmatprep.subr.mxu0 0.0
  %1148 = vmatpush1.msra.mxu0 0.0
  %1149 = vmatprep.subr.mxu0 0.0
  %1150 = vmatpush1.msra.mxu0 0.0
  %1151 = vmatprep.subr.mxu0 0.0
  %1152 = vmatpush1.msra.mxu0 0.0
  %1153 = vmatprep.subr.mxu0 0.0
  %1154 = vmatpush1.msra.mxu0 0.0
  %1155 = vmatprep.subr.mxu0 0.0
  %1156 = vmatpush1.msra.mxu0 0.0
  %1157 = vmatprep.subr.mxu0 0.0
  %1158 = vmatpush1.msra.mxu0 0.0
  %1159 = vmatprep.subr.mxu0 0.0
  %1160 = vmatpush1.msra.mxu0 0.0
  %1161 = vmatprep.subr.mxu0 0.0
  %1162 = vmatpush1.msra.mxu0 0.0
  %1163 = vmatprep.subr.mxu0 0.0
  %1164 = vmatpush1.msra.mxu0 0.0
  %1165 = vmatprep.subr.mxu0 0.0
  %1166 = vmatpush1.msra.mxu0 0.0
  %1167 = vmatprep.subr.mxu0 0.0
  %1168 = vmatpush1.msra.mxu0 0.0
  %1169 = vmatprep.subr.mxu0 0.0
  %1170 = vmatpush1.msra.mxu0 0.0
  %1171 = vmatprep.mubr.f32.mxu0 0.0
  %1172 = vmatmul.mubr.f32.gmra.mrb[0].mxu0 %v1084
  %v1173 = vpop.f32.mrb[0].mxu0
  %v1174 = vadd.f32 %v1045, %v1173
  %v1175 = vpop.f32.mrb[0].mxu0
  %1176 = vmatprep.mubr.f32.mxu0 0.0
  %1177 = vmatmul.mubr.f32.gmra.mrb[0].mxu0 %v1087
  %v1178 = vpop.f32.mrb[0].mxu0
  %v1179 = vadd.f32 %v1050, %v1178
  %v1180 = vpop.f32.mrb[0].mxu0
  %1181 = vmatprep.mubr.f32.mxu0 0.0
  %1182 = vmatmul.mubr.f32.gmra.mrb[0].mxu0 %v1090
  %v1183 = vpop.f32.mrb[0].mxu0
  %v1184 = vadd.f32 %v1055, %v1183
  %v1185 = vpop.f32.mrb[0].mxu0
  %1186 = vmatprep.mubr.f32.mxu0 0.0
  %1187 = vmatmul.mubr.f32.gmra.mrb[0].mxu0 %v1093
  %v1188 = vpop.f32.mrb[0].mxu0
  %v1189 = vadd.f32 %v1060, %v1188
  %v1190 = vpop.f32.mrb[0].mxu0
  %1191 = vmatprep.mubr.f32.mxu0 0.0
  %1192 = vmatmul.mubr.f32.gmra.mrb[0].mxu0 %v1096
  %v1193 = vpop.f32.mrb[0].mxu0
  %v1194 = vadd.f32 %v1065, %v1193
  %v1195 = vpop.f32.mrb[0].mxu0
  %1196 = vmatprep.mubr.f32.mxu0 0.0
  %1197 = vmatmul.mubr.f32.gmra.mrb[0].mxu0 %v1099
  %v1198 = vpop.f32.mrb[0].mxu0
  %v1199 = vadd.f32 %v1070, %v1198
  %v1200 = vpop.f32.mrb[0].mxu0
  %1201 = vmatprep.mubr.f32.mxu0 0.0
  %1202 = vmatmul.mubr.f32.gmra.mrb[0].mxu0 %v1102
  %v1203 = vpop.f32.mrb[0].mxu0
  %v1204 = vadd.f32 %v1075, %v1203
  %v1205 = vpop.f32.mrb[0].mxu0
  %1206 = vmatprep.mubr.f32.mxu0 0.0
  %1207 = vmatmul.mubr.f32.gmra.mrb[0].mxu0 %v1105
  %v1208 = vpop.f32.mrb[0].mxu0
  %v1209 = vadd.f32 %v1080, %v1208
  %v1210 = vpop.f32.mrb[0].mxu0
  %1211 = vdwg.mxu0
  %v1213 = vsel %vm953, %v945, 0
  %v1216 = vsel %vm953, %v946, 0
  %v1219 = vsel %vm953, %v947, 0
  %v1222 = vsel %vm953, %v948, 0
  %v1225 = vsel %vm953, %v949, 0
  %v1228 = vsel %vm953, %v950, 0
  %v1231 = vsel %vm953, %v951, 0
  %v1234 = vsel %vm953, %v952, 0
  %1236 = vmatprep.subr.mxu0 0.0
  %1237 = vmatpush1.msra.mxu0 %v722
  %1238 = vmatprep.subr.mxu0 0.0
  %1239 = vmatpush1.msra.mxu0 %v723
  %1240 = vmatprep.subr.mxu0 0.0
  %1241 = vmatpush1.msra.mxu0 %v724
  %1242 = vmatprep.subr.mxu0 0.0
  %1243 = vmatpush1.msra.mxu0 %v725
  %1244 = vmatprep.subr.mxu0 0.0
  %1245 = vmatpush1.msra.mxu0 0.0
  %1246 = vmatprep.subr.mxu0 0.0
  %1247 = vmatpush1.msra.mxu0 0.0
  %1248 = vmatprep.subr.mxu0 0.0
  %1249 = vmatpush1.msra.mxu0 0.0
  %1250 = vmatprep.subr.mxu0 0.0
  %1251 = vmatpush1.msra.mxu0 0.0
  %1252 = vmatprep.subr.mxu0 0.0
  %1253 = vmatpush1.msra.mxu0 0.0
  %1254 = vmatprep.subr.mxu0 0.0
  %1255 = vmatpush1.msra.mxu0 0.0
  %1256 = vmatprep.subr.mxu0 0.0
  %1257 = vmatpush1.msra.mxu0 0.0
  %1258 = vmatprep.subr.mxu0 0.0
  %1259 = vmatpush1.msra.mxu0 0.0
  %1260 = vmatprep.subr.mxu0 0.0
  %1261 = vmatpush1.msra.mxu0 0.0
  %1262 = vmatprep.subr.mxu0 0.0
  %1263 = vmatpush1.msra.mxu0 0.0
  %1264 = vmatprep.subr.mxu0 0.0
  %1265 = vmatpush1.msra.mxu0 0.0
  %1266 = vmatprep.subr.mxu0 0.0
  %1267 = vmatpush1.msra.mxu0 0.0
  %1268 = vmatprep.subr.mxu0 0.0
  %1269 = vmatpush1.msra.mxu0 0.0
  %1270 = vmatprep.subr.mxu0 0.0
  %1271 = vmatpush1.msra.mxu0 0.0
  %1272 = vmatprep.subr.mxu0 0.0
  %1273 = vmatpush1.msra.mxu0 0.0
  %1274 = vmatprep.subr.mxu0 0.0
  %1275 = vmatpush1.msra.mxu0 0.0
  %1276 = vmatprep.subr.mxu0 0.0
  %1277 = vmatpush1.msra.mxu0 0.0
  %1278 = vmatprep.subr.mxu0 0.0
  %1279 = vmatpush1.msra.mxu0 0.0
  %1280 = vmatprep.subr.mxu0 0.0
  %1281 = vmatpush1.msra.mxu0 0.0
  %1282 = vmatprep.subr.mxu0 0.0
  %1283 = vmatpush1.msra.mxu0 0.0
  %1284 = vmatprep.subr.mxu0 0.0
  %1285 = vmatpush1.msra.mxu0 0.0
  %1286 = vmatprep.subr.mxu0 0.0
  %1287 = vmatpush1.msra.mxu0 0.0
  %1288 = vmatprep.subr.mxu0 0.0
  %1289 = vmatpush1.msra.mxu0 0.0
  %1290 = vmatprep.subr.mxu0 0.0
  %1291 = vmatpush1.msra.mxu0 0.0
  %1292 = vmatprep.subr.mxu0 0.0
  %1293 = vmatpush1.msra.mxu0 0.0
  %1294 = vmatprep.subr.mxu0 0.0
  %1295 = vmatpush1.msra.mxu0 0.0
  %1296 = vmatprep.subr.mxu0 0.0
  %1297 = vmatpush1.msra.mxu0 0.0
  %1298 = vmatprep.subr.mxu0 0.0
  %1299 = vmatpush1.msra.mxu0 0.0
  %1300 = vmatprep.mubr.f32.mxu0 0.0
  %1301 = vmatmul.mubr.f32.gmra.mrb[0].mxu0 %v1213
  %v1302 = vpop.f32.mrb[0].mxu0
  %v1303 = vadd.f32 0.0, %v1302
  %v1304 = vpop.f32.mrb[0].mxu0
  %1305 = vmatprep.mubr.f32.mxu0 0.0
  %1306 = vmatmul.mubr.f32.gmra.mrb[0].mxu0 %v1216
  %v1307 = vpop.f32.mrb[0].mxu0
  %v1308 = vadd.f32 0.0, %v1307
  %v1309 = vpop.f32.mrb[0].mxu0
  %1310 = vmatprep.mubr.f32.mxu0 0.0
  %1311 = vmatmul.mubr.f32.gmra.mrb[0].mxu0 %v1219
  %v1312 = vpop.f32.mrb[0].mxu0
  %v1313 = vadd.f32 0.0, %v1312
  %v1314 = vpop.f32.mrb[0].mxu0
  %1315 = vmatprep.mubr.f32.mxu0 0.0
  %1316 = vmatmul.mubr.f32.gmra.mrb[0].mxu0 %v1222
  %v1317 = vpop.f32.mrb[0].mxu0
  %v1318 = vadd.f32 0.0, %v1317
  %v1319 = vpop.f32.mrb[0].mxu0
  %1320 = vmatprep.mubr.f32.mxu0 0.0
  %1321 = vmatmul.mubr.f32.gmra.mrb[0].mxu0 %v1225
  %v1322 = vpop.f32.mrb[0].mxu0
  %v1323 = vadd.f32 0.0, %v1322
  %v1324 = vpop.f32.mrb[0].mxu0
  %1325 = vmatprep.mubr.f32.mxu0 0.0
  %1326 = vmatmul.mubr.f32.gmra.mrb[0].mxu0 %v1228
  %v1327 = vpop.f32.mrb[0].mxu0
  %v1328 = vadd.f32 0.0, %v1327
  %v1329 = vpop.f32.mrb[0].mxu0
  %1330 = vmatprep.mubr.f32.mxu0 0.0
  %1331 = vmatmul.mubr.f32.gmra.mrb[0].mxu0 %v1231
  %v1332 = vpop.f32.mrb[0].mxu0
  %v1333 = vadd.f32 0.0, %v1332
  %v1334 = vpop.f32.mrb[0].mxu0
  %1335 = vmatprep.mubr.f32.mxu0 0.0
  %1336 = vmatmul.mubr.f32.gmra.mrb[0].mxu0 %v1234
  %v1337 = vpop.f32.mrb[0].mxu0
  %v1338 = vadd.f32 0.0, %v1337
  %v1339 = vpop.f32.mrb[0].mxu0
  %1340 = vdwg.mxu0
  %v1341 = vadd.f32 %v1174, %v1303
  %v1342 = vadd.f32 %v1179, %v1308
  %v1343 = vadd.f32 %v1184, %v1313
  %v1344 = vadd.f32 %v1189, %v1318
  %v1345 = vadd.f32 %v1194, %v1323
  %v1346 = vadd.f32 %v1199, %v1328
  %v1347 = vadd.f32 %v1204, %v1333
  %v1348 = vadd.f32 %v1209, %v1338
  %v1349 = vlaneseq
  %v1350 = vshrl.u32 %v1349, 7
  %v1351 = vsub.s32 0, %v1350
  %v1352 = vrot.slane %v726, %v1351
  %v1353 = vadd.f32 %v1341, %v1352
  %v1354 = vadd.f32 %v1342, %v1352
  %v1355 = vadd.f32 %v1343, %v1352
  %v1356 = vadd.f32 %v1344, %v1352
  %v1357 = vadd.f32 %v1345, %v1352
  %v1358 = vadd.f32 %v1346, %v1352
  %v1359 = vadd.f32 %v1347, %v1352
  %v1360 = vadd.f32 %v1348, %v1352
  %v1361 = vld [vmem:[%s3 + $0x90] sm:$0xff]
  %v1362 = vld [vmem:[%s3 + $0x98] sm:$0xff]
  %v1363 = vld [vmem:[%s3 + $0xa0] sm:$0xff]
  %v1364 = vld [vmem:[%s3 + $0xa8] sm:$0xff]
  %v1365 = vld [vmem:[%s3 + $0xb0] sm:$0xff]
  %v1366 = vld [vmem:[%s3 + $0xb8] sm:$0xff]
  %v1367 = vld [vmem:[%s4 + $0x2] sm:$0x1]
  %1368 = vmatprep.subr.mxu0 0.0
  %1369 = vmatpush1.msra.mxu0 %v1353
  %1370 = vmatprep.subr.mxu0 0.0
  %1371 = vmatpush1.msra.mxu0 %v1354
  %1372 = vmatprep.subr.mxu0 0.0
  %1373 = vmatpush1.msra.mxu0 %v1355
  %1374 = vmatprep.subr.mxu0 0.0
  %1375 = vmatpush1.msra.mxu0 %v1356
  %1376 = vmatprep.subr.mxu0 0.0
  %1377 = vmatpush1.msra.mxu0 %v1357
  %1378 = vmatprep.subr.mxu0 0.0
  %1379 = vmatpush1.msra.mxu0 %v1358
  %1380 = vmatprep.subr.mxu0 0.0
  %1381 = vmatpush1.msra.mxu0 %v1359
  %1382 = vmatprep.subr.mxu0 0.0
  %1383 = vmatpush1.msra.mxu0 %v1360
  %1384 = vmatprep.subr.mxu0 0.0
  %1385 = vmatpush1.msra.mxu0 0.0
  %1386 = vmatprep.subr.mxu0 0.0
  %1387 = vmatpush1.msra.mxu0 0.0
  %1388 = vmatprep.subr.mxu0 0.0
  %1389 = vmatpush1.msra.mxu0 0.0
  %1390 = vmatprep.subr.mxu0 0.0
  %1391 = vmatpush1.msra.mxu0 0.0
  %1392 = vmatprep.subr.mxu0 0.0
  %1393 = vmatpush1.msra.mxu0 0.0
  %1394 = vmatprep.subr.mxu0 0.0
  %1395 = vmatpush1.msra.mxu0 0.0
  %1396 = vmatprep.subr.mxu0 0.0
  %1397 = vmatpush1.msra.mxu0 0.0
  %1398 = vmatprep.subr.mxu0 0.0
  %1399 = vmatpush1.msra.mxu0 0.0
  %1400 = vmatprep.subr.mxu0 0.0
  %1401 = vmatpush1.msra.mxu0 0.0
  %1402 = vmatprep.subr.mxu0 0.0
  %1403 = vmatpush1.msra.mxu0 0.0
  %1404 = vmatprep.subr.mxu0 0.0
  %1405 = vmatpush1.msra.mxu0 0.0
  %1406 = vmatprep.subr.mxu0 0.0
  %1407 = vmatpush1.msra.mxu0 0.0
  %1408 = vmatprep.subr.mxu0 0.0
  %1409 = vmatpush1.msra.mxu0 0.0
  %1410 = vmatprep.subr.mxu0 0.0
  %1411 = vmatpush1.msra.mxu0 0.0
  %1412 = vmatprep.subr.mxu0 0.0
  %1413 = vmatpush1.msra.mxu0 0.0
  %1414 = vmatprep.subr.mxu0 0.0
  %1415 = vmatpush1.msra.mxu0 0.0
  %1416 = vmatprep.subr.mxu0 0.0
  %1417 = vmatpush1.msra.mxu0 0.0
  %1418 = vmatprep.subr.mxu0 0.0
  %1419 = vmatpush1.msra.mxu0 0.0
  %1420 = vmatprep.subr.mxu0 0.0
  %1421 = vmatpush1.msra.mxu0 0.0
  %1422 = vmatprep.subr.mxu0 0.0
  %1423 = vmatpush1.msra.mxu0 0.0
  %1424 = vmatprep.subr.mxu0 0.0
  %1425 = vmatpush1.msra.mxu0 0.0
  %1426 = vmatprep.subr.mxu0 0.0
  %1427 = vmatpush1.msra.mxu0 0.0
  %1428 = vmatprep.subr.mxu0 0.0
  %1429 = vmatpush1.msra.mxu0 0.0
  %1430 = vmatprep.subr.mxu0 0.0
  %1431 = vmatpush1.msra.mxu0 0.0
  %1432 = vmatprep.mubr.f32.mxu0 0.0
  %1433 = vmatmul.mubr.f32.gmra.mrb[0].mxu0 %v57
  %v1434 = vpop.f32.mrb[0].mxu0
  %v1435 = vadd.f32 0.0, %v1434
  %v1436 = vpop.f32.mrb[0].mxu0
  %1437 = vmatprep.mubr.f32.mxu0 0.0
  %1438 = vmatmul.mubr.f32.gmra.mrb[0].mxu0 %v60
  %v1439 = vpop.f32.mrb[0].mxu0
  %v1440 = vadd.f32 0.0, %v1439
  %v1441 = vpop.f32.mrb[0].mxu0
  %1442 = vmatprep.mubr.f32.mxu0 0.0
  %1443 = vmatmul.mubr.f32.gmra.mrb[0].mxu0 %v63
  %v1444 = vpop.f32.mrb[0].mxu0
  %v1445 = vadd.f32 0.0, %v1444
  %v1446 = vpop.f32.mrb[0].mxu0
  %1447 = vmatprep.mubr.f32.mxu0 0.0
  %1448 = vmatmul.mubr.f32.gmra.mrb[0].mxu0 %v66
  %v1449 = vpop.f32.mrb[0].mxu0
  %v1450 = vadd.f32 0.0, %v1449
  %v1451 = vpop.f32.mrb[0].mxu0
  %1452 = vmatprep.mubr.f32.mxu0 0.0
  %1453 = vmatmul.mubr.f32.gmra.mrb[0].mxu0 %v69
  %v1454 = vpop.f32.mrb[0].mxu0
  %v1455 = vadd.f32 0.0, %v1454
  %v1456 = vpop.f32.mrb[0].mxu0
  %1457 = vmatprep.mubr.f32.mxu0 0.0
  %1458 = vmatmul.mubr.f32.gmra.mrb[0].mxu0 %v72
  %v1459 = vpop.f32.mrb[0].mxu0
  %v1460 = vadd.f32 0.0, %v1459
  %v1461 = vpop.f32.mrb[0].mxu0
  %1462 = vmatprep.mubr.f32.mxu0 0.0
  %1463 = vmatmul.mubr.f32.gmra.mrb[0].mxu0 %v75
  %v1464 = vpop.f32.mrb[0].mxu0
  %v1465 = vadd.f32 0.0, %v1464
  %v1466 = vpop.f32.mrb[0].mxu0
  %1467 = vmatprep.mubr.f32.mxu0 0.0
  %1468 = vmatmul.mubr.f32.gmra.mrb[0].mxu0 %v78
  %v1469 = vpop.f32.mrb[0].mxu0
  %v1470 = vadd.f32 0.0, %v1469
  %v1471 = vpop.f32.mrb[0].mxu0
  %1472 = vdwg.mxu0
  %1473 = vmatprep.subr.mxu0 0.0
  %1474 = vmatpush1.msra.mxu0 %v1435
  %1475 = vmatprep.subr.mxu0 0.0
  %1476 = vmatpush1.msra.mxu0 %v1440
  %1477 = vmatprep.subr.mxu0 0.0
  %1478 = vmatpush1.msra.mxu0 %v1445
  %1479 = vmatprep.subr.mxu0 0.0
  %1480 = vmatpush1.msra.mxu0 %v1450
  %1481 = vmatprep.subr.mxu0 0.0
  %1482 = vmatpush1.msra.mxu0 %v1455
  %1483 = vmatprep.subr.mxu0 0.0
  %1484 = vmatpush1.msra.mxu0 %v1460
  %1485 = vmatprep.subr.mxu0 0.0
  %1486 = vmatpush1.msra.mxu0 %v1465
  %1487 = vmatprep.subr.mxu0 0.0
  %1488 = vmatpush1.msra.mxu0 %v1470
  %1489 = vmatprep.subr.mxu0 0.0
  %1490 = vmatpush1.msra.mxu0 0.0
  %1491 = vmatprep.subr.mxu0 0.0
  %1492 = vmatpush1.msra.mxu0 0.0
  %1493 = vmatprep.subr.mxu0 0.0
  %1494 = vmatpush1.msra.mxu0 0.0
  %1495 = vmatprep.subr.mxu0 0.0
  %1496 = vmatpush1.msra.mxu0 0.0
  %1497 = vmatprep.subr.mxu0 0.0
  %1498 = vmatpush1.msra.mxu0 0.0
  %1499 = vmatprep.subr.mxu0 0.0
  %1500 = vmatpush1.msra.mxu0 0.0
  %1501 = vmatprep.subr.mxu0 0.0
  %1502 = vmatpush1.msra.mxu0 0.0
  %1503 = vmatprep.subr.mxu0 0.0
  %1504 = vmatpush1.msra.mxu0 0.0
  %1505 = vmatprep.subr.mxu0 0.0
  %1506 = vmatpush1.msra.mxu0 0.0
  %1507 = vmatprep.subr.mxu0 0.0
  %1508 = vmatpush1.msra.mxu0 0.0
  %1509 = vmatprep.subr.mxu0 0.0
  %1510 = vmatpush1.msra.mxu0 0.0
  %1511 = vmatprep.subr.mxu0 0.0
  %1512 = vmatpush1.msra.mxu0 0.0
  %1513 = vmatprep.subr.mxu0 0.0
  %1514 = vmatpush1.msra.mxu0 0.0
  %1515 = vmatprep.subr.mxu0 0.0
  %1516 = vmatpush1.msra.mxu0 0.0
  %1517 = vmatprep.subr.mxu0 0.0
  %1518 = vmatpush1.msra.mxu0 0.0
  %1519 = vmatprep.subr.mxu0 0.0
  %1520 = vmatpush1.msra.mxu0 0.0
  %1521 = vmatprep.subr.mxu0 0.0
  %1522 = vmatpush1.msra.mxu0 0.0
  %1523 = vmatprep.subr.mxu0 0.0
  %1524 = vmatpush1.msra.mxu0 0.0
  %1525 = vmatprep.subr.mxu0 0.0
  %1526 = vmatpush1.msra.mxu0 0.0
  %1527 = vmatprep.subr.mxu0 0.0
  %1528 = vmatpush1.msra.mxu0 0.0
  %1529 = vmatprep.subr.mxu0 0.0
  %1530 = vmatpush1.msra.mxu0 0.0
  %1531 = vmatprep.subr.mxu0 0.0
  %1532 = vmatpush1.msra.mxu0 0.0
  %1533 = vmatprep.subr.mxu0 0.0
  %1534 = vmatpush1.msra.mxu0 0.0
  %1535 = vmatprep.subr.mxu0 0.0
  %1536 = vmatpush1.msra.mxu0 0.0
  %1537 = vmatprep.mubr.f32.mxu0 0.0
  %1538 = vmatmul.mubr.f32.gmra.mrb[0].mxu0 %v57
  %v1539 = vpop.f32.mrb[0].mxu0
  %v1540 = vadd.f32 0.0, %v1539
  %v1541 = vpop.f32.mrb[0].mxu0
  %1542 = vmatprep.mubr.f32.mxu0 0.0
  %1543 = vmatmul.mubr.f32.gmra.mrb[0].mxu0 %v60
  %v1544 = vpop.f32.mrb[0].mxu0
  %v1545 = vadd.f32 0.0, %v1544
  %v1546 = vpop.f32.mrb[0].mxu0
  %1547 = vmatprep.mubr.f32.mxu0 0.0
  %1548 = vmatmul.mubr.f32.gmra.mrb[0].mxu0 %v63
  %v1549 = vpop.f32.mrb[0].mxu0
  %v1550 = vadd.f32 0.0, %v1549
  %v1551 = vpop.f32.mrb[0].mxu0
  %1552 = vmatprep.mubr.f32.mxu0 0.0
  %1553 = vmatmul.mubr.f32.gmra.mrb[0].mxu0 %v66
  %v1554 = vpop.f32.mrb[0].mxu0
  %v1555 = vadd.f32 0.0, %v1554
  %v1556 = vpop.f32.mrb[0].mxu0
  %1557 = vmatprep.mubr.f32.mxu0 0.0
  %1558 = vmatmul.mubr.f32.gmra.mrb[0].mxu0 %v69
  %v1559 = vpop.f32.mrb[0].mxu0
  %v1560 = vadd.f32 0.0, %v1559
  %v1561 = vpop.f32.mrb[0].mxu0
  %1562 = vmatprep.mubr.f32.mxu0 0.0
  %1563 = vmatmul.mubr.f32.gmra.mrb[0].mxu0 %v72
  %v1564 = vpop.f32.mrb[0].mxu0
  %v1565 = vadd.f32 0.0, %v1564
  %v1566 = vpop.f32.mrb[0].mxu0
  %1567 = vmatprep.mubr.f32.mxu0 0.0
  %1568 = vmatmul.mubr.f32.gmra.mrb[0].mxu0 %v75
  %v1569 = vpop.f32.mrb[0].mxu0
  %v1570 = vadd.f32 0.0, %v1569
  %v1571 = vpop.f32.mrb[0].mxu0
  %1572 = vmatprep.mubr.f32.mxu0 0.0
  %1573 = vmatmul.mubr.f32.gmra.mrb[0].mxu0 %v78
  %v1574 = vpop.f32.mrb[0].mxu0
  %v1575 = vadd.f32 0.0, %v1574
  %v1576 = vpop.f32.mrb[0].mxu0
  %1577 = vdwg.mxu0
  %v1578 = vmul.f32 %v1540, 2.0
  %v1579 = vmul.f32 %v1545, 2.0
  %v1580 = vmul.f32 %v1550, 2.0
  %v1581 = vmul.f32 %v1555, 2.0
  %v1582 = vmul.f32 %v1560, 2.0
  %v1583 = vmul.f32 %v1565, 2.0
  %v1584 = vmul.f32 %v1570, 2.0
  %v1585 = vmul.f32 %v1575, 2.0
  %v1586 = vsub.f32 %v1578, %v1353
  %v1587 = vsub.f32 %v1579, %v1354
  %v1588 = vsub.f32 %v1580, %v1355
  %v1589 = vsub.f32 %v1581, %v1356
  %v1590 = vsub.f32 %v1582, %v1357
  %v1591 = vsub.f32 %v1583, %v1358
  %v1592 = vsub.f32 %v1584, %v1359
  %v1593 = vsub.f32 %v1585, %v1360
  %v1595 = vsel %vm306, %v1435, 0
  %v1598 = vsel %vm306, %v1440, 0
  %v1601 = vsel %vm306, %v1445, 0
  %v1604 = vsel %vm306, %v1450, 0
  %v1607 = vsel %vm306, %v1455, 0
  %v1610 = vsel %vm306, %v1460, 0
  %v1613 = vsel %vm306, %v1465, 0
  %v1616 = vsel %vm306, %v1470, 0
  %1618 = vmatprep.subr.mxu0 0.0
  %1619 = vmatpush1.msra.mxu0 %v1363
  %1620 = vmatprep.subr.mxu0 0.0
  %1621 = vmatpush1.msra.mxu0 %v1364
  %1622 = vmatprep.subr.mxu0 0.0
  %1623 = vmatpush1.msra.mxu0 0.0
  %1624 = vmatprep.subr.mxu0 0.0
  %1625 = vmatpush1.msra.mxu0 0.0
  %1626 = vmatprep.subr.mxu0 0.0
  %1627 = vmatpush1.msra.mxu0 0.0
  %1628 = vmatprep.subr.mxu0 0.0
  %1629 = vmatpush1.msra.mxu0 0.0
  %1630 = vmatprep.subr.mxu0 0.0
  %1631 = vmatpush1.msra.mxu0 0.0
  %1632 = vmatprep.subr.mxu0 0.0
  %1633 = vmatpush1.msra.mxu0 0.0
  %1634 = vmatprep.subr.mxu0 0.0
  %1635 = vmatpush1.msra.mxu0 0.0
  %1636 = vmatprep.subr.mxu0 0.0
  %1637 = vmatpush1.msra.mxu0 0.0
  %1638 = vmatprep.subr.mxu0 0.0
  %1639 = vmatpush1.msra.mxu0 0.0
  %1640 = vmatprep.subr.mxu0 0.0
  %1641 = vmatpush1.msra.mxu0 0.0
  %1642 = vmatprep.subr.mxu0 0.0
  %1643 = vmatpush1.msra.mxu0 0.0
  %1644 = vmatprep.subr.mxu0 0.0
  %1645 = vmatpush1.msra.mxu0 0.0
  %1646 = vmatprep.subr.mxu0 0.0
  %1647 = vmatpush1.msra.mxu0 0.0
  %1648 = vmatprep.subr.mxu0 0.0
  %1649 = vmatpush1.msra.mxu0 0.0
  %1650 = vmatprep.subr.mxu0 0.0
  %1651 = vmatpush1.msra.mxu0 0.0
  %1652 = vmatprep.subr.mxu0 0.0
  %1653 = vmatpush1.msra.mxu0 0.0
  %1654 = vmatprep.subr.mxu0 0.0
  %1655 = vmatpush1.msra.mxu0 0.0
  %1656 = vmatprep.subr.mxu0 0.0
  %1657 = vmatpush1.msra.mxu0 0.0
  %1658 = vmatprep.subr.mxu0 0.0
  %1659 = vmatpush1.msra.mxu0 0.0
  %1660 = vmatprep.subr.mxu0 0.0
  %1661 = vmatpush1.msra.mxu0 0.0
  %1662 = vmatprep.subr.mxu0 0.0
  %1663 = vmatpush1.msra.mxu0 0.0
  %1664 = vmatprep.subr.mxu0 0.0
  %1665 = vmatpush1.msra.mxu0 0.0
  %1666 = vmatprep.subr.mxu0 0.0
  %1667 = vmatpush1.msra.mxu0 0.0
  %1668 = vmatprep.subr.mxu0 0.0
  %1669 = vmatpush1.msra.mxu0 0.0
  %1670 = vmatprep.subr.mxu0 0.0
  %1671 = vmatpush1.msra.mxu0 0.0
  %1672 = vmatprep.subr.mxu0 0.0
  %1673 = vmatpush1.msra.mxu0 0.0
  %1674 = vmatprep.subr.mxu0 0.0
  %1675 = vmatpush1.msra.mxu0 0.0
  %1676 = vmatprep.subr.mxu0 0.0
  %1677 = vmatpush1.msra.mxu0 0.0
  %1678 = vmatprep.subr.mxu0 0.0
  %1679 = vmatpush1.msra.mxu0 0.0
  %1680 = vmatprep.subr.mxu0 0.0
  %1681 = vmatpush1.msra.mxu0 0.0
  %1682 = vmatprep.mubr.f32.mxu0 0.0
  %1683 = vmatmul.mubr.f32.gmra.mrb[0].mxu0 %v1595
  %v1684 = vpop.f32.mrb[0].mxu0
  %v1685 = vadd.f32 0.0, %v1684
  %v1686 = vpop.f32.mrb[0].mxu0
  %1687 = vmatprep.mubr.f32.mxu0 0.0
  %1688 = vmatmul.mubr.f32.gmra.mrb[0].mxu0 %v1598
  %v1689 = vpop.f32.mrb[0].mxu0
  %v1690 = vadd.f32 0.0, %v1689
  %v1691 = vpop.f32.mrb[0].mxu0
  %1692 = vmatprep.mubr.f32.mxu0 0.0
  %1693 = vmatmul.mubr.f32.gmra.mrb[0].mxu0 %v1601
  %v1694 = vpop.f32.mrb[0].mxu0
  %v1695 = vadd.f32 0.0, %v1694
  %v1696 = vpop.f32.mrb[0].mxu0
  %1697 = vmatprep.mubr.f32.mxu0 0.0
  %1698 = vmatmul.mubr.f32.gmra.mrb[0].mxu0 %v1604
  %v1699 = vpop.f32.mrb[0].mxu0
  %v1700 = vadd.f32 0.0, %v1699
  %v1701 = vpop.f32.mrb[0].mxu0
  %1702 = vmatprep.mubr.f32.mxu0 0.0
  %1703 = vmatmul.mubr.f32.gmra.mrb[0].mxu0 %v1607
  %v1704 = vpop.f32.mrb[0].mxu0
  %v1705 = vadd.f32 0.0, %v1704
  %v1706 = vpop.f32.mrb[0].mxu0
  %1707 = vmatprep.mubr.f32.mxu0 0.0
  %1708 = vmatmul.mubr.f32.gmra.mrb[0].mxu0 %v1610
  %v1709 = vpop.f32.mrb[0].mxu0
  %v1710 = vadd.f32 0.0, %v1709
  %v1711 = vpop.f32.mrb[0].mxu0
  %1712 = vmatprep.mubr.f32.mxu0 0.0
  %1713 = vmatmul.mubr.f32.gmra.mrb[0].mxu0 %v1613
  %v1714 = vpop.f32.mrb[0].mxu0
  %v1715 = vadd.f32 0.0, %v1714
  %v1716 = vpop.f32.mrb[0].mxu0
  %1717 = vmatprep.mubr.f32.mxu0 0.0
  %1718 = vmatmul.mubr.f32.gmra.mrb[0].mxu0 %v1616
  %v1719 = vpop.f32.mrb[0].mxu0
  %v1720 = vadd.f32 0.0, %v1719
  %v1721 = vpop.f32.mrb[0].mxu0
  %1722 = vdwg.mxu0
  %v1724 = vsel %vm306, %v1353, 0
  %v1727 = vsel %vm306, %v1354, 0
  %v1730 = vsel %vm306, %v1355, 0
  %v1733 = vsel %vm306, %v1356, 0
  %v1736 = vsel %vm306, %v1357, 0
  %v1739 = vsel %vm306, %v1358, 0
  %v1742 = vsel %vm306, %v1359, 0
  %v1745 = vsel %vm306, %v1360, 0
  %1747 = vmatprep.subr.mxu0 0.0
  %1748 = vmatpush1.msra.mxu0 %v1361
  %1749 = vmatprep.subr.mxu0 0.0
  %1750 = vmatpush1.msra.mxu0 %v1362
  %1751 = vmatprep.subr.mxu0 0.0
  %1752 = vmatpush1.msra.mxu0 0.0
  %1753 = vmatprep.subr.mxu0 0.0
  %1754 = vmatpush1.msra.mxu0 0.0
  %1755 = vmatprep.subr.mxu0 0.0
  %1756 = vmatpush1.msra.mxu0 0.0
  %1757 = vmatprep.subr.mxu0 0.0
  %1758 = vmatpush1.msra.mxu0 0.0
  %1759 = vmatprep.subr.mxu0 0.0
  %1760 = vmatpush1.msra.mxu0 0.0
  %1761 = vmatprep.subr.mxu0 0.0
  %1762 = vmatpush1.msra.mxu0 0.0
  %1763 = vmatprep.subr.mxu0 0.0
  %1764 = vmatpush1.msra.mxu0 0.0
  %1765 = vmatprep.subr.mxu0 0.0
  %1766 = vmatpush1.msra.mxu0 0.0
  %1767 = vmatprep.subr.mxu0 0.0
  %1768 = vmatpush1.msra.mxu0 0.0
  %1769 = vmatprep.subr.mxu0 0.0
  %1770 = vmatpush1.msra.mxu0 0.0
  %1771 = vmatprep.subr.mxu0 0.0
  %1772 = vmatpush1.msra.mxu0 0.0
  %1773 = vmatprep.subr.mxu0 0.0
  %1774 = vmatpush1.msra.mxu0 0.0
  %1775 = vmatprep.subr.mxu0 0.0
  %1776 = vmatpush1.msra.mxu0 0.0
  %1777 = vmatprep.subr.mxu0 0.0
  %1778 = vmatpush1.msra.mxu0 0.0
  %1779 = vmatprep.subr.mxu0 0.0
  %1780 = vmatpush1.msra.mxu0 0.0
  %1781 = vmatprep.subr.mxu0 0.0
  %1782 = vmatpush1.msra.mxu0 0.0
  %1783 = vmatprep.subr.mxu0 0.0
  %1784 = vmatpush1.msra.mxu0 0.0
  %1785 = vmatprep.subr.mxu0 0.0
  %1786 = vmatpush1.msra.mxu0 0.0
  %1787 = vmatprep.subr.mxu0 0.0
  %1788 = vmatpush1.msra.mxu0 0.0
  %1789 = vmatprep.subr.mxu0 0.0
  %1790 = vmatpush1.msra.mxu0 0.0
  %1791 = vmatprep.subr.mxu0 0.0
  %1792 = vmatpush1.msra.mxu0 0.0
  %1793 = vmatprep.subr.mxu0 0.0
  %1794 = vmatpush1.msra.mxu0 0.0
  %1795 = vmatprep.subr.mxu0 0.0
  %1796 = vmatpush1.msra.mxu0 0.0
  %1797 = vmatprep.subr.mxu0 0.0
  %1798 = vmatpush1.msra.mxu0 0.0
  %1799 = vmatprep.subr.mxu0 0.0
  %1800 = vmatpush1.msra.mxu0 0.0
  %1801 = vmatprep.subr.mxu0 0.0
  %1802 = vmatpush1.msra.mxu0 0.0
  %1803 = vmatprep.subr.mxu0 0.0
  %1804 = vmatpush1.msra.mxu0 0.0
  %1805 = vmatprep.subr.mxu0 0.0
  %1806 = vmatpush1.msra.mxu0 0.0
  %1807 = vmatprep.subr.mxu0 0.0
  %1808 = vmatpush1.msra.mxu0 0.0
  %1809 = vmatprep.subr.mxu0 0.0
  %1810 = vmatpush1.msra.mxu0 0.0
  %1811 = vmatprep.mubr.f32.mxu0 0.0
  %1812 = vmatmul.mubr.f32.gmra.mrb[0].mxu0 %v1724
  %v1813 = vpop.f32.mrb[0].mxu0
  %v1814 = vadd.f32 %v1685, %v1813
  %v1815 = vpop.f32.mrb[0].mxu0
  %1816 = vmatprep.mubr.f32.mxu0 0.0
  %1817 = vmatmul.mubr.f32.gmra.mrb[0].mxu0 %v1727
  %v1818 = vpop.f32.mrb[0].mxu0
  %v1819 = vadd.f32 %v1690, %v1818
  %v1820 = vpop.f32.mrb[0].mxu0
  %1821 = vmatprep.mubr.f32.mxu0 0.0
  %1822 = vmatmul.mubr.f32.gmra.mrb[0].mxu0 %v1730
  %v1823 = vpop.f32.mrb[0].mxu0
  %v1824 = vadd.f32 %v1695, %v1823
  %v1825 = vpop.f32.mrb[0].mxu0
  %1826 = vmatprep.mubr.f32.mxu0 0.0
  %1827 = vmatmul.mubr.f32.gmra.mrb[0].mxu0 %v1733
  %v1828 = vpop.f32.mrb[0].mxu0
  %v1829 = vadd.f32 %v1700, %v1828
  %v1830 = vpop.f32.mrb[0].mxu0
  %1831 = vmatprep.mubr.f32.mxu0 0.0
  %1832 = vmatmul.mubr.f32.gmra.mrb[0].mxu0 %v1736
  %v1833 = vpop.f32.mrb[0].mxu0
  %v1834 = vadd.f32 %v1705, %v1833
  %v1835 = vpop.f32.mrb[0].mxu0
  %1836 = vmatprep.mubr.f32.mxu0 0.0
  %1837 = vmatmul.mubr.f32.gmra.mrb[0].mxu0 %v1739
  %v1838 = vpop.f32.mrb[0].mxu0
  %v1839 = vadd.f32 %v1710, %v1838
  %v1840 = vpop.f32.mrb[0].mxu0
  %1841 = vmatprep.mubr.f32.mxu0 0.0
  %1842 = vmatmul.mubr.f32.gmra.mrb[0].mxu0 %v1742
  %v1843 = vpop.f32.mrb[0].mxu0
  %v1844 = vadd.f32 %v1715, %v1843
  %v1845 = vpop.f32.mrb[0].mxu0
  %1846 = vmatprep.mubr.f32.mxu0 0.0
  %1847 = vmatmul.mubr.f32.gmra.mrb[0].mxu0 %v1745
  %v1848 = vpop.f32.mrb[0].mxu0
  %v1849 = vadd.f32 %v1720, %v1848
  %v1850 = vpop.f32.mrb[0].mxu0
  %1851 = vdwg.mxu0
  %v1853 = vsel %vm306, %v1586, 0
  %v1856 = vsel %vm306, %v1587, 0
  %v1859 = vsel %vm306, %v1588, 0
  %v1862 = vsel %vm306, %v1589, 0
  %v1865 = vsel %vm306, %v1590, 0
  %v1868 = vsel %vm306, %v1591, 0
  %v1871 = vsel %vm306, %v1592, 0
  %v1874 = vsel %vm306, %v1593, 0
  %1876 = vmatprep.subr.mxu0 0.0
  %1877 = vmatpush1.msra.mxu0 %v1365
  %1878 = vmatprep.subr.mxu0 0.0
  %1879 = vmatpush1.msra.mxu0 %v1366
  %1880 = vmatprep.subr.mxu0 0.0
  %1881 = vmatpush1.msra.mxu0 0.0
  %1882 = vmatprep.subr.mxu0 0.0
  %1883 = vmatpush1.msra.mxu0 0.0
  %1884 = vmatprep.subr.mxu0 0.0
  %1885 = vmatpush1.msra.mxu0 0.0
  %1886 = vmatprep.subr.mxu0 0.0
  %1887 = vmatpush1.msra.mxu0 0.0
  %1888 = vmatprep.subr.mxu0 0.0
  %1889 = vmatpush1.msra.mxu0 0.0
  %1890 = vmatprep.subr.mxu0 0.0
  %1891 = vmatpush1.msra.mxu0 0.0
  %1892 = vmatprep.subr.mxu0 0.0
  %1893 = vmatpush1.msra.mxu0 0.0
  %1894 = vmatprep.subr.mxu0 0.0
  %1895 = vmatpush1.msra.mxu0 0.0
  %1896 = vmatprep.subr.mxu0 0.0
  %1897 = vmatpush1.msra.mxu0 0.0
  %1898 = vmatprep.subr.mxu0 0.0
  %1899 = vmatpush1.msra.mxu0 0.0
  %1900 = vmatprep.subr.mxu0 0.0
  %1901 = vmatpush1.msra.mxu0 0.0
  %1902 = vmatprep.subr.mxu0 0.0
  %1903 = vmatpush1.msra.mxu0 0.0
  %1904 = vmatprep.subr.mxu0 0.0
  %1905 = vmatpush1.msra.mxu0 0.0
  %1906 = vmatprep.subr.mxu0 0.0
  %1907 = vmatpush1.msra.mxu0 0.0
  %1908 = vmatprep.subr.mxu0 0.0
  %1909 = vmatpush1.msra.mxu0 0.0
  %1910 = vmatprep.subr.mxu0 0.0
  %1911 = vmatpush1.msra.mxu0 0.0
  %1912 = vmatprep.subr.mxu0 0.0
  %1913 = vmatpush1.msra.mxu0 0.0
  %1914 = vmatprep.subr.mxu0 0.0
  %1915 = vmatpush1.msra.mxu0 0.0
  %1916 = vmatprep.subr.mxu0 0.0
  %1917 = vmatpush1.msra.mxu0 0.0
  %1918 = vmatprep.subr.mxu0 0.0
  %1919 = vmatpush1.msra.mxu0 0.0
  %1920 = vmatprep.subr.mxu0 0.0
  %1921 = vmatpush1.msra.mxu0 0.0
  %1922 = vmatprep.subr.mxu0 0.0
  %1923 = vmatpush1.msra.mxu0 0.0
  %1924 = vmatprep.subr.mxu0 0.0
  %1925 = vmatpush1.msra.mxu0 0.0
  %1926 = vmatprep.subr.mxu0 0.0
  %1927 = vmatpush1.msra.mxu0 0.0
  %1928 = vmatprep.subr.mxu0 0.0
  %1929 = vmatpush1.msra.mxu0 0.0
  %1930 = vmatprep.subr.mxu0 0.0
  %1931 = vmatpush1.msra.mxu0 0.0
  %1932 = vmatprep.subr.mxu0 0.0
  %1933 = vmatpush1.msra.mxu0 0.0
  %1934 = vmatprep.subr.mxu0 0.0
  %1935 = vmatpush1.msra.mxu0 0.0
  %1936 = vmatprep.subr.mxu0 0.0
  %1937 = vmatpush1.msra.mxu0 0.0
  %1938 = vmatprep.subr.mxu0 0.0
  %1939 = vmatpush1.msra.mxu0 0.0
  %1940 = vmatprep.mubr.f32.mxu0 0.0
  %1941 = vmatmul.mubr.f32.gmra.mrb[0].mxu0 %v1853
  %v1942 = vpop.f32.mrb[0].mxu0
  %v1943 = vadd.f32 0.0, %v1942
  %v1944 = vpop.f32.mrb[0].mxu0
  %1945 = vmatprep.mubr.f32.mxu0 0.0
  %1946 = vmatmul.mubr.f32.gmra.mrb[0].mxu0 %v1856
  %v1947 = vpop.f32.mrb[0].mxu0
  %v1948 = vadd.f32 0.0, %v1947
  %v1949 = vpop.f32.mrb[0].mxu0
  %1950 = vmatprep.mubr.f32.mxu0 0.0
  %1951 = vmatmul.mubr.f32.gmra.mrb[0].mxu0 %v1859
  %v1952 = vpop.f32.mrb[0].mxu0
  %v1953 = vadd.f32 0.0, %v1952
  %v1954 = vpop.f32.mrb[0].mxu0
  %1955 = vmatprep.mubr.f32.mxu0 0.0
  %1956 = vmatmul.mubr.f32.gmra.mrb[0].mxu0 %v1862
  %v1957 = vpop.f32.mrb[0].mxu0
  %v1958 = vadd.f32 0.0, %v1957
  %v1959 = vpop.f32.mrb[0].mxu0
  %1960 = vmatprep.mubr.f32.mxu0 0.0
  %1961 = vmatmul.mubr.f32.gmra.mrb[0].mxu0 %v1865
  %v1962 = vpop.f32.mrb[0].mxu0
  %v1963 = vadd.f32 0.0, %v1962
  %v1964 = vpop.f32.mrb[0].mxu0
  %1965 = vmatprep.mubr.f32.mxu0 0.0
  %1966 = vmatmul.mubr.f32.gmra.mrb[0].mxu0 %v1868
  %v1967 = vpop.f32.mrb[0].mxu0
  %v1968 = vadd.f32 0.0, %v1967
  %v1969 = vpop.f32.mrb[0].mxu0
  %1970 = vmatprep.mubr.f32.mxu0 0.0
  %1971 = vmatmul.mubr.f32.gmra.mrb[0].mxu0 %v1871
  %v1972 = vpop.f32.mrb[0].mxu0
  %v1973 = vadd.f32 0.0, %v1972
  %v1974 = vpop.f32.mrb[0].mxu0
  %1975 = vmatprep.mubr.f32.mxu0 0.0
  %1976 = vmatmul.mubr.f32.gmra.mrb[0].mxu0 %v1874
  %v1977 = vpop.f32.mrb[0].mxu0
  %v1978 = vadd.f32 0.0, %v1977
  %v1979 = vpop.f32.mrb[0].mxu0
  %1980 = vdwg.mxu0
  %v1981 = vadd.f32 %v1814, %v1943
  %v1982 = vadd.f32 %v1819, %v1948
  %v1983 = vadd.f32 %v1824, %v1953
  %v1984 = vadd.f32 %v1829, %v1958
  %v1985 = vadd.f32 %v1834, %v1963
  %v1986 = vadd.f32 %v1839, %v1968
  %v1987 = vadd.f32 %v1844, %v1973
  %v1988 = vadd.f32 %v1849, %v1978
  %v1989 = vlaneseq
  %v1990 = vshrl.u32 %v1989, 7
  %v1991 = vsub.s32 0, %v1990
  %v1992 = vrot.slane %v1367, %v1991
  %v1993 = vadd.f32 %v1981, %v1992
  %v1994 = vadd.f32 %v1982, %v1992
  %v1995 = vadd.f32 %v1983, %v1992
  %v1996 = vadd.f32 %v1984, %v1992
  %v1997 = vadd.f32 %v1985, %v1992
  %v1998 = vadd.f32 %v1986, %v1992
  %v1999 = vadd.f32 %v1987, %v1992
  %v2000 = vadd.f32 %v1988, %v1992
  %2005 = vrot.lane.b32.xlu0 %v1997, 8
  %v2006 = vpop.permute.xlu0 %2005
  %2007 = vrot.lane.b32.xlu0 %v1998, 8
  %v2008 = vpop.permute.xlu0 %2007
  %2009 = vrot.lane.b32.xlu0 %v1999, 8
  %v2010 = vpop.permute.xlu0 %2009
  %2011 = vrot.lane.b32.xlu0 %v2000, 8
  %v2012 = vpop.permute.xlu0 %2011
  %vm2017 = vcmask 64512
  %v2018 = vsel %vm2017, %v1993, %v2006
  %v2019 = vsel %vm2017, %v1994, %v2008
  %v2020 = vsel %vm2017, %v1995, %v2010
  %v2021 = vsel %vm2017, %v1996, %v2012
  %v2022 = vld [vmem:[%s3 + $0xc0] sm:$0xff]
  %v2023 = vld [vmem:[%s3 + $0xc8] sm:$0xff]
  %v2024 = vld [vmem:[%s4 + $0x3] sm:$0x1]
  %v2025 = vld [vmem:[%s4 + $0x4] sm:$0x1]
  %v2027 = vsel %vm306, %v44, 0
  %v2030 = vsel %vm306, %v45, 0
  %v2033 = vsel %vm306, %v46, 0
  %v2036 = vsel %vm306, %v47, 0
  %2038 = vmatprep.subr.mxu0 0.0
  %2039 = vmatpush1.msra.mxu0 %v2022
  %2040 = vmatprep.subr.mxu0 0.0
  %2041 = vmatpush1.msra.mxu0 %v2023
  %2042 = vmatprep.subr.mxu0 0.0
  %2043 = vmatpush1.msra.mxu0 0.0
  %2044 = vmatprep.subr.mxu0 0.0
  %2045 = vmatpush1.msra.mxu0 0.0
  %2046 = vmatprep.subr.mxu0 0.0
  %2047 = vmatpush1.msra.mxu0 0.0
  %2048 = vmatprep.subr.mxu0 0.0
  %2049 = vmatpush1.msra.mxu0 0.0
  %2050 = vmatprep.subr.mxu0 0.0
  %2051 = vmatpush1.msra.mxu0 0.0
  %2052 = vmatprep.subr.mxu0 0.0
  %2053 = vmatpush1.msra.mxu0 0.0
  %2054 = vmatprep.subr.mxu0 0.0
  %2055 = vmatpush1.msra.mxu0 0.0
  %2056 = vmatprep.subr.mxu0 0.0
  %2057 = vmatpush1.msra.mxu0 0.0
  %2058 = vmatprep.subr.mxu0 0.0
  %2059 = vmatpush1.msra.mxu0 0.0
  %2060 = vmatprep.subr.mxu0 0.0
  %2061 = vmatpush1.msra.mxu0 0.0
  %2062 = vmatprep.subr.mxu0 0.0
  %2063 = vmatpush1.msra.mxu0 0.0
  %2064 = vmatprep.subr.mxu0 0.0
  %2065 = vmatpush1.msra.mxu0 0.0
  %2066 = vmatprep.subr.mxu0 0.0
  %2067 = vmatpush1.msra.mxu0 0.0
  %2068 = vmatprep.subr.mxu0 0.0
  %2069 = vmatpush1.msra.mxu0 0.0
  %2070 = vmatprep.subr.mxu0 0.0
  %2071 = vmatpush1.msra.mxu0 0.0
  %2072 = vmatprep.subr.mxu0 0.0
  %2073 = vmatpush1.msra.mxu0 0.0
  %2074 = vmatprep.subr.mxu0 0.0
  %2075 = vmatpush1.msra.mxu0 0.0
  %2076 = vmatprep.subr.mxu0 0.0
  %2077 = vmatpush1.msra.mxu0 0.0
  %2078 = vmatprep.subr.mxu0 0.0
  %2079 = vmatpush1.msra.mxu0 0.0
  %2080 = vmatprep.subr.mxu0 0.0
  %2081 = vmatpush1.msra.mxu0 0.0
  %2082 = vmatprep.subr.mxu0 0.0
  %2083 = vmatpush1.msra.mxu0 0.0
  %2084 = vmatprep.subr.mxu0 0.0
  %2085 = vmatpush1.msra.mxu0 0.0
  %2086 = vmatprep.subr.mxu0 0.0
  %2087 = vmatpush1.msra.mxu0 0.0
  %2088 = vmatprep.subr.mxu0 0.0
  %2089 = vmatpush1.msra.mxu0 0.0
  %2090 = vmatprep.subr.mxu0 0.0
  %2091 = vmatpush1.msra.mxu0 0.0
  %2092 = vmatprep.subr.mxu0 0.0
  %2093 = vmatpush1.msra.mxu0 0.0
  %2094 = vmatprep.subr.mxu0 0.0
  %2095 = vmatpush1.msra.mxu0 0.0
  %2096 = vmatprep.subr.mxu0 0.0
  %2097 = vmatpush1.msra.mxu0 0.0
  %2098 = vmatprep.subr.mxu0 0.0
  %2099 = vmatpush1.msra.mxu0 0.0
  %2100 = vmatprep.subr.mxu0 0.0
  %2101 = vmatpush1.msra.mxu0 0.0
  %2102 = vmatprep.mubr.f32.mxu0 0.0
  %2103 = vmatmul.mubr.f32.gmra.mrb[0].mxu0 %v2027
  %v2104 = vpop.f32.mrb[0].mxu0
  %v2105 = vadd.f32 0.0, %v2104
  %v2106 = vpop.f32.mrb[0].mxu0
  %2107 = vmatprep.mubr.f32.mxu0 0.0
  %2108 = vmatmul.mubr.f32.gmra.mrb[0].mxu0 %v2030
  %v2109 = vpop.f32.mrb[0].mxu0
  %v2110 = vadd.f32 0.0, %v2109
  %v2111 = vpop.f32.mrb[0].mxu0
  %2112 = vmatprep.mubr.f32.mxu0 0.0
  %2113 = vmatmul.mubr.f32.gmra.mrb[0].mxu0 %v2033
  %v2114 = vpop.f32.mrb[0].mxu0
  %v2115 = vadd.f32 0.0, %v2114
  %v2116 = vpop.f32.mrb[0].mxu0
  %2117 = vmatprep.mubr.f32.mxu0 0.0
  %2118 = vmatmul.mubr.f32.gmra.mrb[0].mxu0 %v2036
  %v2119 = vpop.f32.mrb[0].mxu0
  %v2120 = vadd.f32 0.0, %v2119
  %v2121 = vpop.f32.mrb[0].mxu0
  %2122 = vdwg.mxu0
  %v2124 = vsel %vm953, %v28, 0
  %v2127 = vsel %vm953, %v29, 0
  %v2130 = vsel %vm953, %v30, 0
  %v2133 = vsel %vm953, %v31, 0
  %v2136 = vsel %vm953, %v32, 0
  %v2139 = vsel %vm953, %v33, 0
  %v2142 = vsel %vm953, %v34, 0
  %v2145 = vsel %vm953, %v35, 0
  %2147 = vmatprep.subr.mxu0 0.0
  %2148 = vmatpush1.msra.mxu0 %v2105
  %2149 = vmatprep.subr.mxu0 0.0
  %2150 = vmatpush1.msra.mxu0 %v2110
  %2151 = vmatprep.subr.mxu0 0.0
  %2152 = vmatpush1.msra.mxu0 %v2115
  %2153 = vmatprep.subr.mxu0 0.0
  %2154 = vmatpush1.msra.mxu0 %v2120
  %2155 = vmatprep.subr.mxu0 0.0
  %2156 = vmatpush1.msra.mxu0 0.0
  %2157 = vmatprep.subr.mxu0 0.0
  %2158 = vmatpush1.msra.mxu0 0.0
  %2159 = vmatprep.subr.mxu0 0.0
  %2160 = vmatpush1.msra.mxu0 0.0
  %2161 = vmatprep.subr.mxu0 0.0
  %2162 = vmatpush1.msra.mxu0 0.0
  %2163 = vmatprep.subr.mxu0 0.0
  %2164 = vmatpush1.msra.mxu0 0.0
  %2165 = vmatprep.subr.mxu0 0.0
  %2166 = vmatpush1.msra.mxu0 0.0
  %2167 = vmatprep.subr.mxu0 0.0
  %2168 = vmatpush1.msra.mxu0 0.0
  %2169 = vmatprep.subr.mxu0 0.0
  %2170 = vmatpush1.msra.mxu0 0.0
  %2171 = vmatprep.subr.mxu0 0.0
  %2172 = vmatpush1.msra.mxu0 0.0
  %2173 = vmatprep.subr.mxu0 0.0
  %2174 = vmatpush1.msra.mxu0 0.0
  %2175 = vmatprep.subr.mxu0 0.0
  %2176 = vmatpush1.msra.mxu0 0.0
  %2177 = vmatprep.subr.mxu0 0.0
  %2178 = vmatpush1.msra.mxu0 0.0
  %2179 = vmatprep.subr.mxu0 0.0
  %2180 = vmatpush1.msra.mxu0 0.0
  %2181 = vmatprep.subr.mxu0 0.0
  %2182 = vmatpush1.msra.mxu0 0.0
  %2183 = vmatprep.subr.mxu0 0.0
  %2184 = vmatpush1.msra.mxu0 0.0
  %2185 = vmatprep.subr.mxu0 0.0
  %2186 = vmatpush1.msra.mxu0 0.0
  %2187 = vmatprep.subr.mxu0 0.0
  %2188 = vmatpush1.msra.mxu0 0.0
  %2189 = vmatprep.subr.mxu0 0.0
  %2190 = vmatpush1.msra.mxu0 0.0
  %2191 = vmatprep.subr.mxu0 0.0
  %2192 = vmatpush1.msra.mxu0 0.0
  %2193 = vmatprep.subr.mxu0 0.0
  %2194 = vmatpush1.msra.mxu0 0.0
  %2195 = vmatprep.subr.mxu0 0.0
  %2196 = vmatpush1.msra.mxu0 0.0
  %2197 = vmatprep.subr.mxu0 0.0
  %2198 = vmatpush1.msra.mxu0 0.0
  %2199 = vmatprep.subr.mxu0 0.0
  %2200 = vmatpush1.msra.mxu0 0.0
  %2201 = vmatprep.subr.mxu0 0.0
  %2202 = vmatpush1.msra.mxu0 0.0
  %2203 = vmatprep.subr.mxu0 0.0
  %2204 = vmatpush1.msra.mxu0 0.0
  %2205 = vmatprep.subr.mxu0 0.0
  %2206 = vmatpush1.msra.mxu0 0.0
  %2207 = vmatprep.subr.mxu0 0.0
  %2208 = vmatpush1.msra.mxu0 0.0
  %2209 = vmatprep.subr.mxu0 0.0
  %2210 = vmatpush1.msra.mxu0 0.0
  %2211 = vmatprep.mubr.f32.mxu0 0.0
  %2212 = vmatmul.mubr.f32.gmra.mrb[0].mxu0 %v2124
  %v2213 = vpop.f32.mrb[0].mxu0
  %v2214 = vadd.f32 0.0, %v2213
  %v2215 = vpop.f32.mrb[0].mxu0
  %2216 = vmatprep.mubr.f32.mxu0 0.0
  %2217 = vmatmul.mubr.f32.gmra.mrb[0].mxu0 %v2127
  %v2218 = vpop.f32.mrb[0].mxu0
  %v2219 = vadd.f32 0.0, %v2218
  %v2220 = vpop.f32.mrb[0].mxu0
  %2221 = vmatprep.mubr.f32.mxu0 0.0
  %2222 = vmatmul.mubr.f32.gmra.mrb[0].mxu0 %v2130
  %v2223 = vpop.f32.mrb[0].mxu0
  %v2224 = vadd.f32 0.0, %v2223
  %v2225 = vpop.f32.mrb[0].mxu0
  %2226 = vmatprep.mubr.f32.mxu0 0.0
  %2227 = vmatmul.mubr.f32.gmra.mrb[0].mxu0 %v2133
  %v2228 = vpop.f32.mrb[0].mxu0
  %v2229 = vadd.f32 0.0, %v2228
  %v2230 = vpop.f32.mrb[0].mxu0
  %2231 = vmatprep.mubr.f32.mxu0 0.0
  %2232 = vmatmul.mubr.f32.gmra.mrb[0].mxu0 %v2136
  %v2233 = vpop.f32.mrb[0].mxu0
  %v2234 = vadd.f32 0.0, %v2233
  %v2235 = vpop.f32.mrb[0].mxu0
  %2236 = vmatprep.mubr.f32.mxu0 0.0
  %2237 = vmatmul.mubr.f32.gmra.mrb[0].mxu0 %v2139
  %v2238 = vpop.f32.mrb[0].mxu0
  %v2239 = vadd.f32 0.0, %v2238
  %v2240 = vpop.f32.mrb[0].mxu0
  %2241 = vmatprep.mubr.f32.mxu0 0.0
  %2242 = vmatmul.mubr.f32.gmra.mrb[0].mxu0 %v2142
  %v2243 = vpop.f32.mrb[0].mxu0
  %v2244 = vadd.f32 0.0, %v2243
  %v2245 = vpop.f32.mrb[0].mxu0
  %2246 = vmatprep.mubr.f32.mxu0 0.0
  %2247 = vmatmul.mubr.f32.gmra.mrb[0].mxu0 %v2145
  %v2248 = vpop.f32.mrb[0].mxu0
  %v2249 = vadd.f32 0.0, %v2248
  %v2250 = vpop.f32.mrb[0].mxu0
  %2251 = vdwg.mxu0
  %v2252 = vlaneseq
  %v2253 = vshrl.u32 %v2252, 7
  %v2254 = vsub.s32 0, %v2253
  %v2255 = vrot.slane %v2024, %v2254
  %v2256 = vadd.f32 %v2214, %v2255
  %v2257 = vadd.f32 %v2219, %v2255
  %v2258 = vadd.f32 %v2224, %v2255
  %v2259 = vadd.f32 %v2229, %v2255
  %v2260 = vmax.f32 %v2256, 0.0
  %v2261 = vmax.f32 %v2257, 0.0
  %v2262 = vmax.f32 %v2258, 0.0
  %v2263 = vmax.f32 %v2259, 0.0
  %v2264 = vlaneseq
  %v2265 = vshrl.u32 %v2264, 7
  %v2266 = vsub.s32 0, %v2265
  %v2267 = vrot.slane %v2025, %v2266
  %2269 = vrot.lane.b32.xlu0 %v2267, 16
  %v2270 = vpop.permute.xlu0 %2269
  %v2272 = vadd.f32 %v2214, %v2270
  %v2273 = vadd.f32 %v2219, %v2270
  %v2274 = vadd.f32 %v2224, %v2270
  %v2275 = vadd.f32 %v2229, %v2270
  %v2276 = vmax.f32 %v2272, 0.0
  %v2277 = vmax.f32 %v2273, 0.0
  %v2278 = vmax.f32 %v2274, 0.0
  %v2279 = vmax.f32 %v2275, 0.0
  %v2280 = vadd.f32 %v2234, %v2255
  %v2281 = vadd.f32 %v2239, %v2255
  %v2282 = vadd.f32 %v2244, %v2255
  %v2283 = vadd.f32 %v2249, %v2255
  %v2284 = vmax.f32 %v2280, 0.0
  %v2285 = vmax.f32 %v2281, 0.0
  %v2286 = vmax.f32 %v2282, 0.0
  %v2287 = vmax.f32 %v2283, 0.0
  %v2288 = vld [vmem:[%s3 + $0xd0] sm:$0xff]
  %v2289 = vld [vmem:[%s3 + $0xd8] sm:$0xff]
  %v2290 = vld [vmem:[%s3 + $0xe0] sm:$0xff]
  %v2291 = vld [vmem:[%s3 + $0xe8] sm:$0xff]
  %v2292 = vld [vmem:[%s4 + $0x6] sm:$0x1]
  %v2293 = vld [vmem:[%s4 + $0x5] sm:$0x1]
  %v2295 = vsel %vm306, %v2284, 0
  %v2298 = vsel %vm306, %v2285, 0
  %v2301 = vsel %vm306, %v2286, 0
  %v2304 = vsel %vm306, %v2287, 0
  %v2307 = vsel %vm306, %v2260, 0
  %v2310 = vsel %vm306, %v2261, 0
  %v2313 = vsel %vm306, %v2262, 0
  %v2316 = vsel %vm306, %v2263, 0
  %2318 = vmatprep.subr.mxu0 0.0
  %2319 = vmatpush1.msra.mxu0 %v2290
  %2320 = vmatprep.subr.mxu0 0.0
  %2321 = vmatpush1.msra.mxu0 %v2291
  %2322 = vmatprep.subr.mxu0 0.0
  %2323 = vmatpush1.msra.mxu0 0.0
  %2324 = vmatprep.subr.mxu0 0.0
  %2325 = vmatpush1.msra.mxu0 0.0
  %2326 = vmatprep.subr.mxu0 0.0
  %2327 = vmatpush1.msra.mxu0 0.0
  %2328 = vmatprep.subr.mxu0 0.0
  %2329 = vmatpush1.msra.mxu0 0.0
  %2330 = vmatprep.subr.mxu0 0.0
  %2331 = vmatpush1.msra.mxu0 0.0
  %2332 = vmatprep.subr.mxu0 0.0
  %2333 = vmatpush1.msra.mxu0 0.0
  %2334 = vmatprep.subr.mxu0 0.0
  %2335 = vmatpush1.msra.mxu0 0.0
  %2336 = vmatprep.subr.mxu0 0.0
  %2337 = vmatpush1.msra.mxu0 0.0
  %2338 = vmatprep.subr.mxu0 0.0
  %2339 = vmatpush1.msra.mxu0 0.0
  %2340 = vmatprep.subr.mxu0 0.0
  %2341 = vmatpush1.msra.mxu0 0.0
  %2342 = vmatprep.subr.mxu0 0.0
  %2343 = vmatpush1.msra.mxu0 0.0
  %2344 = vmatprep.subr.mxu0 0.0
  %2345 = vmatpush1.msra.mxu0 0.0
  %2346 = vmatprep.subr.mxu0 0.0
  %2347 = vmatpush1.msra.mxu0 0.0
  %2348 = vmatprep.subr.mxu0 0.0
  %2349 = vmatpush1.msra.mxu0 0.0
  %2350 = vmatprep.subr.mxu0 0.0
  %2351 = vmatpush1.msra.mxu0 0.0
  %2352 = vmatprep.subr.mxu0 0.0
  %2353 = vmatpush1.msra.mxu0 0.0
  %2354 = vmatprep.subr.mxu0 0.0
  %2355 = vmatpush1.msra.mxu0 0.0
  %2356 = vmatprep.subr.mxu0 0.0
  %2357 = vmatpush1.msra.mxu0 0.0
  %2358 = vmatprep.subr.mxu0 0.0
  %2359 = vmatpush1.msra.mxu0 0.0
  %2360 = vmatprep.subr.mxu0 0.0
  %2361 = vmatpush1.msra.mxu0 0.0
  %2362 = vmatprep.subr.mxu0 0.0
  %2363 = vmatpush1.msra.mxu0 0.0
  %2364 = vmatprep.subr.mxu0 0.0
  %2365 = vmatpush1.msra.mxu0 0.0
  %2366 = vmatprep.subr.mxu0 0.0
  %2367 = vmatpush1.msra.mxu0 0.0
  %2368 = vmatprep.subr.mxu0 0.0
  %2369 = vmatpush1.msra.mxu0 0.0
  %2370 = vmatprep.subr.mxu0 0.0
  %2371 = vmatpush1.msra.mxu0 0.0
  %2372 = vmatprep.subr.mxu0 0.0
  %2373 = vmatpush1.msra.mxu0 0.0
  %2374 = vmatprep.subr.mxu0 0.0
  %2375 = vmatpush1.msra.mxu0 0.0
  %2376 = vmatprep.subr.mxu0 0.0
  %2377 = vmatpush1.msra.mxu0 0.0
  %2378 = vmatprep.subr.mxu0 0.0
  %2379 = vmatpush1.msra.mxu0 0.0
  %2380 = vmatprep.subr.mxu0 0.0
  %2381 = vmatpush1.msra.mxu0 0.0
  %2382 = vmatprep.mubr.f32.mxu0 0.0
  %2383 = vmatmul.mubr.f32.gmra.mrb[0].mxu0 %v2295
  %v2384 = vpop.f32.mrb[0].mxu0
  %v2385 = vadd.f32 0.0, %v2384
  %v2386 = vpop.f32.mrb[0].mxu0
  %2387 = vmatprep.mubr.f32.mxu0 0.0
  %2388 = vmatmul.mubr.f32.gmra.mrb[0].mxu0 %v2298
  %v2389 = vpop.f32.mrb[0].mxu0
  %v2390 = vadd.f32 0.0, %v2389
  %v2391 = vpop.f32.mrb[0].mxu0
  %2392 = vmatprep.mubr.f32.mxu0 0.0
  %2393 = vmatmul.mubr.f32.gmra.mrb[0].mxu0 %v2301
  %v2394 = vpop.f32.mrb[0].mxu0
  %v2395 = vadd.f32 0.0, %v2394
  %v2396 = vpop.f32.mrb[0].mxu0
  %2397 = vmatprep.mubr.f32.mxu0 0.0
  %2398 = vmatmul.mubr.f32.gmra.mrb[0].mxu0 %v2304
  %v2399 = vpop.f32.mrb[0].mxu0
  %v2400 = vadd.f32 0.0, %v2399
  %v2401 = vpop.f32.mrb[0].mxu0
  %2402 = vmatprep.mubr.f32.mxu0 0.0
  %2403 = vmatmul.mubr.f32.gmra.mrb[0].mxu0 %v2307
  %v2404 = vpop.f32.mrb[0].mxu0
  %v2405 = vadd.f32 0.0, %v2404
  %v2406 = vpop.f32.mrb[0].mxu0
  %2407 = vmatprep.mubr.f32.mxu0 0.0
  %2408 = vmatmul.mubr.f32.gmra.mrb[0].mxu0 %v2310
  %v2409 = vpop.f32.mrb[0].mxu0
  %v2410 = vadd.f32 0.0, %v2409
  %v2411 = vpop.f32.mrb[0].mxu0
  %2412 = vmatprep.mubr.f32.mxu0 0.0
  %2413 = vmatmul.mubr.f32.gmra.mrb[0].mxu0 %v2313
  %v2414 = vpop.f32.mrb[0].mxu0
  %v2415 = vadd.f32 0.0, %v2414
  %v2416 = vpop.f32.mrb[0].mxu0
  %2417 = vmatprep.mubr.f32.mxu0 0.0
  %2418 = vmatmul.mubr.f32.gmra.mrb[0].mxu0 %v2316
  %v2419 = vpop.f32.mrb[0].mxu0
  %v2420 = vadd.f32 0.0, %v2419
  %v2421 = vpop.f32.mrb[0].mxu0
  %2422 = vdwg.mxu0
  %2427 = vrot.lane.b32.xlu0 %v2276, 112
  %v2428 = vpop.permute.xlu0 %2427
  %2429 = vrot.lane.b32.xlu0 %v2277, 112
  %v2430 = vpop.permute.xlu0 %2429
  %2431 = vrot.lane.b32.xlu0 %v2278, 112
  %v2432 = vpop.permute.xlu0 %2431
  %2433 = vrot.lane.b32.xlu0 %v2279, 112
  %v2434 = vpop.permute.xlu0 %2433
  %v2435 = vsel %vm306, %v2428, 0
  %v2437 = vsel %vm306, %v2430, 0
  %v2439 = vsel %vm306, %v2432, 0
  %v2441 = vsel %vm306, %v2434, 0
  %2443 = vmatprep.subr.mxu0 0.0
  %2444 = vmatpush1.msra.mxu0 %v2288
  %2445 = vmatprep.subr.mxu0 0.0
  %2446 = vmatpush1.msra.mxu0 %v2289
  %2447 = vmatprep.subr.mxu0 0.0
  %2448 = vmatpush1.msra.mxu0 0.0
  %2449 = vmatprep.subr.mxu0 0.0
  %2450 = vmatpush1.msra.mxu0 0.0
  %2451 = vmatprep.subr.mxu0 0.0
  %2452 = vmatpush1.msra.mxu0 0.0
  %2453 = vmatprep.subr.mxu0 0.0
  %2454 = vmatpush1.msra.mxu0 0.0
  %2455 = vmatprep.subr.mxu0 0.0
  %2456 = vmatpush1.msra.mxu0 0.0
  %2457 = vmatprep.subr.mxu0 0.0
  %2458 = vmatpush1.msra.mxu0 0.0
  %2459 = vmatprep.subr.mxu0 0.0
  %2460 = vmatpush1.msra.mxu0 0.0
  %2461 = vmatprep.subr.mxu0 0.0
  %2462 = vmatpush1.msra.mxu0 0.0
  %2463 = vmatprep.subr.mxu0 0.0
  %2464 = vmatpush1.msra.mxu0 0.0
  %2465 = vmatprep.subr.mxu0 0.0
  %2466 = vmatpush1.msra.mxu0 0.0
  %2467 = vmatprep.subr.mxu0 0.0
  %2468 = vmatpush1.msra.mxu0 0.0
  %2469 = vmatprep.subr.mxu0 0.0
  %2470 = vmatpush1.msra.mxu0 0.0
  %2471 = vmatprep.subr.mxu0 0.0
  %2472 = vmatpush1.msra.mxu0 0.0
  %2473 = vmatprep.subr.mxu0 0.0
  %2474 = vmatpush1.msra.mxu0 0.0
  %2475 = vmatprep.subr.mxu0 0.0
  %2476 = vmatpush1.msra.mxu0 0.0
  %2477 = vmatprep.subr.mxu0 0.0
  %2478 = vmatpush1.msra.mxu0 0.0
  %2479 = vmatprep.subr.mxu0 0.0
  %2480 = vmatpush1.msra.mxu0 0.0
  %2481 = vmatprep.subr.mxu0 0.0
  %2482 = vmatpush1.msra.mxu0 0.0
  %2483 = vmatprep.subr.mxu0 0.0
  %2484 = vmatpush1.msra.mxu0 0.0
  %2485 = vmatprep.subr.mxu0 0.0
  %2486 = vmatpush1.msra.mxu0 0.0
  %2487 = vmatprep.subr.mxu0 0.0
  %2488 = vmatpush1.msra.mxu0 0.0
  %2489 = vmatprep.subr.mxu0 0.0
  %2490 = vmatpush1.msra.mxu0 0.0
  %2491 = vmatprep.subr.mxu0 0.0
  %2492 = vmatpush1.msra.mxu0 0.0
  %2493 = vmatprep.subr.mxu0 0.0
  %2494 = vmatpush1.msra.mxu0 0.0
  %2495 = vmatprep.subr.mxu0 0.0
  %2496 = vmatpush1.msra.mxu0 0.0
  %2497 = vmatprep.subr.mxu0 0.0
  %2498 = vmatpush1.msra.mxu0 0.0
  %2499 = vmatprep.subr.mxu0 0.0
  %2500 = vmatpush1.msra.mxu0 0.0
  %2501 = vmatprep.subr.mxu0 0.0
  %2502 = vmatpush1.msra.mxu0 0.0
  %2503 = vmatprep.subr.mxu0 0.0
  %2504 = vmatpush1.msra.mxu0 0.0
  %2505 = vmatprep.subr.mxu0 0.0
  %2506 = vmatpush1.msra.mxu0 0.0
  %2507 = vmatprep.mubr.f32.mxu0 0.0
  %2508 = vmatmul.mubr.f32.gmra.mrb[0].mxu0 %v2435
  %v2509 = vpop.f32.mrb[0].mxu0
  %v2510 = vadd.f32 0.0, %v2509
  %v2511 = vpop.f32.mrb[0].mxu0
  %2512 = vmatprep.mubr.f32.mxu0 0.0
  %2513 = vmatmul.mubr.f32.gmra.mrb[0].mxu0 %v2437
  %v2514 = vpop.f32.mrb[0].mxu0
  %v2515 = vadd.f32 0.0, %v2514
  %v2516 = vpop.f32.mrb[0].mxu0
  %2517 = vmatprep.mubr.f32.mxu0 0.0
  %2518 = vmatmul.mubr.f32.gmra.mrb[0].mxu0 %v2439
  %v2519 = vpop.f32.mrb[0].mxu0
  %v2520 = vadd.f32 0.0, %v2519
  %v2521 = vpop.f32.mrb[0].mxu0
  %2522 = vmatprep.mubr.f32.mxu0 0.0
  %2523 = vmatmul.mubr.f32.gmra.mrb[0].mxu0 %v2441
  %v2524 = vpop.f32.mrb[0].mxu0
  %v2525 = vadd.f32 0.0, %v2524
  %v2526 = vpop.f32.mrb[0].mxu0
  %2527 = vdwg.mxu0
  %2532 = vrot.lane.b32.xlu0 %v2405, 32
  %v2533 = vpop.permute.xlu0 %2532
  %2534 = vrot.lane.b32.xlu0 %v2410, 32
  %v2535 = vpop.permute.xlu0 %2534
  %2536 = vrot.lane.b32.xlu0 %v2415, 32
  %v2537 = vpop.permute.xlu0 %2536
  %2538 = vrot.lane.b32.xlu0 %v2420, 32
  %v2539 = vpop.permute.xlu0 %2538
  %2548 = vrot.lane.b32.xlu0 %v2510, 64
  %v2549 = vpop.permute.xlu0 %2548
  %2550 = vrot.lane.b32.xlu0 %v2515, 64
  %v2551 = vpop.permute.xlu0 %2550
  %2552 = vrot.lane.b32.xlu0 %v2520, 64
  %v2553 = vpop.permute.xlu0 %2552
  %2554 = vrot.lane.b32.xlu0 %v2525, 64
  %v2555 = vpop.permute.xlu0 %2554
  %v2560 = vsel %vm953, %v2385, %v2533
  %v2561 = vsel %vm953, %v2390, %v2535
  %v2562 = vsel %vm953, %v2395, %v2537
  %v2563 = vsel %vm953, %v2400, %v2539
  %v2564 = vsel %vm55, %v2560, %v2549
  %v2565 = vsel %vm55, %v2561, %v2551
  %v2566 = vsel %vm55, %v2562, %v2553
  %v2567 = vsel %vm55, %v2563, %v2555
  %2568 = vmatprep.subr.mxu0 0.0
  %2569 = vmatpush1.msra.mxu0 %v2564
  %2570 = vmatprep.subr.mxu0 0.0
  %2571 = vmatpush1.msra.mxu0 %v2565
  %2572 = vmatprep.subr.mxu0 0.0
  %2573 = vmatpush1.msra.mxu0 %v2566
  %2574 = vmatprep.subr.mxu0 0.0
  %2575 = vmatpush1.msra.mxu0 %v2567
  %2576 = vmatprep.subr.mxu0 0.0
  %2577 = vmatpush1.msra.mxu0 0.0
  %2578 = vmatprep.subr.mxu0 0.0
  %2579 = vmatpush1.msra.mxu0 0.0
  %2580 = vmatprep.subr.mxu0 0.0
  %2581 = vmatpush1.msra.mxu0 0.0
  %2582 = vmatprep.subr.mxu0 0.0
  %2583 = vmatpush1.msra.mxu0 0.0
  %2584 = vmatprep.subr.mxu0 0.0
  %2585 = vmatpush1.msra.mxu0 0.0
  %2586 = vmatprep.subr.mxu0 0.0
  %2587 = vmatpush1.msra.mxu0 0.0
  %2588 = vmatprep.subr.mxu0 0.0
  %2589 = vmatpush1.msra.mxu0 0.0
  %2590 = vmatprep.subr.mxu0 0.0
  %2591 = vmatpush1.msra.mxu0 0.0
  %2592 = vmatprep.subr.mxu0 0.0
  %2593 = vmatpush1.msra.mxu0 0.0
  %2594 = vmatprep.subr.mxu0 0.0
  %2595 = vmatpush1.msra.mxu0 0.0
  %2596 = vmatprep.subr.mxu0 0.0
  %2597 = vmatpush1.msra.mxu0 0.0
  %2598 = vmatprep.subr.mxu0 0.0
  %2599 = vmatpush1.msra.mxu0 0.0
  %2600 = vmatprep.subr.mxu0 0.0
  %2601 = vmatpush1.msra.mxu0 0.0
  %2602 = vmatprep.subr.mxu0 0.0
  %2603 = vmatpush1.msra.mxu0 0.0
  %2604 = vmatprep.subr.mxu0 0.0
  %2605 = vmatpush1.msra.mxu0 0.0
  %2606 = vmatprep.subr.mxu0 0.0
  %2607 = vmatpush1.msra.mxu0 0.0
  %2608 = vmatprep.subr.mxu0 0.0
  %2609 = vmatpush1.msra.mxu0 0.0
  %2610 = vmatprep.subr.mxu0 0.0
  %2611 = vmatpush1.msra.mxu0 0.0
  %2612 = vmatprep.subr.mxu0 0.0
  %2613 = vmatpush1.msra.mxu0 0.0
  %2614 = vmatprep.subr.mxu0 0.0
  %2615 = vmatpush1.msra.mxu0 0.0
  %2616 = vmatprep.subr.mxu0 0.0
  %2617 = vmatpush1.msra.mxu0 0.0
  %2618 = vmatprep.subr.mxu0 0.0
  %2619 = vmatpush1.msra.mxu0 0.0
  %2620 = vmatprep.subr.mxu0 0.0
  %2621 = vmatpush1.msra.mxu0 0.0
  %2622 = vmatprep.subr.mxu0 0.0
  %2623 = vmatpush1.msra.mxu0 0.0
  %2624 = vmatprep.subr.mxu0 0.0
  %2625 = vmatpush1.msra.mxu0 0.0
  %2626 = vmatprep.subr.mxu0 0.0
  %2627 = vmatpush1.msra.mxu0 0.0
  %2628 = vmatprep.subr.mxu0 0.0
  %2629 = vmatpush1.msra.mxu0 0.0
  %2630 = vmatprep.subr.mxu0 0.0
  %2631 = vmatpush1.msra.mxu0 0.0
  %2632 = vmatprep.mubr.f32.mxu0 0.0
  %2633 = vmatmul.mubr.f32.gmra.mrb[0].mxu0 %v2124
  %v2634 = vpop.f32.mrb[0].mxu0
  %v2635 = vadd.f32 0.0, %v2634
  %v2636 = vpop.f32.mrb[0].mxu0
  %2637 = vmatprep.mubr.f32.mxu0 0.0
  %2638 = vmatmul.mubr.f32.gmra.mrb[0].mxu0 %v2127
  %v2639 = vpop.f32.mrb[0].mxu0
  %v2640 = vadd.f32 0.0, %v2639
  %v2641 = vpop.f32.mrb[0].mxu0
  %2642 = vmatprep.mubr.f32.mxu0 0.0
  %2643 = vmatmul.mubr.f32.gmra.mrb[0].mxu0 %v2130
  %v2644 = vpop.f32.mrb[0].mxu0
  %v2645 = vadd.f32 0.0, %v2644
  %v2646 = vpop.f32.mrb[0].mxu0
  %2647 = vmatprep.mubr.f32.mxu0 0.0
  %2648 = vmatmul.mubr.f32.gmra.mrb[0].mxu0 %v2133
  %v2649 = vpop.f32.mrb[0].mxu0
  %v2650 = vadd.f32 0.0, %v2649
  %v2651 = vpop.f32.mrb[0].mxu0
  %2652 = vmatprep.mubr.f32.mxu0 0.0
  %2653 = vmatmul.mubr.f32.gmra.mrb[0].mxu0 %v2136
  %v2654 = vpop.f32.mrb[0].mxu0
  %v2655 = vadd.f32 0.0, %v2654
  %v2656 = vpop.f32.mrb[0].mxu0
  %2657 = vmatprep.mubr.f32.mxu0 0.0
  %2658 = vmatmul.mubr.f32.gmra.mrb[0].mxu0 %v2139
  %v2659 = vpop.f32.mrb[0].mxu0
  %v2660 = vadd.f32 0.0, %v2659
  %v2661 = vpop.f32.mrb[0].mxu0
  %2662 = vmatprep.mubr.f32.mxu0 0.0
  %2663 = vmatmul.mubr.f32.gmra.mrb[0].mxu0 %v2142
  %v2664 = vpop.f32.mrb[0].mxu0
  %v2665 = vadd.f32 0.0, %v2664
  %v2666 = vpop.f32.mrb[0].mxu0
  %2667 = vmatprep.mubr.f32.mxu0 0.0
  %2668 = vmatmul.mubr.f32.gmra.mrb[0].mxu0 %v2145
  %v2669 = vpop.f32.mrb[0].mxu0
  %v2670 = vadd.f32 0.0, %v2669
  %v2671 = vpop.f32.mrb[0].mxu0
  %2672 = vdwg.mxu0
  %v2673 = vlaneseq
  %v2674 = vshrl.u32 %v2673, 7
  %v2675 = vsub.s32 0, %v2674
  %v2676 = vrot.slane %v2293, %v2675
  %v2677 = vadd.f32 %v2655, %v2676
  %v2678 = vadd.f32 %v2660, %v2676
  %v2679 = vadd.f32 %v2665, %v2676
  %v2680 = vadd.f32 %v2670, %v2676
  %v2681 = vmax.f32 %v2677, 0.0
  %v2682 = vmax.f32 %v2678, 0.0
  %v2683 = vmax.f32 %v2679, 0.0
  %v2684 = vmax.f32 %v2680, 0.0
  %2686 = vrot.lane.b32.xlu0 %v2676, 32
  %v2687 = vpop.permute.xlu0 %2686
  %v2689 = vadd.f32 %v2635, %v2687
  %v2690 = vadd.f32 %v2640, %v2687
  %v2691 = vadd.f32 %v2645, %v2687
  %v2692 = vadd.f32 %v2650, %v2687
  %v2693 = vmax.f32 %v2689, 0.0
  %v2694 = vmax.f32 %v2690, 0.0
  %v2695 = vmax.f32 %v2691, 0.0
  %v2696 = vmax.f32 %v2692, 0.0
  %v2697 = vlaneseq
  %v2698 = vshrl.u32 %v2697, 7
  %v2699 = vsub.s32 0, %v2698
  %v2700 = vrot.slane %v2292, %v2699
  %2702 = vrot.lane.b32.xlu0 %v2700, 64
  %v2703 = vpop.permute.xlu0 %2702
  %v2705 = vadd.f32 %v2635, %v2703
  %v2706 = vadd.f32 %v2640, %v2703
  %v2707 = vadd.f32 %v2645, %v2703
  %v2708 = vadd.f32 %v2650, %v2703
  %v2709 = vmax.f32 %v2705, 0.0
  %v2710 = vmax.f32 %v2706, 0.0
  %v2711 = vmax.f32 %v2707, 0.0
  %v2712 = vmax.f32 %v2708, 0.0
  %v2713 = vld [vmem:[%s3 + $0xf0] sm:$0xff]
  %v2714 = vld [vmem:[%s3 + $0xf8] sm:$0xff]
  %v2715 = vld [vmem:[%s3 + $0x100] sm:$0xff]
  %v2716 = vld [vmem:[%s3 + $0x108] sm:$0xff]
  %v2717 = vld [vmem:[%s3 + $0x110] sm:$0xff]
  %v2718 = vld [vmem:[%s3 + $0x118] sm:$0xff]
  %v2719 = vld [vmem:[%s3 + $0x120] sm:$0xff]
  %v2720 = vld [vmem:[%s3 + $0x128] sm:$0xff]
  %v2721 = vld [vmem:[%s4 + $0x8] sm:$0x1]
  %v2722 = vld [vmem:[%s4 + $0x7] sm:$0x1]
  %2727 = vrot.lane.b32.xlu0 %v2693, 96
  %v2728 = vpop.permute.xlu0 %2727
  %2729 = vrot.lane.b32.xlu0 %v2694, 96
  %v2730 = vpop.permute.xlu0 %2729
  %2731 = vrot.lane.b32.xlu0 %v2695, 96
  %v2732 = vpop.permute.xlu0 %2731
  %2733 = vrot.lane.b32.xlu0 %v2696, 96
  %v2734 = vpop.permute.xlu0 %2733
  %v2736 = vsel %vm953, %v2681, 0
  %v2739 = vsel %vm953, %v2682, 0
  %v2742 = vsel %vm953, %v2683, 0
  %v2745 = vsel %vm953, %v2684, 0
  %v2747 = vsel %vm953, %v2728, 0
  %v2749 = vsel %vm953, %v2730, 0
  %v2751 = vsel %vm953, %v2732, 0
  %v2753 = vsel %vm953, %v2734, 0
  %2755 = vmatprep.subr.mxu0 0.0
  %2756 = vmatpush1.msra.mxu0 %v2717
  %2757 = vmatprep.subr.mxu0 0.0
  %2758 = vmatpush1.msra.mxu0 %v2718
  %2759 = vmatprep.subr.mxu0 0.0
  %2760 = vmatpush1.msra.mxu0 %v2719
  %2761 = vmatprep.subr.mxu0 0.0
  %2762 = vmatpush1.msra.mxu0 %v2720
  %2763 = vmatprep.subr.mxu0 0.0
  %2764 = vmatpush1.msra.mxu0 0.0
  %2765 = vmatprep.subr.mxu0 0.0
  %2766 = vmatpush1.msra.mxu0 0.0
  %2767 = vmatprep.subr.mxu0 0.0
  %2768 = vmatpush1.msra.mxu0 0.0
  %2769 = vmatprep.subr.mxu0 0.0
  %2770 = vmatpush1.msra.mxu0 0.0
  %2771 = vmatprep.subr.mxu0 0.0
  %2772 = vmatpush1.msra.mxu0 0.0
  %2773 = vmatprep.subr.mxu0 0.0
  %2774 = vmatpush1.msra.mxu0 0.0
  %2775 = vmatprep.subr.mxu0 0.0
  %2776 = vmatpush1.msra.mxu0 0.0
  %2777 = vmatprep.subr.mxu0 0.0
  %2778 = vmatpush1.msra.mxu0 0.0
  %2779 = vmatprep.subr.mxu0 0.0
  %2780 = vmatpush1.msra.mxu0 0.0
  %2781 = vmatprep.subr.mxu0 0.0
  %2782 = vmatpush1.msra.mxu0 0.0
  %2783 = vmatprep.subr.mxu0 0.0
  %2784 = vmatpush1.msra.mxu0 0.0
  %2785 = vmatprep.subr.mxu0 0.0
  %2786 = vmatpush1.msra.mxu0 0.0
  %2787 = vmatprep.subr.mxu0 0.0
  %2788 = vmatpush1.msra.mxu0 0.0
  %2789 = vmatprep.subr.mxu0 0.0
  %2790 = vmatpush1.msra.mxu0 0.0
  %2791 = vmatprep.subr.mxu0 0.0
  %2792 = vmatpush1.msra.mxu0 0.0
  %2793 = vmatprep.subr.mxu0 0.0
  %2794 = vmatpush1.msra.mxu0 0.0
  %2795 = vmatprep.subr.mxu0 0.0
  %2796 = vmatpush1.msra.mxu0 0.0
  %2797 = vmatprep.subr.mxu0 0.0
  %2798 = vmatpush1.msra.mxu0 0.0
  %2799 = vmatprep.subr.mxu0 0.0
  %2800 = vmatpush1.msra.mxu0 0.0
  %2801 = vmatprep.subr.mxu0 0.0
  %2802 = vmatpush1.msra.mxu0 0.0
  %2803 = vmatprep.subr.mxu0 0.0
  %2804 = vmatpush1.msra.mxu0 0.0
  %2805 = vmatprep.subr.mxu0 0.0
  %2806 = vmatpush1.msra.mxu0 0.0
  %2807 = vmatprep.subr.mxu0 0.0
  %2808 = vmatpush1.msra.mxu0 0.0
  %2809 = vmatprep.subr.mxu0 0.0
  %2810 = vmatpush1.msra.mxu0 0.0
  %2811 = vmatprep.subr.mxu0 0.0
  %2812 = vmatpush1.msra.mxu0 0.0
  %2813 = vmatprep.subr.mxu0 0.0
  %2814 = vmatpush1.msra.mxu0 0.0
  %2815 = vmatprep.subr.mxu0 0.0
  %2816 = vmatpush1.msra.mxu0 0.0
  %2817 = vmatprep.subr.mxu0 0.0
  %2818 = vmatpush1.msra.mxu0 0.0
  %2819 = vmatprep.mubr.f32.mxu0 0.0
  %2820 = vmatmul.mubr.f32.gmra.mrb[0].mxu0 %v2736
  %v2821 = vpop.f32.mrb[0].mxu0
  %v2822 = vadd.f32 0.0, %v2821
  %v2823 = vpop.f32.mrb[0].mxu0
  %2824 = vmatprep.mubr.f32.mxu0 0.0
  %2825 = vmatmul.mubr.f32.gmra.mrb[0].mxu0 %v2739
  %v2826 = vpop.f32.mrb[0].mxu0
  %v2827 = vadd.f32 0.0, %v2826
  %v2828 = vpop.f32.mrb[0].mxu0
  %2829 = vmatprep.mubr.f32.mxu0 0.0
  %2830 = vmatmul.mubr.f32.gmra.mrb[0].mxu0 %v2742
  %v2831 = vpop.f32.mrb[0].mxu0
  %v2832 = vadd.f32 0.0, %v2831
  %v2833 = vpop.f32.mrb[0].mxu0
  %2834 = vmatprep.mubr.f32.mxu0 0.0
  %2835 = vmatmul.mubr.f32.gmra.mrb[0].mxu0 %v2745
  %v2836 = vpop.f32.mrb[0].mxu0
  %v2837 = vadd.f32 0.0, %v2836
  %v2838 = vpop.f32.mrb[0].mxu0
  %2839 = vmatprep.mubr.f32.mxu0 0.0
  %2840 = vmatmul.mubr.f32.gmra.mrb[0].mxu0 %v2747
  %v2841 = vpop.f32.mrb[0].mxu0
  %v2842 = vadd.f32 0.0, %v2841
  %v2843 = vpop.f32.mrb[0].mxu0
  %2844 = vmatprep.mubr.f32.mxu0 0.0
  %2845 = vmatmul.mubr.f32.gmra.mrb[0].mxu0 %v2749
  %v2846 = vpop.f32.mrb[0].mxu0
  %v2847 = vadd.f32 0.0, %v2846
  %v2848 = vpop.f32.mrb[0].mxu0
  %2849 = vmatprep.mubr.f32.mxu0 0.0
  %2850 = vmatmul.mubr.f32.gmra.mrb[0].mxu0 %v2751
  %v2851 = vpop.f32.mrb[0].mxu0
  %v2852 = vadd.f32 0.0, %v2851
  %v2853 = vpop.f32.mrb[0].mxu0
  %2854 = vmatprep.mubr.f32.mxu0 0.0
  %2855 = vmatmul.mubr.f32.gmra.mrb[0].mxu0 %v2753
  %v2856 = vpop.f32.mrb[0].mxu0
  %v2857 = vadd.f32 0.0, %v2856
  %v2858 = vpop.f32.mrb[0].mxu0
  %2859 = vdwg.mxu0
  %2864 = vrot.lane.b32.xlu0 %v2709, 64
  %v2865 = vpop.permute.xlu0 %2864
  %2866 = vrot.lane.b32.xlu0 %v2710, 64
  %v2867 = vpop.permute.xlu0 %2866
  %2868 = vrot.lane.b32.xlu0 %v2711, 64
  %v2869 = vpop.permute.xlu0 %2868
  %2870 = vrot.lane.b32.xlu0 %v2712, 64
  %v2871 = vpop.permute.xlu0 %2870
  %v2872 = vsel %vm953, %v2865, 0
  %v2874 = vsel %vm953, %v2867, 0
  %v2876 = vsel %vm953, %v2869, 0
  %v2878 = vsel %vm953, %v2871, 0
  %2880 = vmatprep.subr.mxu0 0.0
  %2881 = vmatpush1.msra.mxu0 %v2713
  %2882 = vmatprep.subr.mxu0 0.0
  %2883 = vmatpush1.msra.mxu0 %v2714
  %2884 = vmatprep.subr.mxu0 0.0
  %2885 = vmatpush1.msra.mxu0 %v2715
  %2886 = vmatprep.subr.mxu0 0.0
  %2887 = vmatpush1.msra.mxu0 %v2716
  %2888 = vmatprep.subr.mxu0 0.0
  %2889 = vmatpush1.msra.mxu0 0.0
  %2890 = vmatprep.subr.mxu0 0.0
  %2891 = vmatpush1.msra.mxu0 0.0
  %2892 = vmatprep.subr.mxu0 0.0
  %2893 = vmatpush1.msra.mxu0 0.0
  %2894 = vmatprep.subr.mxu0 0.0
  %2895 = vmatpush1.msra.mxu0 0.0
  %2896 = vmatprep.subr.mxu0 0.0
  %2897 = vmatpush1.msra.mxu0 0.0
  %2898 = vmatprep.subr.mxu0 0.0
  %2899 = vmatpush1.msra.mxu0 0.0
  %2900 = vmatprep.subr.mxu0 0.0
  %2901 = vmatpush1.msra.mxu0 0.0
  %2902 = vmatprep.subr.mxu0 0.0
  %2903 = vmatpush1.msra.mxu0 0.0
  %2904 = vmatprep.subr.mxu0 0.0
  %2905 = vmatpush1.msra.mxu0 0.0
  %2906 = vmatprep.subr.mxu0 0.0
  %2907 = vmatpush1.msra.mxu0 0.0
  %2908 = vmatprep.subr.mxu0 0.0
  %2909 = vmatpush1.msra.mxu0 0.0
  %2910 = vmatprep.subr.mxu0 0.0
  %2911 = vmatpush1.msra.mxu0 0.0
  %2912 = vmatprep.subr.mxu0 0.0
  %2913 = vmatpush1.msra.mxu0 0.0
  %2914 = vmatprep.subr.mxu0 0.0
  %2915 = vmatpush1.msra.mxu0 0.0
  %2916 = vmatprep.subr.mxu0 0.0
  %2917 = vmatpush1.msra.mxu0 0.0
  %2918 = vmatprep.subr.mxu0 0.0
  %2919 = vmatpush1.msra.mxu0 0.0
  %2920 = vmatprep.subr.mxu0 0.0
  %2921 = vmatpush1.msra.mxu0 0.0
  %2922 = vmatprep.subr.mxu0 0.0
  %2923 = vmatpush1.msra.mxu0 0.0
  %2924 = vmatprep.subr.mxu0 0.0
  %2925 = vmatpush1.msra.mxu0 0.0
  %2926 = vmatprep.subr.mxu0 0.0
  %2927 = vmatpush1.msra.mxu0 0.0
  %2928 = vmatprep.subr.mxu0 0.0
  %2929 = vmatpush1.msra.mxu0 0.0
  %2930 = vmatprep.subr.mxu0 0.0
  %2931 = vmatpush1.msra.mxu0 0.0
  %2932 = vmatprep.subr.mxu0 0.0
  %2933 = vmatpush1.msra.mxu0 0.0
  %2934 = vmatprep.subr.mxu0 0.0
  %2935 = vmatpush1.msra.mxu0 0.0
  %2936 = vmatprep.subr.mxu0 0.0
  %2937 = vmatpush1.msra.mxu0 0.0
  %2938 = vmatprep.subr.mxu0 0.0
  %2939 = vmatpush1.msra.mxu0 0.0
  %2940 = vmatprep.subr.mxu0 0.0
  %2941 = vmatpush1.msra.mxu0 0.0
  %2942 = vmatprep.subr.mxu0 0.0
  %2943 = vmatpush1.msra.mxu0 0.0
  %2944 = vmatprep.mubr.f32.mxu0 0.0
  %2945 = vmatmul.mubr.f32.gmra.mrb[0].mxu0 %v2872
  %v2946 = vpop.f32.mrb[0].mxu0
  %v2947 = vadd.f32 0.0, %v2946
  %v2948 = vpop.f32.mrb[0].mxu0
  %2949 = vmatprep.mubr.f32.mxu0 0.0
  %2950 = vmatmul.mubr.f32.gmra.mrb[0].mxu0 %v2874
  %v2951 = vpop.f32.mrb[0].mxu0
  %v2952 = vadd.f32 0.0, %v2951
  %v2953 = vpop.f32.mrb[0].mxu0
  %2954 = vmatprep.mubr.f32.mxu0 0.0
  %2955 = vmatmul.mubr.f32.gmra.mrb[0].mxu0 %v2876
  %v2956 = vpop.f32.mrb[0].mxu0
  %v2957 = vadd.f32 0.0, %v2956
  %v2958 = vpop.f32.mrb[0].mxu0
  %2959 = vmatprep.mubr.f32.mxu0 0.0
  %2960 = vmatmul.mubr.f32.gmra.mrb[0].mxu0 %v2878
  %v2961 = vpop.f32.mrb[0].mxu0
  %v2962 = vadd.f32 0.0, %v2961
  %v2963 = vpop.f32.mrb[0].mxu0
  %2964 = vdwg.mxu0
  %2969 = vrot.lane.b32.xlu0 %v2842, 16
  %v2970 = vpop.permute.xlu0 %2969
  %2971 = vrot.lane.b32.xlu0 %v2847, 16
  %v2972 = vpop.permute.xlu0 %2971
  %2973 = vrot.lane.b32.xlu0 %v2852, 16
  %v2974 = vpop.permute.xlu0 %2973
  %2975 = vrot.lane.b32.xlu0 %v2857, 16
  %v2976 = vpop.permute.xlu0 %2975
  %2985 = vrot.lane.b32.xlu0 %v2947, 32
  %v2986 = vpop.permute.xlu0 %2985
  %2987 = vrot.lane.b32.xlu0 %v2952, 32
  %v2988 = vpop.permute.xlu0 %2987
  %2989 = vrot.lane.b32.xlu0 %v2957, 32
  %v2990 = vpop.permute.xlu0 %2989
  %2991 = vrot.lane.b32.xlu0 %v2962, 32
  %v2992 = vpop.permute.xlu0 %2991
  %v2997 = vsel %vm306, %v2822, %v2970
  %v2998 = vsel %vm306, %v2827, %v2972
  %v2999 = vsel %vm306, %v2832, %v2974
  %v3000 = vsel %vm306, %v2837, %v2976
  %v3001 = vsel %vm953, %v2997, %v2986
  %v3002 = vsel %vm953, %v2998, %v2988
  %v3003 = vsel %vm953, %v2999, %v2990
  %v3004 = vsel %vm953, %v3000, %v2992
  %3005 = vmatprep.subr.mxu0 0.0
  %3006 = vmatpush1.msra.mxu0 %v3001
  %3007 = vmatprep.subr.mxu0 0.0
  %3008 = vmatpush1.msra.mxu0 %v3002
  %3009 = vmatprep.subr.mxu0 0.0
  %3010 = vmatpush1.msra.mxu0 %v3003
  %3011 = vmatprep.subr.mxu0 0.0
  %3012 = vmatpush1.msra.mxu0 %v3004
  %3013 = vmatprep.subr.mxu0 0.0
  %3014 = vmatpush1.msra.mxu0 0.0
  %3015 = vmatprep.subr.mxu0 0.0
  %3016 = vmatpush1.msra.mxu0 0.0
  %3017 = vmatprep.subr.mxu0 0.0
  %3018 = vmatpush1.msra.mxu0 0.0
  %3019 = vmatprep.subr.mxu0 0.0
  %3020 = vmatpush1.msra.mxu0 0.0
  %3021 = vmatprep.subr.mxu0 0.0
  %3022 = vmatpush1.msra.mxu0 0.0
  %3023 = vmatprep.subr.mxu0 0.0
  %3024 = vmatpush1.msra.mxu0 0.0
  %3025 = vmatprep.subr.mxu0 0.0
  %3026 = vmatpush1.msra.mxu0 0.0
  %3027 = vmatprep.subr.mxu0 0.0
  %3028 = vmatpush1.msra.mxu0 0.0
  %3029 = vmatprep.subr.mxu0 0.0
  %3030 = vmatpush1.msra.mxu0 0.0
  %3031 = vmatprep.subr.mxu0 0.0
  %3032 = vmatpush1.msra.mxu0 0.0
  %3033 = vmatprep.subr.mxu0 0.0
  %3034 = vmatpush1.msra.mxu0 0.0
  %3035 = vmatprep.subr.mxu0 0.0
  %3036 = vmatpush1.msra.mxu0 0.0
  %3037 = vmatprep.subr.mxu0 0.0
  %3038 = vmatpush1.msra.mxu0 0.0
  %3039 = vmatprep.subr.mxu0 0.0
  %3040 = vmatpush1.msra.mxu0 0.0
  %3041 = vmatprep.subr.mxu0 0.0
  %3042 = vmatpush1.msra.mxu0 0.0
  %3043 = vmatprep.subr.mxu0 0.0
  %3044 = vmatpush1.msra.mxu0 0.0
  %3045 = vmatprep.subr.mxu0 0.0
  %3046 = vmatpush1.msra.mxu0 0.0
  %3047 = vmatprep.subr.mxu0 0.0
  %3048 = vmatpush1.msra.mxu0 0.0
  %3049 = vmatprep.subr.mxu0 0.0
  %3050 = vmatpush1.msra.mxu0 0.0
  %3051 = vmatprep.subr.mxu0 0.0
  %3052 = vmatpush1.msra.mxu0 0.0
  %3053 = vmatprep.subr.mxu0 0.0
  %3054 = vmatpush1.msra.mxu0 0.0
  %3055 = vmatprep.subr.mxu0 0.0
  %3056 = vmatpush1.msra.mxu0 0.0
  %3057 = vmatprep.subr.mxu0 0.0
  %3058 = vmatpush1.msra.mxu0 0.0
  %3059 = vmatprep.subr.mxu0 0.0
  %3060 = vmatpush1.msra.mxu0 0.0
  %3061 = vmatprep.subr.mxu0 0.0
  %3062 = vmatpush1.msra.mxu0 0.0
  %3063 = vmatprep.subr.mxu0 0.0
  %3064 = vmatpush1.msra.mxu0 0.0
  %3065 = vmatprep.subr.mxu0 0.0
  %3066 = vmatpush1.msra.mxu0 0.0
  %3067 = vmatprep.subr.mxu0 0.0
  %3068 = vmatpush1.msra.mxu0 0.0
  %3069 = vmatprep.mubr.f32.mxu0 0.0
  %3070 = vmatmul.mubr.f32.gmra.mrb[0].mxu0 %v2124
  %v3071 = vpop.f32.mrb[0].mxu0
  %v3072 = vadd.f32 0.0, %v3071
  %v3073 = vpop.f32.mrb[0].mxu0
  %3074 = vmatprep.mubr.f32.mxu0 0.0
  %3075 = vmatmul.mubr.f32.gmra.mrb[0].mxu0 %v2127
  %v3076 = vpop.f32.mrb[0].mxu0
  %v3077 = vadd.f32 0.0, %v3076
  %v3078 = vpop.f32.mrb[0].mxu0
  %3079 = vmatprep.mubr.f32.mxu0 0.0
  %3080 = vmatmul.mubr.f32.gmra.mrb[0].mxu0 %v2130
  %v3081 = vpop.f32.mrb[0].mxu0
  %v3082 = vadd.f32 0.0, %v3081
  %v3083 = vpop.f32.mrb[0].mxu0
  %3084 = vmatprep.mubr.f32.mxu0 0.0
  %3085 = vmatmul.mubr.f32.gmra.mrb[0].mxu0 %v2133
  %v3086 = vpop.f32.mrb[0].mxu0
  %v3087 = vadd.f32 0.0, %v3086
  %v3088 = vpop.f32.mrb[0].mxu0
  %3089 = vmatprep.mubr.f32.mxu0 0.0
  %3090 = vmatmul.mubr.f32.gmra.mrb[0].mxu0 %v2136
  %v3091 = vpop.f32.mrb[0].mxu0
  %v3092 = vadd.f32 0.0, %v3091
  %v3093 = vpop.f32.mrb[0].mxu0
  %3094 = vmatprep.mubr.f32.mxu0 0.0
  %3095 = vmatmul.mubr.f32.gmra.mrb[0].mxu0 %v2139
  %v3096 = vpop.f32.mrb[0].mxu0
  %v3097 = vadd.f32 0.0, %v3096
  %v3098 = vpop.f32.mrb[0].mxu0
  %3099 = vmatprep.mubr.f32.mxu0 0.0
  %3100 = vmatmul.mubr.f32.gmra.mrb[0].mxu0 %v2142
  %v3101 = vpop.f32.mrb[0].mxu0
  %v3102 = vadd.f32 0.0, %v3101
  %v3103 = vpop.f32.mrb[0].mxu0
  %3104 = vmatprep.mubr.f32.mxu0 0.0
  %3105 = vmatmul.mubr.f32.gmra.mrb[0].mxu0 %v2145
  %v3106 = vpop.f32.mrb[0].mxu0
  %v3107 = vadd.f32 0.0, %v3106
  %v3108 = vpop.f32.mrb[0].mxu0
  %3109 = vdwg.mxu0
  %v3110 = vlaneseq
  %v3111 = vshrl.u32 %v3110, 7
  %v3112 = vsub.s32 0, %v3111
  %v3113 = vrot.slane %v2722, %v3112
  %v3114 = vadd.f32 %v3092, %v3113
  %v3115 = vadd.f32 %v3097, %v3113
  %v3116 = vadd.f32 %v3102, %v3113
  %v3117 = vadd.f32 %v3107, %v3113
  %3119 = vrot.lane.b32.xlu0 %v3113, 16
  %v3120 = vpop.permute.xlu0 %3119
  %v3122 = vadd.f32 %v3072, %v3120
  %v3123 = vadd.f32 %v3077, %v3120
  %v3124 = vadd.f32 %v3082, %v3120
  %v3125 = vadd.f32 %v3087, %v3120
  %v3126 = vlaneseq
  %v3127 = vshrl.u32 %v3126, 7
  %v3128 = vsub.s32 0, %v3127
  %v3129 = vrot.slane %v2721, %v3128
  %3131 = vrot.lane.b32.xlu0 %v3129, 32
  %v3132 = vpop.permute.xlu0 %3131
  %v3134 = vadd.f32 %v3072, %v3132
  %v3135 = vadd.f32 %v3077, %v3132
  %v3136 = vadd.f32 %v3082, %v3132
  %v3137 = vadd.f32 %v3087, %v3132
  %3142 = vrot.lane.b32.xlu0 %v3122, 112
  %v3143 = vpop.permute.xlu0 %3142
  %3144 = vrot.lane.b32.xlu0 %v3123, 112
  %v3145 = vpop.permute.xlu0 %3144
  %3146 = vrot.lane.b32.xlu0 %v3124, 112
  %v3147 = vpop.permute.xlu0 %3146
  %3148 = vrot.lane.b32.xlu0 %v3125, 112
  %v3149 = vpop.permute.xlu0 %3148
  %v3154 = vadd.f32 %v3114, %v3143
  %v3155 = vadd.f32 %v3115, %v3145
  %v3156 = vadd.f32 %v3116, %v3147
  %v3157 = vadd.f32 %v3117, %v3149
  %v3158 = vmul.f32 %v3154, 0.5
  %v3159 = vmul.f32 %v3155, 0.5
  %v3160 = vmul.f32 %v3156, 0.5
  %v3161 = vmul.f32 %v3157, 0.5
  %v3162 = vld [vmem:[%s3 + $0x130] sm:$0xff]
  %v3163 = vld [vmem:[%s3 + $0x138] sm:$0xff]
  %v3164 = vld [vmem:[%s4 + $0x9] sm:$0x1]
  %v3165 = vld [vmem:[%s4 + $0xa] sm:$0x1]
  %3170 = vrot.lane.b32.xlu0 %v3134, 96
  %v3171 = vpop.permute.xlu0 %3170
  %3172 = vrot.lane.b32.xlu0 %v3135, 96
  %v3173 = vpop.permute.xlu0 %3172
  %3174 = vrot.lane.b32.xlu0 %v3136, 96
  %v3175 = vpop.permute.xlu0 %3174
  %3176 = vrot.lane.b32.xlu0 %v3137, 96
  %v3177 = vpop.permute.xlu0 %3176
  %v3178 = vlaneseq
  %v3179 = vshrl.u32 %v3178, 7
  %v3180 = vsub.s32 0, %v3179
  %v3181 = vrot.slane %v3164, %v3180
  %v3183 = vsel %vm306, %v2018, 0
  %v3186 = vsel %vm306, %v2019, 0
  %v3189 = vsel %vm306, %v2020, 0
  %v3192 = vsel %vm306, %v2021, 0
  %v3194 = vsel %vm306, %v3171, 0
  %v3196 = vsel %vm306, %v3173, 0
  %v3198 = vsel %vm306, %v3175, 0
  %v3200 = vsel %vm306, %v3177, 0
  %v3203 = vsel %vm306, %v3158, 0
  %v3206 = vsel %vm306, %v3159, 0
  %v3209 = vsel %vm306, %v3160, 0
  %v3212 = vsel %vm306, %v3161, 0
  %3214 = vmatprep.subr.mxu0 0.0
  %3215 = vmatpush1.msra.mxu0 %v3162
  %3216 = vmatprep.subr.mxu0 0.0
  %3217 = vmatpush1.msra.mxu0 %v3163
  %3218 = vmatprep.subr.mxu0 0.0
  %3219 = vmatpush1.msra.mxu0 0.0
  %3220 = vmatprep.subr.mxu0 0.0
  %3221 = vmatpush1.msra.mxu0 0.0
  %3222 = vmatprep.subr.mxu0 0.0
  %3223 = vmatpush1.msra.mxu0 0.0
  %3224 = vmatprep.subr.mxu0 0.0
  %3225 = vmatpush1.msra.mxu0 0.0
  %3226 = vmatprep.subr.mxu0 0.0
  %3227 = vmatpush1.msra.mxu0 0.0
  %3228 = vmatprep.subr.mxu0 0.0
  %3229 = vmatpush1.msra.mxu0 0.0
  %3230 = vmatprep.subr.mxu0 0.0
  %3231 = vmatpush1.msra.mxu0 0.0
  %3232 = vmatprep.subr.mxu0 0.0
  %3233 = vmatpush1.msra.mxu0 0.0
  %3234 = vmatprep.subr.mxu0 0.0
  %3235 = vmatpush1.msra.mxu0 0.0
  %3236 = vmatprep.subr.mxu0 0.0
  %3237 = vmatpush1.msra.mxu0 0.0
  %3238 = vmatprep.subr.mxu0 0.0
  %3239 = vmatpush1.msra.mxu0 0.0
  %3240 = vmatprep.subr.mxu0 0.0
  %3241 = vmatpush1.msra.mxu0 0.0
  %3242 = vmatprep.subr.mxu0 0.0
  %3243 = vmatpush1.msra.mxu0 0.0
  %3244 = vmatprep.subr.mxu0 0.0
  %3245 = vmatpush1.msra.mxu0 0.0
  %3246 = vmatprep.subr.mxu0 0.0
  %3247 = vmatpush1.msra.mxu0 0.0
  %3248 = vmatprep.subr.mxu0 0.0
  %3249 = vmatpush1.msra.mxu0 0.0
  %3250 = vmatprep.subr.mxu0 0.0
  %3251 = vmatpush1.msra.mxu0 0.0
  %3252 = vmatprep.subr.mxu0 0.0
  %3253 = vmatpush1.msra.mxu0 0.0
  %3254 = vmatprep.subr.mxu0 0.0
  %3255 = vmatpush1.msra.mxu0 0.0
  %3256 = vmatprep.subr.mxu0 0.0
  %3257 = vmatpush1.msra.mxu0 0.0
  %3258 = vmatprep.subr.mxu0 0.0
  %3259 = vmatpush1.msra.mxu0 0.0
  %3260 = vmatprep.subr.mxu0 0.0
  %3261 = vmatpush1.msra.mxu0 0.0
  %3262 = vmatprep.subr.mxu0 0.0
  %3263 = vmatpush1.msra.mxu0 0.0
  %3264 = vmatprep.subr.mxu0 0.0
  %3265 = vmatpush1.msra.mxu0 0.0
  %3266 = vmatprep.subr.mxu0 0.0
  %3267 = vmatpush1.msra.mxu0 0.0
  %3268 = vmatprep.subr.mxu0 0.0
  %3269 = vmatpush1.msra.mxu0 0.0
  %3270 = vmatprep.subr.mxu0 0.0
  %3271 = vmatpush1.msra.mxu0 0.0
  %3272 = vmatprep.subr.mxu0 0.0
  %3273 = vmatpush1.msra.mxu0 0.0
  %3274 = vmatprep.subr.mxu0 0.0
  %3275 = vmatpush1.msra.mxu0 0.0
  %3276 = vmatprep.subr.mxu0 0.0
  %3277 = vmatpush1.msra.mxu0 0.0
  %3278 = vmatprep.mubr.f32.mxu0 0.0
  %3279 = vmatmul.mubr.f32.gmra.mrb[0].mxu0 %v3183
  %v3280 = vpop.f32.mrb[0].mxu0
  %v3281 = vadd.f32 %v3181, %v3280
  %v3282 = vpop.f32.mrb[0].mxu0
  %3283 = vmatprep.mubr.f32.mxu0 0.0
  %3284 = vmatmul.mubr.f32.gmra.mrb[0].mxu0 %v3186
  %v3285 = vpop.f32.mrb[0].mxu0
  %v3286 = vadd.f32 %v3181, %v3285
  %v3287 = vpop.f32.mrb[0].mxu0
  %3288 = vmatprep.mubr.f32.mxu0 0.0
  %3289 = vmatmul.mubr.f32.gmra.mrb[0].mxu0 %v3189
  %v3290 = vpop.f32.mrb[0].mxu0
  %v3291 = vadd.f32 %v3181, %v3290
  %v3292 = vpop.f32.mrb[0].mxu0
  %3293 = vmatprep.mubr.f32.mxu0 0.0
  %3294 = vmatmul.mubr.f32.gmra.mrb[0].mxu0 %v3192
  %v3295 = vpop.f32.mrb[0].mxu0
  %v3296 = vadd.f32 %v3181, %v3295
  %v3297 = vpop.f32.mrb[0].mxu0
  %3298 = vmatprep.mubr.f32.mxu0 0.0
  %3299 = vmatmul.mubr.f32.gmra.mrb[0].mxu0 %v3194
  %v3300 = vpop.f32.mrb[0].mxu0
  %v3301 = vadd.f32 %v3181, %v3300
  %v3302 = vpop.f32.mrb[0].mxu0
  %3303 = vmatprep.mubr.f32.mxu0 0.0
  %3304 = vmatmul.mubr.f32.gmra.mrb[0].mxu0 %v3196
  %v3305 = vpop.f32.mrb[0].mxu0
  %v3306 = vadd.f32 %v3181, %v3305
  %v3307 = vpop.f32.mrb[0].mxu0
  %3308 = vmatprep.mubr.f32.mxu0 0.0
  %3309 = vmatmul.mubr.f32.gmra.mrb[0].mxu0 %v3198
  %v3310 = vpop.f32.mrb[0].mxu0
  %v3311 = vadd.f32 %v3181, %v3310
  %v3312 = vpop.f32.mrb[0].mxu0
  %3313 = vmatprep.mubr.f32.mxu0 0.0
  %3314 = vmatmul.mubr.f32.gmra.mrb[0].mxu0 %v3200
  %v3315 = vpop.f32.mrb[0].mxu0
  %v3316 = vadd.f32 %v3181, %v3315
  %v3317 = vpop.f32.mrb[0].mxu0
  %3318 = vmatprep.mubr.f32.mxu0 0.0
  %3319 = vmatmul.mubr.f32.gmra.mrb[0].mxu0 %v3203
  %v3320 = vpop.f32.mrb[0].mxu0
  %v3321 = vadd.f32 %v3181, %v3320
  %v3322 = vpop.f32.mrb[0].mxu0
  %3323 = vmatprep.mubr.f32.mxu0 0.0
  %3324 = vmatmul.mubr.f32.gmra.mrb[0].mxu0 %v3206
  %v3325 = vpop.f32.mrb[0].mxu0
  %v3326 = vadd.f32 %v3181, %v3325
  %v3327 = vpop.f32.mrb[0].mxu0
  %3328 = vmatprep.mubr.f32.mxu0 0.0
  %3329 = vmatmul.mubr.f32.gmra.mrb[0].mxu0 %v3209
  %v3330 = vpop.f32.mrb[0].mxu0
  %v3331 = vadd.f32 %v3181, %v3330
  %v3332 = vpop.f32.mrb[0].mxu0
  %3333 = vmatprep.mubr.f32.mxu0 0.0
  %3334 = vmatmul.mubr.f32.gmra.mrb[0].mxu0 %v3212
  %v3335 = vpop.f32.mrb[0].mxu0
  %v3336 = vadd.f32 %v3181, %v3335
  %v3337 = vpop.f32.mrb[0].mxu0
  %3338 = vdwg.mxu0
  %v3339 = vtanh.pop %v3281
  %v3340 = vtanh.pop %v3286
  %v3341 = vtanh.pop %v3291
  %v3342 = vtanh.pop %v3296
  %v3343 = vtanh.pop %v3301
  %v3344 = vtanh.pop %v3306
  %v3345 = vtanh.pop %v3311
  %v3346 = vtanh.pop %v3316
  %v3347 = vtanh.pop %v3321
  %v3348 = vtanh.pop %v3326
  %v3349 = vtanh.pop %v3331
  %v3350 = vtanh.pop %v3336
  %v3351 = vlaneseq
  %v3352 = vshrl.u32 %v3351, 7
  %v3353 = vsub.s32 0, %v3352
  %v3354 = vrot.slane %v3165, %v3353
  %v3355 = vmul.f32 %v3339, %v3354
  %v3356 = vmul.f32 %v3340, %v3354
  %v3357 = vmul.f32 %v3341, %v3354
  %v3358 = vmul.f32 %v3342, %v3354
  %v3359 = vmul.f32 %v3343, %v3354
  %v3360 = vmul.f32 %v3344, %v3354
  %v3361 = vmul.f32 %v3345, %v3354
  %v3362 = vmul.f32 %v3346, %v3354
  %v3363 = vmul.f32 %v3347, %v3354
  %v3364 = vmul.f32 %v3348, %v3354
  %v3365 = vmul.f32 %v3349, %v3354
  %v3366 = vmul.f32 %v3350, %v3354
  %v3367 = vsel %vm2017, %v3355, 0.0
  %3368 = vadd.xlane.f32.xlu0 %v3367
  %v3369 = vpop.xlane.xlu0 %3368
  %v3370 = vsel %vm2017, %v3356, 0.0
  %3371 = vadd.xlane.f32.xlu0 %v3370
  %v3372 = vpop.xlane.xlu0 %3371
  %v3373 = vsel %vm2017, %v3357, 0.0
  %3374 = vadd.xlane.f32.xlu0 %v3373
  %v3375 = vpop.xlane.xlu0 %3374
  %v3376 = vsel %vm2017, %v3358, 0.0
  %3377 = vadd.xlane.f32.xlu0 %v3376
  %v3378 = vpop.xlane.xlu0 %3377
  %v3379 = vsel %vm2017, %v3359, 0.0
  %3380 = vadd.xlane.f32.xlu0 %v3379
  %v3381 = vpop.xlane.xlu0 %3380
  %v3382 = vsel %vm2017, %v3360, 0.0
  %3383 = vadd.xlane.f32.xlu0 %v3382
  %v3384 = vpop.xlane.xlu0 %3383
  %v3385 = vsel %vm2017, %v3361, 0.0
  %3386 = vadd.xlane.f32.xlu0 %v3385
  %v3387 = vpop.xlane.xlu0 %3386
  %v3388 = vsel %vm2017, %v3362, 0.0
  %3389 = vadd.xlane.f32.xlu0 %v3388
  %v3390 = vpop.xlane.xlu0 %3389
  %v3391 = vsel %vm2017, %v3363, 0.0
  %3392 = vadd.xlane.f32.xlu0 %v3391
  %v3393 = vpop.xlane.xlu0 %3392
  %v3394 = vsel %vm2017, %v3364, 0.0
  %3395 = vadd.xlane.f32.xlu0 %v3394
  %v3396 = vpop.xlane.xlu0 %3395
  %v3397 = vsel %vm2017, %v3365, 0.0
  %3398 = vadd.xlane.f32.xlu0 %v3397
  %v3399 = vpop.xlane.xlu0 %3398
  %v3400 = vsel %vm2017, %v3366, 0.0
  %3401 = vadd.xlane.f32.xlu0 %v3400
  %v3402 = vpop.xlane.xlu0 %3401
  %v3403 = vmax.f32 %v3369, %v3381
  %v3404 = vmax.f32 %v3372, %v3384
  %v3405 = vmax.f32 %v3375, %v3387
  %v3406 = vmax.f32 %v3378, %v3390
  %v3407 = vmax.f32 %v3403, %v3393
  %v3408 = vmax.f32 %v3404, %v3396
  %v3409 = vmax.f32 %v3405, %v3399
  %v3410 = vmax.f32 %v3406, %v3402
  %v3411 = vsub.f32 %v3369, %v3407
  %v3412 = vsub.f32 %v3372, %v3408
  %v3413 = vsub.f32 %v3375, %v3409
  %v3414 = vsub.f32 %v3378, %v3410
  %v3415 = vmul.f32 %v3411, 1.442695
  %v3416 = vpow.pop %v3415
  %v3417 = vmul.f32 %v3412, 1.442695
  %v3418 = vpow.pop %v3417
  %v3419 = vmul.f32 %v3413, 1.442695
  %v3420 = vpow.pop %v3419
  %v3421 = vmul.f32 %v3414, 1.442695
  %v3422 = vpow.pop %v3421
  %v3423 = vsub.f32 %v3381, %v3407
  %v3424 = vsub.f32 %v3384, %v3408
  %v3425 = vsub.f32 %v3387, %v3409
  %v3426 = vsub.f32 %v3390, %v3410
  %v3427 = vmul.f32 %v3423, 1.442695
  %v3428 = vpow.pop %v3427
  %v3429 = vmul.f32 %v3424, 1.442695
  %v3430 = vpow.pop %v3429
  %v3431 = vmul.f32 %v3425, 1.442695
  %v3432 = vpow.pop %v3431
  %v3433 = vmul.f32 %v3426, 1.442695
  %v3434 = vpow.pop %v3433
  %v3435 = vsub.f32 %v3393, %v3407
  %v3436 = vsub.f32 %v3396, %v3408
  %v3437 = vsub.f32 %v3399, %v3409
  %v3438 = vsub.f32 %v3402, %v3410
  %v3439 = vmul.f32 %v3435, 1.442695
  %v3440 = vpow.pop %v3439
  %v3441 = vmul.f32 %v3436, 1.442695
  %v3442 = vpow.pop %v3441
  %v3443 = vmul.f32 %v3437, 1.442695
  %v3444 = vpow.pop %v3443
  %v3445 = vmul.f32 %v3438, 1.442695
  %v3446 = vpow.pop %v3445
  %v3447 = vadd.f32 %v3416, %v3428
  %v3448 = vadd.f32 %v3418, %v3430
  %v3449 = vadd.f32 %v3420, %v3432
  %v3450 = vadd.f32 %v3422, %v3434
  %v3451 = vadd.f32 %v3447, %v3440
  %v3452 = vadd.f32 %v3448, %v3442
  %v3453 = vadd.f32 %v3449, %v3444
  %v3454 = vadd.f32 %v3450, %v3446
  %v3455 = vrcp.pop %v3451
  %v3456 = vrcp.pop %v3452
  %v3457 = vrcp.pop %v3453
  %v3458 = vrcp.pop %v3454
  %v3459 = vmul.f32 %v3416, %v3455
  %v3460 = vmul.f32 %v3418, %v3456
  %v3461 = vmul.f32 %v3420, %v3457
  %v3462 = vmul.f32 %v3422, %v3458
  %v3463 = vmul.f32 %v3428, %v3455
  %v3464 = vmul.f32 %v3430, %v3456
  %v3465 = vmul.f32 %v3432, %v3457
  %v3466 = vmul.f32 %v3434, %v3458
  %v3467 = vmul.f32 %v3440, %v3455
  %v3468 = vmul.f32 %v3442, %v3456
  %v3469 = vmul.f32 %v3444, %v3457
  %v3470 = vmul.f32 %v3446, %v3458
  %v3471 = vmul.f32 %v3459, %v2018
  %v3472 = vmul.f32 %v3460, %v2019
  %v3473 = vmul.f32 %v3461, %v2020
  %v3474 = vmul.f32 %v3462, %v2021
  %v3475 = vmul.f32 %v3463, %v3134
  %v3476 = vmul.f32 %v3464, %v3135
  %v3477 = vmul.f32 %v3465, %v3136
  %v3478 = vmul.f32 %v3466, %v3137
  %3483 = vrot.lane.b32.xlu0 %v3475, 96
  %v3484 = vpop.permute.xlu0 %3483
  %3485 = vrot.lane.b32.xlu0 %v3476, 96
  %v3486 = vpop.permute.xlu0 %3485
  %3487 = vrot.lane.b32.xlu0 %v3477, 96
  %v3488 = vpop.permute.xlu0 %3487
  %3489 = vrot.lane.b32.xlu0 %v3478, 96
  %v3490 = vpop.permute.xlu0 %3489
  %v3495 = vadd.f32 %v3471, %v3484
  %v3496 = vadd.f32 %v3472, %v3486
  %v3497 = vadd.f32 %v3473, %v3488
  %v3498 = vadd.f32 %v3474, %v3490
  %v3499 = vmul.f32 %v3467, %v3158
  %v3500 = vmul.f32 %v3468, %v3159
  %v3501 = vmul.f32 %v3469, %v3160
  %v3502 = vmul.f32 %v3470, %v3161
  %v3503 = vadd.f32 %v3495, %v3499
  %v3504 = vadd.f32 %v3496, %v3500
  %v3505 = vadd.f32 %v3497, %v3501
  %v3506 = vadd.f32 %v3498, %v3502
  %v3507 = vld [vmem:[%s3 + $0x140] sm:$0xff]
  %v3508 = vld [vmem:[%s3 + $0x148] sm:$0xff]
  %v3509 = vld [vmem:[%s4 + $0xb] sm:$0x1]
  %v3510 = vlaneseq
  %v3511 = vshrl.u32 %v3510, 7
  %v3512 = vsub.s32 0, %v3511
  %v3513 = vrot.slane %v3509, %v3512
  %v3515 = vsel %vm306, %v3503, 0
  %v3518 = vsel %vm306, %v3504, 0
  %v3521 = vsel %vm306, %v3505, 0
  %v3524 = vsel %vm306, %v3506, 0
  %3526 = vmatprep.subr.mxu0 0.0
  %3527 = vmatpush1.msra.mxu0 %v3507
  %3528 = vmatprep.subr.mxu0 0.0
  %3529 = vmatpush1.msra.mxu0 %v3508
  %3530 = vmatprep.subr.mxu0 0.0
  %3531 = vmatpush1.msra.mxu0 0.0
  %3532 = vmatprep.subr.mxu0 0.0
  %3533 = vmatpush1.msra.mxu0 0.0
  %3534 = vmatprep.subr.mxu0 0.0
  %3535 = vmatpush1.msra.mxu0 0.0
  %3536 = vmatprep.subr.mxu0 0.0
  %3537 = vmatpush1.msra.mxu0 0.0
  %3538 = vmatprep.subr.mxu0 0.0
  %3539 = vmatpush1.msra.mxu0 0.0
  %3540 = vmatprep.subr.mxu0 0.0
  %3541 = vmatpush1.msra.mxu0 0.0
  %3542 = vmatprep.subr.mxu0 0.0
  %3543 = vmatpush1.msra.mxu0 0.0
  %3544 = vmatprep.subr.mxu0 0.0
  %3545 = vmatpush1.msra.mxu0 0.0
  %3546 = vmatprep.subr.mxu0 0.0
  %3547 = vmatpush1.msra.mxu0 0.0
  %3548 = vmatprep.subr.mxu0 0.0
  %3549 = vmatpush1.msra.mxu0 0.0
  %3550 = vmatprep.subr.mxu0 0.0
  %3551 = vmatpush1.msra.mxu0 0.0
  %3552 = vmatprep.subr.mxu0 0.0
  %3553 = vmatpush1.msra.mxu0 0.0
  %3554 = vmatprep.subr.mxu0 0.0
  %3555 = vmatpush1.msra.mxu0 0.0
  %3556 = vmatprep.subr.mxu0 0.0
  %3557 = vmatpush1.msra.mxu0 0.0
  %3558 = vmatprep.subr.mxu0 0.0
  %3559 = vmatpush1.msra.mxu0 0.0
  %3560 = vmatprep.subr.mxu0 0.0
  %3561 = vmatpush1.msra.mxu0 0.0
  %3562 = vmatprep.subr.mxu0 0.0
  %3563 = vmatpush1.msra.mxu0 0.0
  %3564 = vmatprep.subr.mxu0 0.0
  %3565 = vmatpush1.msra.mxu0 0.0
  %3566 = vmatprep.subr.mxu0 0.0
  %3567 = vmatpush1.msra.mxu0 0.0
  %3568 = vmatprep.subr.mxu0 0.0
  %3569 = vmatpush1.msra.mxu0 0.0
  %3570 = vmatprep.subr.mxu0 0.0
  %3571 = vmatpush1.msra.mxu0 0.0
  %3572 = vmatprep.subr.mxu0 0.0
  %3573 = vmatpush1.msra.mxu0 0.0
  %3574 = vmatprep.subr.mxu0 0.0
  %3575 = vmatpush1.msra.mxu0 0.0
  %3576 = vmatprep.subr.mxu0 0.0
  %3577 = vmatpush1.msra.mxu0 0.0
  %3578 = vmatprep.subr.mxu0 0.0
  %3579 = vmatpush1.msra.mxu0 0.0
  %3580 = vmatprep.subr.mxu0 0.0
  %3581 = vmatpush1.msra.mxu0 0.0
  %3582 = vmatprep.subr.mxu0 0.0
  %3583 = vmatpush1.msra.mxu0 0.0
  %3584 = vmatprep.subr.mxu0 0.0
  %3585 = vmatpush1.msra.mxu0 0.0
  %3586 = vmatprep.subr.mxu0 0.0
  %3587 = vmatpush1.msra.mxu0 0.0
  %3588 = vmatprep.subr.mxu0 0.0
  %3589 = vmatpush1.msra.mxu0 0.0
  %3590 = vmatprep.mubr.f32.mxu0 0.0
  %3591 = vmatmul.mubr.f32.gmra.mrb[0].mxu0 %v3515
  %v3592 = vpop.f32.mrb[0].mxu0
  %v3593 = vadd.f32 %v3513, %v3592
  %v3594 = vpop.f32.mrb[0].mxu0
  %3595 = vmatprep.mubr.f32.mxu0 0.0
  %3596 = vmatmul.mubr.f32.gmra.mrb[0].mxu0 %v3518
  %v3597 = vpop.f32.mrb[0].mxu0
  %v3598 = vadd.f32 %v3513, %v3597
  %v3599 = vpop.f32.mrb[0].mxu0
  %3600 = vmatprep.mubr.f32.mxu0 0.0
  %3601 = vmatmul.mubr.f32.gmra.mrb[0].mxu0 %v3521
  %v3602 = vpop.f32.mrb[0].mxu0
  %v3603 = vadd.f32 %v3513, %v3602
  %v3604 = vpop.f32.mrb[0].mxu0
  %3605 = vmatprep.mubr.f32.mxu0 0.0
  %3606 = vmatmul.mubr.f32.gmra.mrb[0].mxu0 %v3524
  %v3607 = vpop.f32.mrb[0].mxu0
  %v3608 = vadd.f32 %v3513, %v3607
  %v3609 = vpop.f32.mrb[0].mxu0
  %3610 = vdwg.mxu0
  %vm3611 = vcmask 31744
  %v3612 = vsel %vm3611, %v3593, -inf
  %3613 = vmax.xlane.f32.xlu0 %v3612
  %v3614 = vpop.xlane.xlu0 %3613
  %v3615 = vsel %vm3611, %v3598, -inf
  %3616 = vmax.xlane.f32.xlu0 %v3615
  %v3617 = vpop.xlane.xlu0 %3616
  %v3618 = vsel %vm3611, %v3603, -inf
  %3619 = vmax.xlane.f32.xlu0 %v3618
  %v3620 = vpop.xlane.xlu0 %3619
  %v3621 = vsel %vm3611, %v3608, -inf
  %3622 = vmax.xlane.f32.xlu0 %v3621
  %v3623 = vpop.xlane.xlu0 %3622
  %v3624 = vsub.f32 %v3593, %v3614
  %v3625 = vsub.f32 %v3598, %v3617
  %v3626 = vsub.f32 %v3603, %v3620
  %v3627 = vsub.f32 %v3608, %v3623
  %v3628 = vmul.f32 %v3624, 1.442695
  %v3629 = vpow.pop %v3628
  %v3630 = vmul.f32 %v3625, 1.442695
  %v3631 = vpow.pop %v3630
  %v3632 = vmul.f32 %v3626, 1.442695
  %v3633 = vpow.pop %v3632
  %v3634 = vmul.f32 %v3627, 1.442695
  %v3635 = vpow.pop %v3634
  %v3636 = vsel %vm3611, %v3629, 0.0
  %3637 = vadd.xlane.f32.xlu0 %v3636
  %v3638 = vpop.xlane.xlu0 %3637
  %v3639 = vsel %vm3611, %v3631, 0.0
  %3640 = vadd.xlane.f32.xlu0 %v3639
  %v3641 = vpop.xlane.xlu0 %3640
  %v3642 = vsel %vm3611, %v3633, 0.0
  %3643 = vadd.xlane.f32.xlu0 %v3642
  %v3644 = vpop.xlane.xlu0 %3643
  %v3645 = vsel %vm3611, %v3635, 0.0
  %3646 = vadd.xlane.f32.xlu0 %v3645
  %v3647 = vpop.xlane.xlu0 %3646
  %v3648 = vlog2.pop %v3638
  %v3649 = vmul.f32 %v3648, 0.6931472
  %v3650 = vlog2.pop %v3641
  %v3651 = vmul.f32 %v3650, 0.6931472
  %v3652 = vlog2.pop %v3644
  %v3653 = vmul.f32 %v3652, 0.6931472
  %v3654 = vlog2.pop %v3647
  %v3655 = vmul.f32 %v3654, 0.6931472
  %v3656 = vsub.f32 %v3624, %v3649
  %v3657 = vsub.f32 %v3625, %v3651
  %v3658 = vsub.f32 %v3626, %v3653
  %v3659 = vsub.f32 %v3627, %v3655
  %vm3660 = vcmask 7168
  %v3661 = vsel %vm3660, %v3459, %v3463
  %v3662 = vsel %vm3660, %v3460, %v3464
  %v3663 = vsel %vm3660, %v3461, %v3465
  %v3664 = vsel %vm3660, %v3462, %v3466
  %vm3665 = vcmask 15360
  %v3666 = vsel %vm3665, %v3661, %v3467
  %v3667 = vsel %vm3665, %v3662, %v3468
  %v3668 = vsel %vm3665, %v3663, %v3469
  %v3669 = vsel %vm3665, %v3664, %v3470
  %3670 = vrot.lane.b32.xlu0 %v3134, 112
  %v3671 = vpop.permute.xlu0 %3670
  %3672 = vrot.lane.b32.xlu0 %v3135, 112
  %v3673 = vpop.permute.xlu0 %3672
  %3674 = vrot.lane.b32.xlu0 %v3136, 112
  %v3675 = vpop.permute.xlu0 %3674
  %3676 = vrot.lane.b32.xlu0 %v3137, 112
  %v3677 = vpop.permute.xlu0 %3676
  %3686 = vrot.lane.b32.xlu0 %v3114, 32
  %v3687 = vpop.permute.xlu0 %3686
  %3688 = vrot.lane.b32.xlu0 %v3115, 32
  %v3689 = vpop.permute.xlu0 %3688
  %3690 = vrot.lane.b32.xlu0 %v3116, 32
  %v3691 = vpop.permute.xlu0 %3690
  %3692 = vrot.lane.b32.xlu0 %v3117, 32
  %v3693 = vpop.permute.xlu0 %3692
  %3698 = vrot.lane.b32.xlu0 %v3122, 32
  %v3699 = vpop.permute.xlu0 %3698
  %3700 = vrot.lane.b32.xlu0 %v3123, 32
  %v3701 = vpop.permute.xlu0 %3700
  %3702 = vrot.lane.b32.xlu0 %v3124, 32
  %v3703 = vpop.permute.xlu0 %3702
  %3704 = vrot.lane.b32.xlu0 %v3125, 32
  %v3705 = vpop.permute.xlu0 %3704
  %3710 = vrot.lane.b32.xlu0 %v3503, 64
  %v3711 = vpop.permute.xlu0 %3710
  %3712 = vrot.lane.b32.xlu0 %v3504, 64
  %v3713 = vpop.permute.xlu0 %3712
  %3714 = vrot.lane.b32.xlu0 %v3505, 64
  %v3715 = vpop.permute.xlu0 %3714
  %3716 = vrot.lane.b32.xlu0 %v3506, 64
  %v3717 = vpop.permute.xlu0 %3716
  %3726 = vrot.lane.b32.xlu0 %v3656, 80
  %v3727 = vpop.permute.xlu0 %3726
  %3728 = vrot.lane.b32.xlu0 %v3657, 80
  %v3729 = vpop.permute.xlu0 %3728
  %3730 = vrot.lane.b32.xlu0 %v3658, 80
  %v3731 = vpop.permute.xlu0 %3730
  %3732 = vrot.lane.b32.xlu0 %v3659, 80
  %v3733 = vpop.permute.xlu0 %3732
  %3742 = vrot.lane.b32.xlu0 %v3666, 84
  %v3743 = vpop.permute.xlu0 %3742
  %3744 = vrot.lane.b32.xlu0 %v3667, 84
  %v3745 = vpop.permute.xlu0 %3744
  %3746 = vrot.lane.b32.xlu0 %v3668, 84
  %v3747 = vpop.permute.xlu0 %3746
  %3748 = vrot.lane.b32.xlu0 %v3669, 84
  %v3749 = vpop.permute.xlu0 %3748
  %v3754 = vsel %vm306, %v2018, %v3671
  %v3755 = vsel %vm306, %v2019, %v3673
  %v3756 = vsel %vm306, %v2020, %v3675
  %v3757 = vsel %vm306, %v2021, %v3677
  %v3758 = vsel %vm953, %v3754, %v3687
  %v3759 = vsel %vm953, %v3755, %v3689
  %v3760 = vsel %vm953, %v3756, %v3691
  %v3761 = vsel %vm953, %v3757, %v3693
  %vm3762 = vcmask 392192
  %v3763 = vsel %vm3762, %v3758, %v3699
  %v3764 = vsel %vm3762, %v3759, %v3701
  %v3765 = vsel %vm3762, %v3760, %v3703
  %v3766 = vsel %vm3762, %v3761, %v3705
  %v3767 = vsel %vm55, %v3763, %v3711
  %v3768 = vsel %vm55, %v3764, %v3713
  %v3769 = vsel %vm55, %v3765, %v3715
  %v3770 = vsel %vm55, %v3766, %v3717
  %vm3771 = vcmask 654336
  %v3772 = vsel %vm3771, %v3767, %v3727
  %v3773 = vsel %vm3771, %v3768, %v3729
  %v3774 = vsel %vm3771, %v3769, %v3731
  %v3775 = vsel %vm3771, %v3770, %v3733
  %vm3776 = vcmask 687104
  %v3777 = vsel %vm3776, %v3772, %v3743
  %v3778 = vsel %vm3776, %v3773, %v3745
  %v3779 = vsel %vm3776, %v3774, %v3747
  %v3780 = vsel %vm3776, %v3775, %v3749
  %vm3781 = vcmask 711680
  %v3782 = vsel %vm3781, %v3777, 0.0
  %v3783 = vsel %vm3781, %v3778, 0.0
  %v3784 = vsel %vm3781, %v3779, 0.0
  %v3785 = vsel %vm3781, %v3780, 0.0
  %3786 = vst [vmem:[%s5] sm:$0xff] %v3782
  %3787 = vst [vmem:[%s5 + $0x8] sm:$0xff] %v3783
  %3788 = vst [vmem:[%s5 + $0x10] sm:$0xff] %v3784
  %3789 = vst [vmem:[%s5 + $0x18] sm:$0xff] %v3785
  // Predicated region
  $region22: #{magnet_model_forward.1} parent=0 // pred_check
    _
  $region23: #{magnet_model_forward.1} parent=0 // pred_check_branch
    %3791 = sbr.rel (0) target = $region25
  $region24: #{magnet_model_forward.1} parent=0 // pred_region
    _
  $region25: #{magnet_model_forward.1} parent=0 // pred_fallthru
    _
  // Predicated region
  $region26: #{magnet_model_forward.1} parent=0 // pred_check
    _
  $region27: #{magnet_model_forward.1} parent=0 // pred_check_branch
    %3793 = sbr.rel (0) target = $region29
  $region28: #{magnet_model_forward.1} parent=0 // pred_region
    _
  $region29: #{magnet_model_forward.1} parent=0 // pred_fallthru
    _

</llo_original>
